<compile_context>
chip_gen: v6e
topology: v6e:2x2x1
jax: 0.10.0
libtpu: 0.0.40
codegen_flags: <defaults>
</compile_context>

<pallas_src>
import functools

import jax
import jax.numpy as jnp
from jax import lax
from jax.experimental import pallas as pl
from jax.experimental.pallas import tpu as pltpu


# ----------------------------------------------------------------------------
# Fused Pallas kernel: conv1 -> LReLU -> conv2 -> LReLU -> Linear -> Sigmoid
# (one batch sample per grid program; all intermediates VMEM-resident)
# ----------------------------------------------------------------------------
def _disc_fused_kernel(p1_ref, w1_ref, b1_ref, w2_ref, b2_ref, wl_ref, bl_ref,
                       out_ref, y1pp_ref, *, nc, ndf):
    f32 = jnp.float32
    bf16 = jnp.bfloat16

    # conv1-output scratch: padded (pad=2 -> 18x18) AND parity-split:
    #   y1pp[rh, rw, i, j, c] = y1_padded[2*i + rh, 2*j + rw, c]
    # Zero it first so the padding ring reads as 0 for conv2.
    y1pp_ref[...] = jnp.zeros_like(y1pp_ref)

    w1 = w1_ref[...]          # (25*nc, ndf)     bf16
    b1 = b1_ref[...]          # (1, ndf)         f32

    # ---- conv1 (5x5, s2, p2) + LeakyReLU(0.3): one matmul per output-parity class ----
    for rh in range(2):
        for rw in range(2):
            p = p1_ref[0, rh, rw]                                   # (49, 25*nc) f32
            y = jnp.dot(p.astype(bf16), w1, preferred_element_type=f32)
            y = y + b1
            y = jnp.where(y >= 0.0, y, 0.3 * y)                     # (49, ndf)
            # scatter the 7 output rows of this parity class into the padded scratch
            # (output (2u+rh, 2v+rw) -> padded (2(u+1)+rh, 2(v+1)+rw))
            for u in range(7):
                y1pp_ref[rh, rw, u + 1, pl.ds(1, 7), :] = y[u * 7:(u + 1) * 7, :]

    w2 = w2_ref[...]          # (25*ndf, 2*ndf)  bf16
    b2 = b2_ref[...]          # (1, 2*ndf)       f32
    wl = wl_ref[...]          # (49, 2*ndf)      f32  (NHWC-ordered linear weight)

    # ---- conv2 (5x5, s2, p2) + LeakyReLU(0.3) + Linear reduction, one output row ----
    acc = jnp.zeros((1, 1), f32)
    for oh in range(7):
        cols = []
        for kh in range(5):
            for kw in range(5):
                # in-kernel im2col: tap (kh,kw) of output row `oh` is an UNSTRIDED
                # static slice of the parity-split padded conv1 output.
                cols.append(
                    y1pp_ref[kh % 2, kw % 2, oh + kh // 2, pl.ds(kw // 2, 7), :])
        patch = jnp.concatenate(cols, axis=-1)                      # (7, 25*ndf) f32
        y2 = jnp.dot(patch.astype(bf16), w2, preferred_element_type=f32) + b2
        y2 = jnp.where(y2 >= 0.0, y2, 0.3 * y2)                     # (7, 2*ndf)
        # fused flatten + Linear: elementwise multiply with the matching weight slab
        # and reduce — no sublane->lane reshape needed.
        acc = acc + jnp.sum(y2 * wl[oh * 7:(oh + 1) * 7, :], keepdims=True)

    logit = acc + bl_ref[...]                                       # (1, 1)
    prob = pl.reciprocal(1.0 + jnp.exp(-logit), approx=True)        # sigmoid (EUP)
    out_ref[...] = jnp.broadcast_to(prob, (1, 1, 128))              # lane-dense store


# ----------------------------------------------------------------------------
# Glue: conv1 im2col grouped by output parity (plain JAX; operates on the tiny
# raw input only).  Column order is tap-major / channel-minor, matching
# W.transpose(2,3,1,0).reshape(25*IC, OC).
# ----------------------------------------------------------------------------
def _conv1_patches_by_parity(x_nchw):
    """x: (B, C, 28, 28) -> (B, 2, 2, 49, 25*C); class (rh, rw), rows (u, v)."""
    B, C, H, W = x_nchw.shape
    k, s, p = 5, 2, 2
    OH = (H + 2 * p - k) // s + 1                                   # 14
    x = jnp.transpose(x_nchw, (0, 2, 3, 1))                         # NHWC
    xp = jnp.pad(x, ((0, 0), (p, p), (p, p), (0, 0)))
    taps = []
    for kh in range(k):
        for kw in range(k):
            taps.append(xp[:, kh:kh + s * (OH - 1) + 1:s,
                              kw:kw + s * (OH - 1) + 1:s, :])       # (B,14,14,C)
    pm = jnp.stack(taps, axis=3)                                    # (B,14,14,25,C)
    pm = pm.reshape(B, OH, OH, k * k * C)                           # tap-major cols
    pm = pm.reshape(B, 7, 2, 7, 2, k * k * C)                       # oh=2u+rh, ow=2v+rw
    pm = pm.transpose(0, 2, 4, 1, 3, 5)                             # (B,2,2,7,7,25C)
    return pm.reshape(B, 2, 2, 49, k * k * C)


# ----------------------------------------------------------------------------
# Full forward pass (single fused pallas_call)
# ----------------------------------------------------------------------------
def discriminator_sgan_forward(x, params):
    """x: (B, nc, 28, 28) f32 NCHW -> (B, 1) f32 in (0, 1)."""
    w1, b1, w2, b2, wl, bl = params
    B, nc = int(x.shape[0]), int(x.shape[1])
    ndf = int(w1.shape[0])
    ndf2 = 2 * ndf
    assert x.shape[2] == 28 and x.shape[3] == 28, "Linear(2*ndf*7*7) needs 28x28 input"

    p1 = _conv1_patches_by_parity(x).astype(jnp.float32)            # (B,2,2,49,25*nc)

    # weights in kernel layout; matmul weights stored bf16 (MXU-native), biases f32
    w1m = jnp.transpose(w1, (2, 3, 1, 0)).reshape(25 * nc, ndf).astype(jnp.bfloat16)
    w2m = jnp.transpose(w2, (2, 3, 1, 0)).reshape(25 * ndf, ndf2).astype(jnp.bfloat16)
    wlm = wl.reshape(ndf2, 7, 7).transpose(1, 2, 0).reshape(49, ndf2).astype(jnp.float32)
    b1m = b1.reshape(1, ndf).astype(jnp.float32)
    b2m = b2.reshape(1, ndf2).astype(jnp.float32)
    blm = bl.reshape(1, 1).astype(jnp.float32)

    kernel = functools.partial(_disc_fused_kernel, nc=nc, ndf=ndf)
    flops = B * (2 * 196 * 25 * nc * ndf + 2 * 49 * 25 * ndf * ndf2 + 2 * 49 * ndf2)
    bytes_accessed = int(p1.size * 4 + w1m.size * 2 + w2m.size * 2 + wlm.size * 4
                         + (b1m.size + b2m.size + blm.size) * 4 + B * 128 * 4)

    out = pl.pallas_call(
        kernel,
        out_shape=jax.ShapeDtypeStruct((B, 1, 128), jnp.float32),
        grid_spec=pltpu.PrefetchScalarGridSpec(
            num_scalar_prefetch=0,
            grid=(B,),
            in_specs=[
                pl.BlockSpec((1, 2, 2, 49, 25 * nc), lambda b: (b, 0, 0, 0, 0)),
                pl.BlockSpec((25 * nc, ndf), lambda b: (0, 0)),
                pl.BlockSpec((1, ndf), lambda b: (0, 0)),
                pl.BlockSpec((25 * ndf, ndf2), lambda b: (0, 0)),
                pl.BlockSpec((1, ndf2), lambda b: (0, 0)),
                pl.BlockSpec((49, ndf2), lambda b: (0, 0)),
                pl.BlockSpec((1, 1), lambda b: (0, 0)),
            ],
            out_specs=pl.BlockSpec((1, 1, 128), lambda b: (b, 0, 0)),
            scratch_shapes=[pltpu.VMEM((2, 2, 9, 9, ndf), jnp.float32)],
        ),
        compiler_params=pltpu.CompilerParams(dimension_semantics=("parallel",)),
        cost_estimate=pl.CostEstimate(flops=flops, transcendentals=2 * B,
                                      bytes_accessed=bytes_accessed),
    )(p1, w1m, b1m, w2m, b2m, wlm, blm)

    return out[:, 0, :1]                                            # (B, 1)


# ----------------------------------------------------------------------------
# Pure-JAX reference (for correctness check)
# ----------------------------------------------------------------------------
def reference_forward(x, params):
    w1, b1, w2, b2, wl, bl = params
    dn = ("NCHW", "OIHW", "NCHW")
    leaky = lambda v: jnp.where(v >= 0.0, v, 0.3 * v)
    y = lax.conv_general_dilated(x, w1, (2, 2), [(2, 2), (2, 2)],
                                 dimension_numbers=dn)
    y = leaky(y + b1[None, :, None, None])
    y = lax.conv_general_dilated(y, w2, (2, 2), [(2, 2), (2, 2)],
                                 dimension_numbers=dn)
    y = leaky(y + b2[None, :, None, None])
    y = y.reshape(y.shape[0], -1)
    y = y @ wl.T + bl[None, :]
    return 1.0 / (1.0 + jnp.exp(-y))


# ----------------------------------------------------------------------------
# Spectral normalization (parameter setup, plain JAX — matches PyTorch's
# power-iteration estimate of the largest singular value of W.view(OC, -1))
# ----------------------------------------------------------------------------
def spectral_normalize(w2d, key, n_iter=30, eps=1e-12):
    out_dim, in_dim = w2d.shape
    u = jax.random.normal(key, (out_dim,), dtype=jnp.float32)
    u = u / (jnp.linalg.norm(u) + eps)
    for _ in range(n_iter):
        v = w2d.T @ u
        v = v / (jnp.linalg.norm(v) + eps)
        u = w2d @ v
        u = u / (jnp.linalg.norm(u) + eps)
    sigma = u @ (w2d @ v)
    return w2d / sigma


def make_params(nc, ndf, key):
    ks = jax.random.split(key, 9)
    w1 = jax.random.normal(ks[0], (ndf, nc, 5, 5), jnp.float32) * 0.1
    b1 = jax.random.normal(ks[1], (ndf,), jnp.float32) * 0.01
    w2 = jax.random.normal(ks[2], (2 * ndf, ndf, 5, 5), jnp.float32) * 0.1
    b2 = jax.random.normal(ks[3], (2 * ndf,), jnp.float32) * 0.01
    wl = jax.random.normal(ks[4], (1, 2 * ndf * 7 * 7), jnp.float32) * 0.1
    bl = jax.random.normal(ks[5], (1,), jnp.float32) * 0.01

    w1 = spectral_normalize(w1.reshape(ndf, -1), ks[6]).reshape(w1.shape)
    w2 = spectral_normalize(w2.reshape(2 * ndf, -1), ks[7]).reshape(w2.shape)
    wl = spectral_normalize(wl, ks[8])
    return (w1, b1, w2, b2, wl, bl)


if __name__ == "__main__":
    nc, ndf, batch = 1, 8, 2
    key = jax.random.PRNGKey(0)
    kx, kp = jax.random.split(key)

    x = jax.random.normal(kx, (batch, nc, 28, 28), jnp.float32)
    params = make_params(nc, ndf, kp)

    fwd = jax.jit(discriminator_sgan_forward)
    out = jax.block_until_ready(fwd(x, params))
    ref = jax.block_until_ready(reference_forward(x, params))

    assert out.shape == (batch, 1)
    # bf16 MXU operands (f32 accumulation) -> compare against the pure-f32 reference
    # with a correspondingly loosened tolerance.
    assert jnp.allclose(out, ref, atol=2e-2, rtol=2e-2), (out, ref)

    print("KERNEL_OK")
</pallas_src>

<mosaic_0001>
module attributes {stable_mosaic.version = 11 : i64} {
  func.func @_disc_fused_kernel(%arg0: i32, %arg1: memref<1x2x2x49x25xf32, #tpu.memory_space<vmem>>, %arg2: memref<25x8xbf16, #tpu.memory_space<vmem>>, %arg3: memref<1x8xf32, #tpu.memory_space<vmem>>, %arg4: memref<200x16xbf16, #tpu.memory_space<vmem>>, %arg5: memref<1x16xf32, #tpu.memory_space<vmem>>, %arg6: memref<49x16xf32, #tpu.memory_space<vmem>>, %arg7: memref<1x1xf32, #tpu.memory_space<vmem>>, %arg8: memref<1x1x128xf32, #tpu.memory_space<vmem>>, %arg9: memref<2x2x9x9x8xf32, #tpu.memory_space<vmem>>) attributes {dimension_semantics = [#tpu.dimension_semantics<parallel>], iteration_bounds = array<i64: 2>, scalar_prefetch = 0 : i64, scratch_operands = 1 : i64, tpu.core_type = #tpu.core_type<tc>, window_params = [{transform_indices = @transform_0, window_bounds = array<i64: 1, 2, 2, 49, 25>}, {pipeline_mode = #tpu.pipeline_mode<synchronous>, transform_indices = @transform_1, window_bounds = array<i64: 25, 8>}, {pipeline_mode = #tpu.pipeline_mode<synchronous>, transform_indices = @transform_2, window_bounds = array<i64: 1, 8>}, {pipeline_mode = #tpu.pipeline_mode<synchronous>, transform_indices = @transform_3, window_bounds = array<i64: 200, 16>}, {pipeline_mode = #tpu.pipeline_mode<synchronous>, transform_indices = @transform_4, window_bounds = array<i64: 1, 16>}, {pipeline_mode = #tpu.pipeline_mode<synchronous>, transform_indices = @transform_5, window_bounds = array<i64: 49, 16>}, {pipeline_mode = #tpu.pipeline_mode<synchronous>, transform_indices = @transform_6, window_bounds = array<i64: 1, 1>}, {transform_indices = @transform_7, window_bounds = array<i64: 1, 1, 128>}]} {
    %cst = arith.constant 0.000000e+00 : f32
    %0 = vector.broadcast %cst : f32 to vector<2x2x9x9x8xf32>
    %c0 = arith.constant 0 : index
    %c0_0 = arith.constant 0 : index
    %c0_1 = arith.constant 0 : index
    %c0_2 = arith.constant 0 : index
    %c0_3 = arith.constant 0 : index
    %1 = vector.load %arg9[%c0, %c0_0, %c0_1, %c0_2, %c0_3] : memref<2x2x9x9x8xf32, #tpu.memory_space<vmem>>, vector<2x2x9x9x8xf32>
    tpu.vector_store %arg9[%c0, %c0_0, %c0_1, %c0_2, %c0_3], %0 {strides = array<i32>} : memref<2x2x9x9x8xf32, #tpu.memory_space<vmem>>, vector<2x2x9x9x8xf32>,
    %c0_4 = arith.constant 0 : index
    %c0_5 = arith.constant 0 : index
    %2 = vector.load %arg2[%c0_4, %c0_5] : memref<25x8xbf16, #tpu.memory_space<vmem>>, vector<25x8xbf16>
    %c0_6 = arith.constant 0 : index
    %c0_7 = arith.constant 0 : index
    %3 = vector.load %arg3[%c0_6, %c0_7] : memref<1x8xf32, #tpu.memory_space<vmem>>, vector<1x8xf32>
    %c0_8 = arith.constant 0 : index
    %c0_9 = arith.constant 0 : index
    %c0_10 = arith.constant 0 : index
    %c0_11 = arith.constant 0 : index
    %c0_12 = arith.constant 0 : index
    %4 = vector.load %arg1[%c0_8, %c0_9, %c0_10, %c0_11, %c0_12] : memref<1x2x2x49x25xf32, #tpu.memory_space<vmem>>, vector<1x1x1x49x25xf32>
    %5 = vector.shape_cast %4 : vector<1x1x1x49x25xf32> to vector<49x25xf32>
    %6 = arith.truncf %5 : vector<49x25xf32> to vector<49x25xbf16>
    %cst_13 = arith.constant dense<0.000000e+00> : vector<49x8xf32>
    %7 = tpu.matmul %6, %2, %cst_13 {dimension_numbers = #tpu.dot_dimension_numbers<[1], [0], [0], [1], [0, 0, 1, 1], [], []>} : vector<49x25xbf16>, vector<25x8xbf16>, vector<49x8xf32> -> vector<49x8xf32>
    %8 = vector.broadcast %3 : vector<1x8xf32> to vector<49x8xf32>
    %9 = arith.addf %7, %8 : vector<49x8xf32>
    %cst_14 = arith.constant 0.000000e+00 : f32
    %10 = vector.broadcast %cst_14 : f32 to vector<49x8xf32>
    %11 = arith.cmpf oge, %9, %10 : vector<49x8xf32>
    %cst_15 = arith.constant 3.000000e-01 : f32
    %12 = vector.broadcast %cst_15 : f32 to vector<49x8xf32>
    %13 = arith.mulf %12, %9 : vector<49x8xf32>
    %14 = arith.select %11, %9, %13 : vector<49x8xi1>, vector<49x8xf32>
    %15 = vector.extract_strided_slice %14 {offsets = [0, 0], sizes = [7, 8], strides = [1, 1]} : vector<49x8xf32> to vector<7x8xf32>
    %c0_16 = arith.constant 0 : index
    %c0_17 = arith.constant 0 : index
    %c1 = arith.constant 1 : index
    %c1_18 = arith.constant 1 : index
    %c0_19 = arith.constant 0 : index
    %16 = vector.load %arg9[%c0_16, %c0_17, %c1, %c1_18, %c0_19] : memref<2x2x9x9x8xf32, #tpu.memory_space<vmem>>, vector<1x1x1x7x8xf32>
    %17 = vector.shape_cast %16 : vector<1x1x1x7x8xf32> to vector<7x8xf32>
    %18 = vector.shape_cast %15 : vector<7x8xf32> to vector<1x1x1x7x8xf32>
    tpu.vector_store %arg9[%c0_16, %c0_17, %c1, %c1_18, %c0_19], %18 {strides = array<i32>} : memref<2x2x9x9x8xf32, #tpu.memory_space<vmem>>, vector<1x1x1x7x8xf32>,
    %19 = vector.extract_strided_slice %14 {offsets = [7, 0], sizes = [7, 8], strides = [1, 1]} : vector<49x8xf32> to vector<7x8xf32>
    %c0_20 = arith.constant 0 : index
    %c0_21 = arith.constant 0 : index
    %c2 = arith.constant 2 : index
    %c1_22 = arith.constant 1 : index
    %c0_23 = arith.constant 0 : index
    %20 = vector.load %arg9[%c0_20, %c0_21, %c2, %c1_22, %c0_23] : memref<2x2x9x9x8xf32, #tpu.memory_space<vmem>>, vector<1x1x1x7x8xf32>
    %21 = vector.shape_cast %20 : vector<1x1x1x7x8xf32> to vector<7x8xf32>
    %22 = vector.shape_cast %19 : vector<7x8xf32> to vector<1x1x1x7x8xf32>
    tpu.vector_store %arg9[%c0_20, %c0_21, %c2, %c1_22, %c0_23], %22 {strides = array<i32>} : memref<2x2x9x9x8xf32, #tpu.memory_space<vmem>>, vector<1x1x1x7x8xf32>,
    %23 = vector.extract_strided_slice %14 {offsets = [14, 0], sizes = [7, 8], strides = [1, 1]} : vector<49x8xf32> to vector<7x8xf32>
    %c0_24 = arith.constant 0 : index
    %c0_25 = arith.constant 0 : index
    %c3 = arith.constant 3 : index
    %c1_26 = arith.constant 1 : index
    %c0_27 = arith.constant 0 : index
    %24 = vector.load %arg9[%c0_24, %c0_25, %c3, %c1_26, %c0_27] : memref<2x2x9x9x8xf32, #tpu.memory_space<vmem>>, vector<1x1x1x7x8xf32>
    %25 = vector.shape_cast %24 : vector<1x1x1x7x8xf32> to vector<7x8xf32>
    %26 = vector.shape_cast %23 : vector<7x8xf32> to vector<1x1x1x7x8xf32>
    tpu.vector_store %arg9[%c0_24, %c0_25, %c3, %c1_26, %c0_27], %26 {strides = array<i32>} : memref<2x2x9x9x8xf32, #tpu.memory_space<vmem>>, vector<1x1x1x7x8xf32>,
    %27 = vector.extract_strided_slice %14 {offsets = [21, 0], sizes = [7, 8], strides = [1, 1]} : vector<49x8xf32> to vector<7x8xf32>
    %c0_28 = arith.constant 0 : index
    %c0_29 = arith.constant 0 : index
    %c4 = arith.constant 4 : index
    %c1_30 = arith.constant 1 : index
    %c0_31 = arith.constant 0 : index
    %28 = vector.load %arg9[%c0_28, %c0_29, %c4, %c1_30, %c0_31] : memref<2x2x9x9x8xf32, #tpu.memory_space<vmem>>, vector<1x1x1x7x8xf32>
    %29 = vector.shape_cast %28 : vector<1x1x1x7x8xf32> to vector<7x8xf32>
    %30 = vector.shape_cast %27 : vector<7x8xf32> to vector<1x1x1x7x8xf32>
    tpu.vector_store %arg9[%c0_28, %c0_29, %c4, %c1_30, %c0_31], %30 {strides = array<i32>} : memref<2x2x9x9x8xf32, #tpu.memory_space<vmem>>, vector<1x1x1x7x8xf32>,
    %31 = vector.extract_strided_slice %14 {offsets = [28, 0], sizes = [7, 8], strides = [1, 1]} : vector<49x8xf32> to vector<7x8xf32>
    %c0_32 = arith.constant 0 : index
    %c0_33 = arith.constant 0 : index
    %c5 = arith.constant 5 : index
    %c1_34 = arith.constant 1 : index
    %c0_35 = arith.constant 0 : index
    %32 = vector.load %arg9[%c0_32, %c0_33, %c5, %c1_34, %c0_35] : memref<2x2x9x9x8xf32, #tpu.memory_space<vmem>>, vector<1x1x1x7x8xf32>
    %33 = vector.shape_cast %32 : vector<1x1x1x7x8xf32> to vector<7x8xf32>
    %34 = vector.shape_cast %31 : vector<7x8xf32> to vector<1x1x1x7x8xf32>
    tpu.vector_store %arg9[%c0_32, %c0_33, %c5, %c1_34, %c0_35], %34 {strides = array<i32>} : memref<2x2x9x9x8xf32, #tpu.memory_space<vmem>>, vector<1x1x1x7x8xf32>,
    %35 = vector.extract_strided_slice %14 {offsets = [35, 0], sizes = [7, 8], strides = [1, 1]} : vector<49x8xf32> to vector<7x8xf32>
    %c0_36 = arith.constant 0 : index
    %c0_37 = arith.constant 0 : index
    %c6 = arith.constant 6 : index
    %c1_38 = arith.constant 1 : index
    %c0_39 = arith.constant 0 : index
    %36 = vector.load %arg9[%c0_36, %c0_37, %c6, %c1_38, %c0_39] : memref<2x2x9x9x8xf32, #tpu.memory_space<vmem>>, vector<1x1x1x7x8xf32>
    %37 = vector.shape_cast %36 : vector<1x1x1x7x8xf32> to vector<7x8xf32>
    %38 = vector.shape_cast %35 : vector<7x8xf32> to vector<1x1x1x7x8xf32>
    tpu.vector_store %arg9[%c0_36, %c0_37, %c6, %c1_38, %c0_39], %38 {strides = array<i32>} : memref<2x2x9x9x8xf32, #tpu.memory_space<vmem>>, vector<1x1x1x7x8xf32>,
    %39 = vector.extract_strided_slice %14 {offsets = [42, 0], sizes = [7, 8], strides = [1, 1]} : vector<49x8xf32> to vector<7x8xf32>
    %c0_40 = arith.constant 0 : index
    %c0_41 = arith.constant 0 : index
    %c7 = arith.constant 7 : index
    %c1_42 = arith.constant 1 : index
    %c0_43 = arith.constant 0 : index
    %40 = vector.load %arg9[%c0_40, %c0_41, %c7, %c1_42, %c0_43] : memref<2x2x9x9x8xf32, #tpu.memory_space<vmem>>, vector<1x1x1x7x8xf32>
    %41 = vector.shape_cast %40 : vector<1x1x1x7x8xf32> to vector<7x8xf32>
    %42 = vector.shape_cast %39 : vector<7x8xf32> to vector<1x1x1x7x8xf32>
    tpu.vector_store %arg9[%c0_40, %c0_41, %c7, %c1_42, %c0_43], %42 {strides = array<i32>} : memref<2x2x9x9x8xf32, #tpu.memory_space<vmem>>, vector<1x1x1x7x8xf32>,
    %c0_44 = arith.constant 0 : index
    %c0_45 = arith.constant 0 : index
    %c1_46 = arith.constant 1 : index
    %c0_47 = arith.constant 0 : index
    %c0_48 = arith.constant 0 : index
    %43 = vector.load %arg1[%c0_44, %c0_45, %c1_46, %c0_47, %c0_48] : memref<1x2x2x49x25xf32, #tpu.memory_space<vmem>>, vector<1x1x1x49x25xf32>
    %44 = vector.shape_cast %43 : vector<1x1x1x49x25xf32> to vector<49x25xf32>
    %45 = arith.truncf %44 : vector<49x25xf32> to vector<49x25xbf16>
    %cst_49 = arith.constant dense<0.000000e+00> : vector<49x8xf32>
    %46 = tpu.matmul %45, %2, %cst_49 {dimension_numbers = #tpu.dot_dimension_numbers<[1], [0], [0], [1], [0, 0, 1, 1], [], []>} : vector<49x25xbf16>, vector<25x8xbf16>, vector<49x8xf32> -> vector<49x8xf32>
    %47 = vector.broadcast %3 : vector<1x8xf32> to vector<49x8xf32>
    %48 = arith.addf %46, %47 : vector<49x8xf32>
    %cst_50 = arith.constant 0.000000e+00 : f32
    %49 = vector.broadcast %cst_50 : f32 to vector<49x8xf32>
    %50 = arith.cmpf oge, %48, %49 : vector<49x8xf32>
    %cst_51 = arith.constant 3.000000e-01 : f32
    %51 = vector.broadcast %cst_51 : f32 to vector<49x8xf32>
    %52 = arith.mulf %51, %48 : vector<49x8xf32>
    %53 = arith.select %50, %48, %52 : vector<49x8xi1>, vector<49x8xf32>
    %54 = vector.extract_strided_slice %53 {offsets = [0, 0], sizes = [7, 8], strides = [1, 1]} : vector<49x8xf32> to vector<7x8xf32>
    %c0_52 = arith.constant 0 : index
    %c1_53 = arith.constant 1 : index
    %c1_54 = arith.constant 1 : index
    %c1_55 = arith.constant 1 : index
    %c0_56 = arith.constant 0 : index
    %55 = vector.load %arg9[%c0_52, %c1_53, %c1_54, %c1_55, %c0_56] : memref<2x2x9x9x8xf32, #tpu.memory_space<vmem>>, vector<1x1x1x7x8xf32>
    %56 = vector.shape_cast %55 : vector<1x1x1x7x8xf32> to vector<7x8xf32>
    %57 = vector.shape_cast %54 : vector<7x8xf32> to vector<1x1x1x7x8xf32>
    tpu.vector_store %arg9[%c0_52, %c1_53, %c1_54, %c1_55, %c0_56], %57 {strides = array<i32>} : memref<2x2x9x9x8xf32, #tpu.memory_space<vmem>>, vector<1x1x1x7x8xf32>,
    %58 = vector.extract_strided_slice %53 {offsets = [7, 0], sizes = [7, 8], strides = [1, 1]} : vector<49x8xf32> to vector<7x8xf32>
    %c0_57 = arith.constant 0 : index
    %c1_58 = arith.constant 1 : index
    %c2_59 = arith.constant 2 : index
    %c1_60 = arith.constant 1 : index
    %c0_61 = arith.constant 0 : index
    %59 = vector.load %arg9[%c0_57, %c1_58, %c2_59, %c1_60, %c0_61] : memref<2x2x9x9x8xf32, #tpu.memory_space<vmem>>, vector<1x1x1x7x8xf32>
    %60 = vector.shape_cast %59 : vector<1x1x1x7x8xf32> to vector<7x8xf32>
    %61 = vector.shape_cast %58 : vector<7x8xf32> to vector<1x1x1x7x8xf32>
    tpu.vector_store %arg9[%c0_57, %c1_58, %c2_59, %c1_60, %c0_61], %61 {strides = array<i32>} : memref<2x2x9x9x8xf32, #tpu.memory_space<vmem>>, vector<1x1x1x7x8xf32>,
    %62 = vector.extract_strided_slice %53 {offsets = [14, 0], sizes = [7, 8], strides = [1, 1]} : vector<49x8xf32> to vector<7x8xf32>
    %c0_62 = arith.constant 0 : index
    %c1_63 = arith.constant 1 : index
    %c3_64 = arith.constant 3 : index
    %c1_65 = arith.constant 1 : index
    %c0_66 = arith.constant 0 : index
    %63 = vector.load %arg9[%c0_62, %c1_63, %c3_64, %c1_65, %c0_66] : memref<2x2x9x9x8xf32, #tpu.memory_space<vmem>>, vector<1x1x1x7x8xf32>
    %64 = vector.shape_cast %63 : vector<1x1x1x7x8xf32> to vector<7x8xf32>
    %65 = vector.shape_cast %62 : vector<7x8xf32> to vector<1x1x1x7x8xf32>
    tpu.vector_store %arg9[%c0_62, %c1_63, %c3_64, %c1_65, %c0_66], %65 {strides = array<i32>} : memref<2x2x9x9x8xf32, #tpu.memory_space<vmem>>, vector<1x1x1x7x8xf32>,
    %66 = vector.extract_strided_slice %53 {offsets = [21, 0], sizes = [7, 8], strides = [1, 1]} : vector<49x8xf32> to vector<7x8xf32>
    %c0_67 = arith.constant 0 : index
    %c1_68 = arith.constant 1 : index
    %c4_69 = arith.constant 4 : index
    %c1_70 = arith.constant 1 : index
    %c0_71 = arith.constant 0 : index
    %67 = vector.load %arg9[%c0_67, %c1_68, %c4_69, %c1_70, %c0_71] : memref<2x2x9x9x8xf32, #tpu.memory_space<vmem>>, vector<1x1x1x7x8xf32>
    %68 = vector.shape_cast %67 : vector<1x1x1x7x8xf32> to vector<7x8xf32>
    %69 = vector.shape_cast %66 : vector<7x8xf32> to vector<1x1x1x7x8xf32>
    tpu.vector_store %arg9[%c0_67, %c1_68, %c4_69, %c1_70, %c0_71], %69 {strides = array<i32>} : memref<2x2x9x9x8xf32, #tpu.memory_space<vmem>>, vector<1x1x1x7x8xf32>,
    %70 = vector.extract_strided_slice %53 {offsets = [28, 0], sizes = [7, 8], strides = [1, 1]} : vector<49x8xf32> to vector<7x8xf32>
    %c0_72 = arith.constant 0 : index
    %c1_73 = arith.constant 1 : index
    %c5_74 = arith.constant 5 : index
    %c1_75 = arith.constant 1 : index
    %c0_76 = arith.constant 0 : index
    %71 = vector.load %arg9[%c0_72, %c1_73, %c5_74, %c1_75, %c0_76] : memref<2x2x9x9x8xf32, #tpu.memory_space<vmem>>, vector<1x1x1x7x8xf32>
    %72 = vector.shape_cast %71 : vector<1x1x1x7x8xf32> to vector<7x8xf32>
    %73 = vector.shape_cast %70 : vector<7x8xf32> to vector<1x1x1x7x8xf32>
    tpu.vector_store %arg9[%c0_72, %c1_73, %c5_74, %c1_75, %c0_76], %73 {strides = array<i32>} : memref<2x2x9x9x8xf32, #tpu.memory_space<vmem>>, vector<1x1x1x7x8xf32>,
    %74 = vector.extract_strided_slice %53 {offsets = [35, 0], sizes = [7, 8], strides = [1, 1]} : vector<49x8xf32> to vector<7x8xf32>
    %c0_77 = arith.constant 0 : index
    %c1_78 = arith.constant 1 : index
    %c6_79 = arith.constant 6 : index
    %c1_80 = arith.constant 1 : index
    %c0_81 = arith.constant 0 : index
    %75 = vector.load %arg9[%c0_77, %c1_78, %c6_79, %c1_80, %c0_81] : memref<2x2x9x9x8xf32, #tpu.memory_space<vmem>>, vector<1x1x1x7x8xf32>
    %76 = vector.shape_cast %75 : vector<1x1x1x7x8xf32> to vector<7x8xf32>
    %77 = vector.shape_cast %74 : vector<7x8xf32> to vector<1x1x1x7x8xf32>
    tpu.vector_store %arg9[%c0_77, %c1_78, %c6_79, %c1_80, %c0_81], %77 {strides = array<i32>} : memref<2x2x9x9x8xf32, #tpu.memory_space<vmem>>, vector<1x1x1x7x8xf32>,
    %78 = vector.extract_strided_slice %53 {offsets = [42, 0], sizes = [7, 8], strides = [1, 1]} : vector<49x8xf32> to vector<7x8xf32>
    %c0_82 = arith.constant 0 : index
    %c1_83 = arith.constant 1 : index
    %c7_84 = arith.constant 7 : index
    %c1_85 = arith.constant 1 : index
    %c0_86 = arith.constant 0 : index
    %79 = vector.load %arg9[%c0_82, %c1_83, %c7_84, %c1_85, %c0_86] : memref<2x2x9x9x8xf32, #tpu.memory_space<vmem>>, vector<1x1x1x7x8xf32>
    %80 = vector.shape_cast %79 : vector<1x1x1x7x8xf32> to vector<7x8xf32>
    %81 = vector.shape_cast %78 : vector<7x8xf32> to vector<1x1x1x7x8xf32>
    tpu.vector_store %arg9[%c0_82, %c1_83, %c7_84, %c1_85, %c0_86], %81 {strides = array<i32>} : memref<2x2x9x9x8xf32, #tpu.memory_space<vmem>>, vector<1x1x1x7x8xf32>,
    %c0_87 = arith.constant 0 : index
    %c1_88 = arith.constant 1 : index
    %c0_89 = arith.constant 0 : index
    %c0_90 = arith.constant 0 : index
    %c0_91 = arith.constant 0 : index
    %82 = vector.load %arg1[%c0_87, %c1_88, %c0_89, %c0_90, %c0_91] : memref<1x2x2x49x25xf32, #tpu.memory_space<vmem>>, vector<1x1x1x49x25xf32>
    %83 = vector.shape_cast %82 : vector<1x1x1x49x25xf32> to vector<49x25xf32>
    %84 = arith.truncf %83 : vector<49x25xf32> to vector<49x25xbf16>
    %cst_92 = arith.constant dense<0.000000e+00> : vector<49x8xf32>
    %85 = tpu.matmul %84, %2, %cst_92 {dimension_numbers = #tpu.dot_dimension_numbers<[1], [0], [0], [1], [0, 0, 1, 1], [], []>} : vector<49x25xbf16>, vector<25x8xbf16>, vector<49x8xf32> -> vector<49x8xf32>
    %86 = vector.broadcast %3 : vector<1x8xf32> to vector<49x8xf32>
    %87 = arith.addf %85, %86 : vector<49x8xf32>
    %cst_93 = arith.constant 0.000000e+00 : f32
    %88 = vector.broadcast %cst_93 : f32 to vector<49x8xf32>
    %89 = arith.cmpf oge, %87, %88 : vector<49x8xf32>
    %cst_94 = arith.constant 3.000000e-01 : f32
    %90 = vector.broadcast %cst_94 : f32 to vector<49x8xf32>
    %91 = arith.mulf %90, %87 : vector<49x8xf32>
    %92 = arith.select %89, %87, %91 : vector<49x8xi1>, vector<49x8xf32>
    %93 = vector.extract_strided_slice %92 {offsets = [0, 0], sizes = [7, 8], strides = [1, 1]} : vector<49x8xf32> to vector<7x8xf32>
    %c1_95 = arith.constant 1 : index
    %c0_96 = arith.constant 0 : index
    %c1_97 = arith.constant 1 : index
    %c1_98 = arith.constant 1 : index
    %c0_99 = arith.constant 0 : index
    %94 = vector.load %arg9[%c1_95, %c0_96, %c1_97, %c1_98, %c0_99] : memref<2x2x9x9x8xf32, #tpu.memory_space<vmem>>, vector<1x1x1x7x8xf32>
    %95 = vector.shape_cast %94 : vector<1x1x1x7x8xf32> to vector<7x8xf32>
    %96 = vector.shape_cast %93 : vector<7x8xf32> to vector<1x1x1x7x8xf32>
    tpu.vector_store %arg9[%c1_95, %c0_96, %c1_97, %c1_98, %c0_99], %96 {strides = array<i32>} : memref<2x2x9x9x8xf32, #tpu.memory_space<vmem>>, vector<1x1x1x7x8xf32>,
    %97 = vector.extract_strided_slice %92 {offsets = [7, 0], sizes = [7, 8], strides = [1, 1]} : vector<49x8xf32> to vector<7x8xf32>
    %c1_100 = arith.constant 1 : index
    %c0_101 = arith.constant 0 : index
    %c2_102 = arith.constant 2 : index
    %c1_103 = arith.constant 1 : index
    %c0_104 = arith.constant 0 : index
    %98 = vector.load %arg9[%c1_100, %c0_101, %c2_102, %c1_103, %c0_104] : memref<2x2x9x9x8xf32, #tpu.memory_space<vmem>>, vector<1x1x1x7x8xf32>
    %99 = vector.shape_cast %98 : vector<1x1x1x7x8xf32> to vector<7x8xf32>
    %100 = vector.shape_cast %97 : vector<7x8xf32> to vector<1x1x1x7x8xf32>
    tpu.vector_store %arg9[%c1_100, %c0_101, %c2_102, %c1_103, %c0_104], %100 {strides = array<i32>} : memref<2x2x9x9x8xf32, #tpu.memory_space<vmem>>, vector<1x1x1x7x8xf32>,
    %101 = vector.extract_strided_slice %92 {offsets = [14, 0], sizes = [7, 8], strides = [1, 1]} : vector<49x8xf32> to vector<7x8xf32>
    %c1_105 = arith.constant 1 : index
    %c0_106 = arith.constant 0 : index
    %c3_107 = arith.constant 3 : index
    %c1_108 = arith.constant 1 : index
    %c0_109 = arith.constant 0 : index
    %102 = vector.load %arg9[%c1_105, %c0_106, %c3_107, %c1_108, %c0_109] : memref<2x2x9x9x8xf32, #tpu.memory_space<vmem>>, vector<1x1x1x7x8xf32>
    %103 = vector.shape_cast %102 : vector<1x1x1x7x8xf32> to vector<7x8xf32>
    %104 = vector.shape_cast %101 : vector<7x8xf32> to vector<1x1x1x7x8xf32>
    tpu.vector_store %arg9[%c1_105, %c0_106, %c3_107, %c1_108, %c0_109], %104 {strides = array<i32>} : memref<2x2x9x9x8xf32, #tpu.memory_space<vmem>>, vector<1x1x1x7x8xf32>,
    %105 = vector.extract_strided_slice %92 {offsets = [21, 0], sizes = [7, 8], strides = [1, 1]} : vector<49x8xf32> to vector<7x8xf32>
    %c1_110 = arith.constant 1 : index
    %c0_111 = arith.constant 0 : index
    %c4_112 = arith.constant 4 : index
    %c1_113 = arith.constant 1 : index
    %c0_114 = arith.constant 0 : index
    %106 = vector.load %arg9[%c1_110, %c0_111, %c4_112, %c1_113, %c0_114] : memref<2x2x9x9x8xf32, #tpu.memory_space<vmem>>, vector<1x1x1x7x8xf32>
    %107 = vector.shape_cast %106 : vector<1x1x1x7x8xf32> to vector<7x8xf32>
    %108 = vector.shape_cast %105 : vector<7x8xf32> to vector<1x1x1x7x8xf32>
    tpu.vector_store %arg9[%c1_110, %c0_111, %c4_112, %c1_113, %c0_114], %108 {strides = array<i32>} : memref<2x2x9x9x8xf32, #tpu.memory_space<vmem>>, vector<1x1x1x7x8xf32>,
    %109 = vector.extract_strided_slice %92 {offsets = [28, 0], sizes = [7, 8], strides = [1, 1]} : vector<49x8xf32> to vector<7x8xf32>
    %c1_115 = arith.constant 1 : index
    %c0_116 = arith.constant 0 : index
    %c5_117 = arith.constant 5 : index
    %c1_118 = arith.constant 1 : index
    %c0_119 = arith.constant 0 : index
    %110 = vector.load %arg9[%c1_115, %c0_116, %c5_117, %c1_118, %c0_119] : memref<2x2x9x9x8xf32, #tpu.memory_space<vmem>>, vector<1x1x1x7x8xf32>
    %111 = vector.shape_cast %110 : vector<1x1x1x7x8xf32> to vector<7x8xf32>
    %112 = vector.shape_cast %109 : vector<7x8xf32> to vector<1x1x1x7x8xf32>
    tpu.vector_store %arg9[%c1_115, %c0_116, %c5_117, %c1_118, %c0_119], %112 {strides = array<i32>} : memref<2x2x9x9x8xf32, #tpu.memory_space<vmem>>, vector<1x1x1x7x8xf32>,
    %113 = vector.extract_strided_slice %92 {offsets = [35, 0], sizes = [7, 8], strides = [1, 1]} : vector<49x8xf32> to vector<7x8xf32>
    %c1_120 = arith.constant 1 : index
    %c0_121 = arith.constant 0 : index
    %c6_122 = arith.constant 6 : index
    %c1_123 = arith.constant 1 : index
    %c0_124 = arith.constant 0 : index
    %114 = vector.load %arg9[%c1_120, %c0_121, %c6_122, %c1_123, %c0_124] : memref<2x2x9x9x8xf32, #tpu.memory_space<vmem>>, vector<1x1x1x7x8xf32>
    %115 = vector.shape_cast %114 : vector<1x1x1x7x8xf32> to vector<7x8xf32>
    %116 = vector.shape_cast %113 : vector<7x8xf32> to vector<1x1x1x7x8xf32>
    tpu.vector_store %arg9[%c1_120, %c0_121, %c6_122, %c1_123, %c0_124], %116 {strides = array<i32>} : memref<2x2x9x9x8xf32, #tpu.memory_space<vmem>>, vector<1x1x1x7x8xf32>,
    %117 = vector.extract_strided_slice %92 {offsets = [42, 0], sizes = [7, 8], strides = [1, 1]} : vector<49x8xf32> to vector<7x8xf32>
    %c1_125 = arith.constant 1 : index
    %c0_126 = arith.constant 0 : index
    %c7_127 = arith.constant 7 : index
    %c1_128 = arith.constant 1 : index
    %c0_129 = arith.constant 0 : index
    %118 = vector.load %arg9[%c1_125, %c0_126, %c7_127, %c1_128, %c0_129] : memref<2x2x9x9x8xf32, #tpu.memory_space<vmem>>, vector<1x1x1x7x8xf32>
    %119 = vector.shape_cast %118 : vector<1x1x1x7x8xf32> to vector<7x8xf32>
    %120 = vector.shape_cast %117 : vector<7x8xf32> to vector<1x1x1x7x8xf32>
    tpu.vector_store %arg9[%c1_125, %c0_126, %c7_127, %c1_128, %c0_129], %120 {strides = array<i32>} : memref<2x2x9x9x8xf32, #tpu.memory_space<vmem>>, vector<1x1x1x7x8xf32>,
    %c0_130 = arith.constant 0 : index
    %c1_131 = arith.constant 1 : index
    %c1_132 = arith.constant 1 : index
    %c0_133 = arith.constant 0 : index
    %c0_134 = arith.constant 0 : index
    %121 = vector.load %arg1[%c0_130, %c1_131, %c1_132, %c0_133, %c0_134] : memref<1x2x2x49x25xf32, #tpu.memory_space<vmem>>, vector<1x1x1x49x25xf32>
    %122 = vector.shape_cast %121 : vector<1x1x1x49x25xf32> to vector<49x25xf32>
    %123 = arith.truncf %122 : vector<49x25xf32> to vector<49x25xbf16>
    %cst_135 = arith.constant dense<0.000000e+00> : vector<49x8xf32>
    %124 = tpu.matmul %123, %2, %cst_135 {dimension_numbers = #tpu.dot_dimension_numbers<[1], [0], [0], [1], [0, 0, 1, 1], [], []>} : vector<49x25xbf16>, vector<25x8xbf16>, vector<49x8xf32> -> vector<49x8xf32>
    %125 = vector.broadcast %3 : vector<1x8xf32> to vector<49x8xf32>
    %126 = arith.addf %124, %125 : vector<49x8xf32>
    %cst_136 = arith.constant 0.000000e+00 : f32
    %127 = vector.broadcast %cst_136 : f32 to vector<49x8xf32>
    %128 = arith.cmpf oge, %126, %127 : vector<49x8xf32>
    %cst_137 = arith.constant 3.000000e-01 : f32
    %129 = vector.broadcast %cst_137 : f32 to vector<49x8xf32>
    %130 = arith.mulf %129, %126 : vector<49x8xf32>
    %131 = arith.select %128, %126, %130 : vector<49x8xi1>, vector<49x8xf32>
    %132 = vector.extract_strided_slice %131 {offsets = [0, 0], sizes = [7, 8], strides = [1, 1]} : vector<49x8xf32> to vector<7x8xf32>
    %c1_138 = arith.constant 1 : index
    %c1_139 = arith.constant 1 : index
    %c1_140 = arith.constant 1 : index
    %c1_141 = arith.constant 1 : index
    %c0_142 = arith.constant 0 : index
    %133 = vector.load %arg9[%c1_138, %c1_139, %c1_140, %c1_141, %c0_142] : memref<2x2x9x9x8xf32, #tpu.memory_space<vmem>>, vector<1x1x1x7x8xf32>
    %134 = vector.shape_cast %133 : vector<1x1x1x7x8xf32> to vector<7x8xf32>
    %135 = vector.shape_cast %132 : vector<7x8xf32> to vector<1x1x1x7x8xf32>
    tpu.vector_store %arg9[%c1_138, %c1_139, %c1_140, %c1_141, %c0_142], %135 {strides = array<i32>} : memref<2x2x9x9x8xf32, #tpu.memory_space<vmem>>, vector<1x1x1x7x8xf32>,
    %136 = vector.extract_strided_slice %131 {offsets = [7, 0], sizes = [7, 8], strides = [1, 1]} : vector<49x8xf32> to vector<7x8xf32>
    %c1_143 = arith.constant 1 : index
    %c1_144 = arith.constant 1 : index
    %c2_145 = arith.constant 2 : index
    %c1_146 = arith.constant 1 : index
    %c0_147 = arith.constant 0 : index
    %137 = vector.load %arg9[%c1_143, %c1_144, %c2_145, %c1_146, %c0_147] : memref<2x2x9x9x8xf32, #tpu.memory_space<vmem>>, vector<1x1x1x7x8xf32>
    %138 = vector.shape_cast %137 : vector<1x1x1x7x8xf32> to vector<7x8xf32>
    %139 = vector.shape_cast %136 : vector<7x8xf32> to vector<1x1x1x7x8xf32>
    tpu.vector_store %arg9[%c1_143, %c1_144, %c2_145, %c1_146, %c0_147], %139 {strides = array<i32>} : memref<2x2x9x9x8xf32, #tpu.memory_space<vmem>>, vector<1x1x1x7x8xf32>,
    %140 = vector.extract_strided_slice %131 {offsets = [14, 0], sizes = [7, 8], strides = [1, 1]} : vector<49x8xf32> to vector<7x8xf32>
    %c1_148 = arith.constant 1 : index
    %c1_149 = arith.constant 1 : index
    %c3_150 = arith.constant 3 : index
    %c1_151 = arith.constant 1 : index
    %c0_152 = arith.constant 0 : index
    %141 = vector.load %arg9[%c1_148, %c1_149, %c3_150, %c1_151, %c0_152] : memref<2x2x9x9x8xf32, #tpu.memory_space<vmem>>, vector<1x1x1x7x8xf32>
    %142 = vector.shape_cast %141 : vector<1x1x1x7x8xf32> to vector<7x8xf32>
    %143 = vector.shape_cast %140 : vector<7x8xf32> to vector<1x1x1x7x8xf32>
    tpu.vector_store %arg9[%c1_148, %c1_149, %c3_150, %c1_151, %c0_152], %143 {strides = array<i32>} : memref<2x2x9x9x8xf32, #tpu.memory_space<vmem>>, vector<1x1x1x7x8xf32>,
    %144 = vector.extract_strided_slice %131 {offsets = [21, 0], sizes = [7, 8], strides = [1, 1]} : vector<49x8xf32> to vector<7x8xf32>
    %c1_153 = arith.constant 1 : index
    %c1_154 = arith.constant 1 : index
    %c4_155 = arith.constant 4 : index
    %c1_156 = arith.constant 1 : index
    %c0_157 = arith.constant 0 : index
    %145 = vector.load %arg9[%c1_153, %c1_154, %c4_155, %c1_156, %c0_157] : memref<2x2x9x9x8xf32, #tpu.memory_space<vmem>>, vector<1x1x1x7x8xf32>
    %146 = vector.shape_cast %145 : vector<1x1x1x7x8xf32> to vector<7x8xf32>
    %147 = vector.shape_cast %144 : vector<7x8xf32> to vector<1x1x1x7x8xf32>
    tpu.vector_store %arg9[%c1_153, %c1_154, %c4_155, %c1_156, %c0_157], %147 {strides = array<i32>} : memref<2x2x9x9x8xf32, #tpu.memory_space<vmem>>, vector<1x1x1x7x8xf32>,
    %148 = vector.extract_strided_slice %131 {offsets = [28, 0], sizes = [7, 8], strides = [1, 1]} : vector<49x8xf32> to vector<7x8xf32>
    %c1_158 = arith.constant 1 : index
    %c1_159 = arith.constant 1 : index
    %c5_160 = arith.constant 5 : index
    %c1_161 = arith.constant 1 : index
    %c0_162 = arith.constant 0 : index
    %149 = vector.load %arg9[%c1_158, %c1_159, %c5_160, %c1_161, %c0_162] : memref<2x2x9x9x8xf32, #tpu.memory_space<vmem>>, vector<1x1x1x7x8xf32>
    %150 = vector.shape_cast %149 : vector<1x1x1x7x8xf32> to vector<7x8xf32>
    %151 = vector.shape_cast %148 : vector<7x8xf32> to vector<1x1x1x7x8xf32>
    tpu.vector_store %arg9[%c1_158, %c1_159, %c5_160, %c1_161, %c0_162], %151 {strides = array<i32>} : memref<2x2x9x9x8xf32, #tpu.memory_space<vmem>>, vector<1x1x1x7x8xf32>,
    %152 = vector.extract_strided_slice %131 {offsets = [35, 0], sizes = [7, 8], strides = [1, 1]} : vector<49x8xf32> to vector<7x8xf32>
    %c1_163 = arith.constant 1 : index
    %c1_164 = arith.constant 1 : index
    %c6_165 = arith.constant 6 : index
    %c1_166 = arith.constant 1 : index
    %c0_167 = arith.constant 0 : index
    %153 = vector.load %arg9[%c1_163, %c1_164, %c6_165, %c1_166, %c0_167] : memref<2x2x9x9x8xf32, #tpu.memory_space<vmem>>, vector<1x1x1x7x8xf32>
    %154 = vector.shape_cast %153 : vector<1x1x1x7x8xf32> to vector<7x8xf32>
    %155 = vector.shape_cast %152 : vector<7x8xf32> to vector<1x1x1x7x8xf32>
    tpu.vector_store %arg9[%c1_163, %c1_164, %c6_165, %c1_166, %c0_167], %155 {strides = array<i32>} : memref<2x2x9x9x8xf32, #tpu.memory_space<vmem>>, vector<1x1x1x7x8xf32>,
    %156 = vector.extract_strided_slice %131 {offsets = [42, 0], sizes = [7, 8], strides = [1, 1]} : vector<49x8xf32> to vector<7x8xf32>
    %c1_168 = arith.constant 1 : index
    %c1_169 = arith.constant 1 : index
    %c7_170 = arith.constant 7 : index
    %c1_171 = arith.constant 1 : index
    %c0_172 = arith.constant 0 : index
    %157 = vector.load %arg9[%c1_168, %c1_169, %c7_170, %c1_171, %c0_172] : memref<2x2x9x9x8xf32, #tpu.memory_space<vmem>>, vector<1x1x1x7x8xf32>
    %158 = vector.shape_cast %157 : vector<1x1x1x7x8xf32> to vector<7x8xf32>
    %159 = vector.shape_cast %156 : vector<7x8xf32> to vector<1x1x1x7x8xf32>
    tpu.vector_store %arg9[%c1_168, %c1_169, %c7_170, %c1_171, %c0_172], %159 {strides = array<i32>} : memref<2x2x9x9x8xf32, #tpu.memory_space<vmem>>, vector<1x1x1x7x8xf32>,
    %c0_173 = arith.constant 0 : index
    %c0_174 = arith.constant 0 : index
    %160 = vector.load %arg4[%c0_173, %c0_174] : memref<200x16xbf16, #tpu.memory_space<vmem>>, vector<200x16xbf16>
    %c0_175 = arith.constant 0 : index
    %c0_176 = arith.constant 0 : index
    %161 = vector.load %arg5[%c0_175, %c0_176] : memref<1x16xf32, #tpu.memory_space<vmem>>, vector<1x16xf32>
    %c0_177 = arith.constant 0 : index
    %c0_178 = arith.constant 0 : index
    %162 = vector.load %arg6[%c0_177, %c0_178] : memref<49x16xf32, #tpu.memory_space<vmem>>, vector<49x16xf32>
    %cst_179 = arith.constant 0.000000e+00 : f32
    %163 = vector.broadcast %cst_179 : f32 to vector<1x1xf32>
    %c0_180 = arith.constant 0 : index
    %c0_181 = arith.constant 0 : index
    %c0_182 = arith.constant 0 : index
    %c0_183 = arith.constant 0 : index
    %c0_184 = arith.constant 0 : index
    %164 = vector.load %arg9[%c0_180, %c0_181, %c0_182, %c0_183, %c0_184] : memref<2x2x9x9x8xf32, #tpu.memory_space<vmem>>, vector<1x1x1x7x8xf32>
    %165 = vector.shape_cast %164 : vector<1x1x1x7x8xf32> to vector<7x8xf32>
    %c0_185 = arith.constant 0 : index
    %c1_186 = arith.constant 1 : index
    %c0_187 = arith.constant 0 : index
    %c0_188 = arith.constant 0 : index
    %c0_189 = arith.constant 0 : index
    %166 = vector.load %arg9[%c0_185, %c1_186, %c0_187, %c0_188, %c0_189] : memref<2x2x9x9x8xf32, #tpu.memory_space<vmem>>, vector<1x1x1x7x8xf32>
    %167 = vector.shape_cast %166 : vector<1x1x1x7x8xf32> to vector<7x8xf32>
    %c0_190 = arith.constant 0 : index
    %c0_191 = arith.constant 0 : index
    %c0_192 = arith.constant 0 : index
    %c1_193 = arith.constant 1 : index
    %c0_194 = arith.constant 0 : index
    %168 = vector.load %arg9[%c0_190, %c0_191, %c0_192, %c1_193, %c0_194] : memref<2x2x9x9x8xf32, #tpu.memory_space<vmem>>, vector<1x1x1x7x8xf32>
    %169 = vector.shape_cast %168 : vector<1x1x1x7x8xf32> to vector<7x8xf32>
    %c0_195 = arith.constant 0 : index
    %c1_196 = arith.constant 1 : index
    %c0_197 = arith.constant 0 : index
    %c1_198 = arith.constant 1 : index
    %c0_199 = arith.constant 0 : index
    %170 = vector.load %arg9[%c0_195, %c1_196, %c0_197, %c1_198, %c0_199] : memref<2x2x9x9x8xf32, #tpu.memory_space<vmem>>, vector<1x1x1x7x8xf32>
    %171 = vector.shape_cast %170 : vector<1x1x1x7x8xf32> to vector<7x8xf32>
    %c0_200 = arith.constant 0 : index
    %c0_201 = arith.constant 0 : index
    %c0_202 = arith.constant 0 : index
    %c2_203 = arith.constant 2 : index
    %c0_204 = arith.constant 0 : index
    %172 = vector.load %arg9[%c0_200, %c0_201, %c0_202, %c2_203, %c0_204] : memref<2x2x9x9x8xf32, #tpu.memory_space<vmem>>, vector<1x1x1x7x8xf32>
    %173 = vector.shape_cast %172 : vector<1x1x1x7x8xf32> to vector<7x8xf32>
    %c1_205 = arith.constant 1 : index
    %c0_206 = arith.constant 0 : index
    %c0_207 = arith.constant 0 : index
    %c0_208 = arith.constant 0 : index
    %c0_209 = arith.constant 0 : index
    %174 = vector.load %arg9[%c1_205, %c0_206, %c0_207, %c0_208, %c0_209] : memref<2x2x9x9x8xf32, #tpu.memory_space<vmem>>, vector<1x1x1x7x8xf32>
    %175 = vector.shape_cast %174 : vector<1x1x1x7x8xf32> to vector<7x8xf32>
    %c1_210 = arith.constant 1 : index
    %c1_211 = arith.constant 1 : index
    %c0_212 = arith.constant 0 : index
    %c0_213 = arith.constant 0 : index
    %c0_214 = arith.constant 0 : index
    %176 = vector.load %arg9[%c1_210, %c1_211, %c0_212, %c0_213, %c0_214] : memref<2x2x9x9x8xf32, #tpu.memory_space<vmem>>, vector<1x1x1x7x8xf32>
    %177 = vector.shape_cast %176 : vector<1x1x1x7x8xf32> to vector<7x8xf32>
    %c1_215 = arith.constant 1 : index
    %c0_216 = arith.constant 0 : index
    %c0_217 = arith.constant 0 : index
    %c1_218 = arith.constant 1 : index
    %c0_219 = arith.constant 0 : index
    %178 = vector.load %arg9[%c1_215, %c0_216, %c0_217, %c1_218, %c0_219] : memref<2x2x9x9x8xf32, #tpu.memory_space<vmem>>, vector<1x1x1x7x8xf32>
    %179 = vector.shape_cast %178 : vector<1x1x1x7x8xf32> to vector<7x8xf32>
    %c1_220 = arith.constant 1 : index
    %c1_221 = arith.constant 1 : index
    %c0_222 = arith.constant 0 : index
    %c1_223 = arith.constant 1 : index
    %c0_224 = arith.constant 0 : index
    %180 = vector.load %arg9[%c1_220, %c1_221, %c0_222, %c1_223, %c0_224] : memref<2x2x9x9x8xf32, #tpu.memory_space<vmem>>, vector<1x1x1x7x8xf32>
    %181 = vector.shape_cast %180 : vector<1x1x1x7x8xf32> to vector<7x8xf32>
    %c1_225 = arith.constant 1 : index
    %c0_226 = arith.constant 0 : index
    %c0_227 = arith.constant 0 : index
    %c2_228 = arith.constant 2 : index
    %c0_229 = arith.constant 0 : index
    %182 = vector.load %arg9[%c1_225, %c0_226, %c0_227, %c2_228, %c0_229] : memref<2x2x9x9x8xf32, #tpu.memory_space<vmem>>, vector<1x1x1x7x8xf32>
    %183 = vector.shape_cast %182 : vector<1x1x1x7x8xf32> to vector<7x8xf32>
    %c0_230 = arith.constant 0 : index
    %c0_231 = arith.constant 0 : index
    %c1_232 = arith.constant 1 : index
    %c0_233 = arith.constant 0 : index
    %c0_234 = arith.constant 0 : index
    %184 = vector.load %arg9[%c0_230, %c0_231, %c1_232, %c0_233, %c0_234] : memref<2x2x9x9x8xf32, #tpu.memory_space<vmem>>, vector<1x1x1x7x8xf32>
    %185 = vector.shape_cast %184 : vector<1x1x1x7x8xf32> to vector<7x8xf32>
    %c0_235 = arith.constant 0 : index
    %c1_236 = arith.constant 1 : index
    %c1_237 = arith.constant 1 : index
    %c0_238 = arith.constant 0 : index
    %c0_239 = arith.constant 0 : index
    %186 = vector.load %arg9[%c0_235, %c1_236, %c1_237, %c0_238, %c0_239] : memref<2x2x9x9x8xf32, #tpu.memory_space<vmem>>, vector<1x1x1x7x8xf32>
    %187 = vector.shape_cast %186 : vector<1x1x1x7x8xf32> to vector<7x8xf32>
    %c0_240 = arith.constant 0 : index
    %c0_241 = arith.constant 0 : index
    %c1_242 = arith.constant 1 : index
    %c1_243 = arith.constant 1 : index
    %c0_244 = arith.constant 0 : index
    %188 = vector.load %arg9[%c0_240, %c0_241, %c1_242, %c1_243, %c0_244] : memref<2x2x9x9x8xf32, #tpu.memory_space<vmem>>, vector<1x1x1x7x8xf32>
    %189 = vector.shape_cast %188 : vector<1x1x1x7x8xf32> to vector<7x8xf32>
    %c0_245 = arith.constant 0 : index
    %c1_246 = arith.constant 1 : index
    %c1_247 = arith.constant 1 : index
    %c1_248 = arith.constant 1 : index
    %c0_249 = arith.constant 0 : index
    %190 = vector.load %arg9[%c0_245, %c1_246, %c1_247, %c1_248, %c0_249] : memref<2x2x9x9x8xf32, #tpu.memory_space<vmem>>, vector<1x1x1x7x8xf32>
    %191 = vector.shape_cast %190 : vector<1x1x1x7x8xf32> to vector<7x8xf32>
    %c0_250 = arith.constant 0 : index
    %c0_251 = arith.constant 0 : index
    %c1_252 = arith.constant 1 : index
    %c2_253 = arith.constant 2 : index
    %c0_254 = arith.constant 0 : index
    %192 = vector.load %arg9[%c0_250, %c0_251, %c1_252, %c2_253, %c0_254] : memref<2x2x9x9x8xf32, #tpu.memory_space<vmem>>, vector<1x1x1x7x8xf32>
    %193 = vector.shape_cast %192 : vector<1x1x1x7x8xf32> to vector<7x8xf32>
    %c1_255 = arith.constant 1 : index
    %c0_256 = arith.constant 0 : index
    %c1_257 = arith.constant 1 : index
    %c0_258 = arith.constant 0 : index
    %c0_259 = arith.constant 0 : index
    %194 = vector.load %arg9[%c1_255, %c0_256, %c1_257, %c0_258, %c0_259] : memref<2x2x9x9x8xf32, #tpu.memory_space<vmem>>, vector<1x1x1x7x8xf32>
    %195 = vector.shape_cast %194 : vector<1x1x1x7x8xf32> to vector<7x8xf32>
    %c1_260 = arith.constant 1 : index
    %c1_261 = arith.constant 1 : index
    %c1_262 = arith.constant 1 : index
    %c0_263 = arith.constant 0 : index
    %c0_264 = arith.constant 0 : index
    %196 = vector.load %arg9[%c1_260, %c1_261, %c1_262, %c0_263, %c0_264] : memref<2x2x9x9x8xf32, #tpu.memory_space<vmem>>, vector<1x1x1x7x8xf32>
    %197 = vector.shape_cast %196 : vector<1x1x1x7x8xf32> to vector<7x8xf32>
    %c1_265 = arith.constant 1 : index
    %c0_266 = arith.constant 0 : index
    %c1_267 = arith.constant 1 : index
    %c1_268 = arith.constant 1 : index
    %c0_269 = arith.constant 0 : index
    %198 = vector.load %arg9[%c1_265, %c0_266, %c1_267, %c1_268, %c0_269] : memref<2x2x9x9x8xf32, #tpu.memory_space<vmem>>, vector<1x1x1x7x8xf32>
    %199 = vector.shape_cast %198 : vector<1x1x1x7x8xf32> to vector<7x8xf32>
    %c1_270 = arith.constant 1 : index
    %c1_271 = arith.constant 1 : index
    %c1_272 = arith.constant 1 : index
    %c1_273 = arith.constant 1 : index
    %c0_274 = arith.constant 0 : index
    %200 = vector.load %arg9[%c1_270, %c1_271, %c1_272, %c1_273, %c0_274] : memref<2x2x9x9x8xf32, #tpu.memory_space<vmem>>, vector<1x1x1x7x8xf32>
    %201 = vector.shape_cast %200 : vector<1x1x1x7x8xf32> to vector<7x8xf32>
    %c1_275 = arith.constant 1 : index
    %c0_276 = arith.constant 0 : index
    %c1_277 = arith.constant 1 : index
    %c2_278 = arith.constant 2 : index
    %c0_279 = arith.constant 0 : index
    %202 = vector.load %arg9[%c1_275, %c0_276, %c1_277, %c2_278, %c0_279] : memref<2x2x9x9x8xf32, #tpu.memory_space<vmem>>, vector<1x1x1x7x8xf32>
    %203 = vector.shape_cast %202 : vector<1x1x1x7x8xf32> to vector<7x8xf32>
    %c0_280 = arith.constant 0 : index
    %c0_281 = arith.constant 0 : index
    %c2_282 = arith.constant 2 : index
    %c0_283 = arith.constant 0 : index
    %c0_284 = arith.constant 0 : index
    %204 = vector.load %arg9[%c0_280, %c0_281, %c2_282, %c0_283, %c0_284] : memref<2x2x9x9x8xf32, #tpu.memory_space<vmem>>, vector<1x1x1x7x8xf32>
    %205 = vector.shape_cast %204 : vector<1x1x1x7x8xf32> to vector<7x8xf32>
    %c0_285 = arith.constant 0 : index
    %c1_286 = arith.constant 1 : index
    %c2_287 = arith.constant 2 : index
    %c0_288 = arith.constant 0 : index
    %c0_289 = arith.constant 0 : index
    %206 = vector.load %arg9[%c0_285, %c1_286, %c2_287, %c0_288, %c0_289] : memref<2x2x9x9x8xf32, #tpu.memory_space<vmem>>, vector<1x1x1x7x8xf32>
    %207 = vector.shape_cast %206 : vector<1x1x1x7x8xf32> to vector<7x8xf32>
    %c0_290 = arith.constant 0 : index
    %c0_291 = arith.constant 0 : index
    %c2_292 = arith.constant 2 : index
    %c1_293 = arith.constant 1 : index
    %c0_294 = arith.constant 0 : index
    %208 = vector.load %arg9[%c0_290, %c0_291, %c2_292, %c1_293, %c0_294] : memref<2x2x9x9x8xf32, #tpu.memory_space<vmem>>, vector<1x1x1x7x8xf32>
    %209 = vector.shape_cast %208 : vector<1x1x1x7x8xf32> to vector<7x8xf32>
    %c0_295 = arith.constant 0 : index
    %c1_296 = arith.constant 1 : index
    %c2_297 = arith.constant 2 : index
    %c1_298 = arith.constant 1 : index
    %c0_299 = arith.constant 0 : index
    %210 = vector.load %arg9[%c0_295, %c1_296, %c2_297, %c1_298, %c0_299] : memref<2x2x9x9x8xf32, #tpu.memory_space<vmem>>, vector<1x1x1x7x8xf32>
    %211 = vector.shape_cast %210 : vector<1x1x1x7x8xf32> to vector<7x8xf32>
    %c0_300 = arith.constant 0 : index
    %c0_301 = arith.constant 0 : index
    %c2_302 = arith.constant 2 : index
    %c2_303 = arith.constant 2 : index
    %c0_304 = arith.constant 0 : index
    %212 = vector.load %arg9[%c0_300, %c0_301, %c2_302, %c2_303, %c0_304] : memref<2x2x9x9x8xf32, #tpu.memory_space<vmem>>, vector<1x1x1x7x8xf32>
    %213 = vector.shape_cast %212 : vector<1x1x1x7x8xf32> to vector<7x8xf32>
    %214 = tpu.concatenate %165, %167, %169, %171, %173, %175, %177, %179, %181, %183, %185, %187, %189, %191, %193, %195 in 1 : vector<7x8xf32>, vector<7x8xf32>, vector<7x8xf32>, vector<7x8xf32>, vector<7x8xf32>, vector<7x8xf32>, vector<7x8xf32>, vector<7x8xf32>, vector<7x8xf32>, vector<7x8xf32>, vector<7x8xf32>, vector<7x8xf32>, vector<7x8xf32>, vector<7x8xf32>, vector<7x8xf32>, vector<7x8xf32> -> vector<7x128xf32>
    %215 = tpu.concatenate %197, %199, %201, %203, %205, %207, %209, %211, %213 in 1 : vector<7x8xf32>, vector<7x8xf32>, vector<7x8xf32>, vector<7x8xf32>, vector<7x8xf32>, vector<7x8xf32>, vector<7x8xf32>, vector<7x8xf32>, vector<7x8xf32> -> vector<7x72xf32>
    %216 = tpu.concatenate %214, %215 in 1 : vector<7x128xf32>, vector<7x72xf32> -> vector<7x200xf32>
    %217 = arith.truncf %216 : vector<7x200xf32> to vector<7x200xbf16>
    %cst_305 = arith.constant dense<0.000000e+00> : vector<7x16xf32>
    %218 = tpu.matmul %217, %160, %cst_305 {dimension_numbers = #tpu.dot_dimension_numbers<[1], [0], [0], [1], [0, 0, 1, 1], [], []>} : vector<7x200xbf16>, vector<200x16xbf16>, vector<7x16xf32> -> vector<7x16xf32>
    %219 = vector.broadcast %161 : vector<1x16xf32> to vector<7x16xf32>
    %220 = arith.addf %218, %219 : vector<7x16xf32>
    %cst_306 = arith.constant 0.000000e+00 : f32
    %221 = vector.broadcast %cst_306 : f32 to vector<7x16xf32>
    %222 = arith.cmpf oge, %220, %221 : vector<7x16xf32>
    %cst_307 = arith.constant 3.000000e-01 : f32
    %223 = vector.broadcast %cst_307 : f32 to vector<7x16xf32>
    %224 = arith.mulf %223, %220 : vector<7x16xf32>
    %225 = arith.select %222, %220, %224 : vector<7x16xi1>, vector<7x16xf32>
    %226 = vector.extract_strided_slice %162 {offsets = [0, 0], sizes = [7, 16], strides = [1, 1]} : vector<49x16xf32> to vector<7x16xf32>
    %227 = arith.mulf %225, %226 : vector<7x16xf32>
    %228 = vector.shape_cast %227 : vector<7x16xf32> to vector<1x7x16xf32>
    %cst_308 = arith.constant dense<0.000000e+00> : vector<1xf32>
    %229 = vector.multi_reduction <add>, %228, %cst_308 [1, 2] : vector<1x7x16xf32> to vector<1xf32>
    %230 = vector.shape_cast %229 : vector<1xf32> to vector<1x1x1xf32>
    %231 = vector.extract %230[0, 0, 0] : f32 from vector<1x1x1xf32>
    %232 = vector.broadcast %231 : f32 to vector<1x1xf32>
    %233 = arith.addf %163, %232 : vector<1x1xf32>
    %c0_309 = arith.constant 0 : index
    %c0_310 = arith.constant 0 : index
    %c1_311 = arith.constant 1 : index
    %c0_312 = arith.constant 0 : index
    %c0_313 = arith.constant 0 : index
    %234 = vector.load %arg9[%c0_309, %c0_310, %c1_311, %c0_312, %c0_313] : memref<2x2x9x9x8xf32, #tpu.memory_space<vmem>>, vector<1x1x1x7x8xf32>
    %235 = vector.shape_cast %234 : vector<1x1x1x7x8xf32> to vector<7x8xf32>
    %c0_314 = arith.constant 0 : index
    %c1_315 = arith.constant 1 : index
    %c1_316 = arith.constant 1 : index
    %c0_317 = arith.constant 0 : index
    %c0_318 = arith.constant 0 : index
    %236 = vector.load %arg9[%c0_314, %c1_315, %c1_316, %c0_317, %c0_318] : memref<2x2x9x9x8xf32, #tpu.memory_space<vmem>>, vector<1x1x1x7x8xf32>
    %237 = vector.shape_cast %236 : vector<1x1x1x7x8xf32> to vector<7x8xf32>
    %c0_319 = arith.constant 0 : index
    %c0_320 = arith.constant 0 : index
    %c1_321 = arith.constant 1 : index
    %c1_322 = arith.constant 1 : index
    %c0_323 = arith.constant 0 : index
    %238 = vector.load %arg9[%c0_319, %c0_320, %c1_321, %c1_322, %c0_323] : memref<2x2x9x9x8xf32, #tpu.memory_space<vmem>>, vector<1x1x1x7x8xf32>
    %239 = vector.shape_cast %238 : vector<1x1x1x7x8xf32> to vector<7x8xf32>
    %c0_324 = arith.constant 0 : index
    %c1_325 = arith.constant 1 : index
    %c1_326 = arith.constant 1 : index
    %c1_327 = arith.constant 1 : index
    %c0_328 = arith.constant 0 : index
    %240 = vector.load %arg9[%c0_324, %c1_325, %c1_326, %c1_327, %c0_328] : memref<2x2x9x9x8xf32, #tpu.memory_space<vmem>>, vector<1x1x1x7x8xf32>
    %241 = vector.shape_cast %240 : vector<1x1x1x7x8xf32> to vector<7x8xf32>
    %c0_329 = arith.constant 0 : index
    %c0_330 = arith.constant 0 : index
    %c1_331 = arith.constant 1 : index
    %c2_332 = arith.constant 2 : index
    %c0_333 = arith.constant 0 : index
    %242 = vector.load %arg9[%c0_329, %c0_330, %c1_331, %c2_332, %c0_333] : memref<2x2x9x9x8xf32, #tpu.memory_space<vmem>>, vector<1x1x1x7x8xf32>
    %243 = vector.shape_cast %242 : vector<1x1x1x7x8xf32> to vector<7x8xf32>
    %c1_334 = arith.constant 1 : index
    %c0_335 = arith.constant 0 : index
    %c1_336 = arith.constant 1 : index
    %c0_337 = arith.constant 0 : index
    %c0_338 = arith.constant 0 : index
    %244 = vector.load %arg9[%c1_334, %c0_335, %c1_336, %c0_337, %c0_338] : memref<2x2x9x9x8xf32, #tpu.memory_space<vmem>>, vector<1x1x1x7x8xf32>
    %245 = vector.shape_cast %244 : vector<1x1x1x7x8xf32> to vector<7x8xf32>
    %c1_339 = arith.constant 1 : index
    %c1_340 = arith.constant 1 : index
    %c1_341 = arith.constant 1 : index
    %c0_342 = arith.constant 0 : index
    %c0_343 = arith.constant 0 : index
    %246 = vector.load %arg9[%c1_339, %c1_340, %c1_341, %c0_342, %c0_343] : memref<2x2x9x9x8xf32, #tpu.memory_space<vmem>>, vector<1x1x1x7x8xf32>
    %247 = vector.shape_cast %246 : vector<1x1x1x7x8xf32> to vector<7x8xf32>
    %c1_344 = arith.constant 1 : index
    %c0_345 = arith.constant 0 : index
    %c1_346 = arith.constant 1 : index
    %c1_347 = arith.constant 1 : index
    %c0_348 = arith.constant 0 : index
    %248 = vector.load %arg9[%c1_344, %c0_345, %c1_346, %c1_347, %c0_348] : memref<2x2x9x9x8xf32, #tpu.memory_space<vmem>>, vector<1x1x1x7x8xf32>
    %249 = vector.shape_cast %248 : vector<1x1x1x7x8xf32> to vector<7x8xf32>
    %c1_349 = arith.constant 1 : index
    %c1_350 = arith.constant 1 : index
    %c1_351 = arith.constant 1 : index
    %c1_352 = arith.constant 1 : index
    %c0_353 = arith.constant 0 : index
    %250 = vector.load %arg9[%c1_349, %c1_350, %c1_351, %c1_352, %c0_353] : memref<2x2x9x9x8xf32, #tpu.memory_space<vmem>>, vector<1x1x1x7x8xf32>
    %251 = vector.shape_cast %250 : vector<1x1x1x7x8xf32> to vector<7x8xf32>
    %c1_354 = arith.constant 1 : index
    %c0_355 = arith.constant 0 : index
    %c1_356 = arith.constant 1 : index
    %c2_357 = arith.constant 2 : index
    %c0_358 = arith.constant 0 : index
    %252 = vector.load %arg9[%c1_354, %c0_355, %c1_356, %c2_357, %c0_358] : memref<2x2x9x9x8xf32, #tpu.memory_space<vmem>>, vector<1x1x1x7x8xf32>
    %253 = vector.shape_cast %252 : vector<1x1x1x7x8xf32> to vector<7x8xf32>
    %c0_359 = arith.constant 0 : index
    %c0_360 = arith.constant 0 : index
    %c2_361 = arith.constant 2 : index
    %c0_362 = arith.constant 0 : index
    %c0_363 = arith.constant 0 : index
    %254 = vector.load %arg9[%c0_359, %c0_360, %c2_361, %c0_362, %c0_363] : memref<2x2x9x9x8xf32, #tpu.memory_space<vmem>>, vector<1x1x1x7x8xf32>
    %255 = vector.shape_cast %254 : vector<1x1x1x7x8xf32> to vector<7x8xf32>
    %c0_364 = arith.constant 0 : index
    %c1_365 = arith.constant 1 : index
    %c2_366 = arith.constant 2 : index
    %c0_367 = arith.constant 0 : index
    %c0_368 = arith.constant 0 : index
    %256 = vector.load %arg9[%c0_364, %c1_365, %c2_366, %c0_367, %c0_368] : memref<2x2x9x9x8xf32, #tpu.memory_space<vmem>>, vector<1x1x1x7x8xf32>
    %257 = vector.shape_cast %256 : vector<1x1x1x7x8xf32> to vector<7x8xf32>
    %c0_369 = arith.constant 0 : index
    %c0_370 = arith.constant 0 : index
    %c2_371 = arith.constant 2 : index
    %c1_372 = arith.constant 1 : index
    %c0_373 = arith.constant 0 : index
    %258 = vector.load %arg9[%c0_369, %c0_370, %c2_371, %c1_372, %c0_373] : memref<2x2x9x9x8xf32, #tpu.memory_space<vmem>>, vector<1x1x1x7x8xf32>
    %259 = vector.shape_cast %258 : vector<1x1x1x7x8xf32> to vector<7x8xf32>
    %c0_374 = arith.constant 0 : index
    %c1_375 = arith.constant 1 : index
    %c2_376 = arith.constant 2 : index
    %c1_377 = arith.constant 1 : index
    %c0_378 = arith.constant 0 : index
    %260 = vector.load %arg9[%c0_374, %c1_375, %c2_376, %c1_377, %c0_378] : memref<2x2x9x9x8xf32, #tpu.memory_space<vmem>>, vector<1x1x1x7x8xf32>
    %261 = vector.shape_cast %260 : vector<1x1x1x7x8xf32> to vector<7x8xf32>
    %c0_379 = arith.constant 0 : index
    %c0_380 = arith.constant 0 : index
    %c2_381 = arith.constant 2 : index
    %c2_382 = arith.constant 2 : index
    %c0_383 = arith.constant 0 : index
    %262 = vector.load %arg9[%c0_379, %c0_380, %c2_381, %c2_382, %c0_383] : memref<2x2x9x9x8xf32, #tpu.memory_space<vmem>>, vector<1x1x1x7x8xf32>
    %263 = vector.shape_cast %262 : vector<1x1x1x7x8xf32> to vector<7x8xf32>
    %c1_384 = arith.constant 1 : index
    %c0_385 = arith.constant 0 : index
    %c2_386 = arith.constant 2 : index
    %c0_387 = arith.constant 0 : index
    %c0_388 = arith.constant 0 : index
    %264 = vector.load %arg9[%c1_384, %c0_385, %c2_386, %c0_387, %c0_388] : memref<2x2x9x9x8xf32, #tpu.memory_space<vmem>>, vector<1x1x1x7x8xf32>
    %265 = vector.shape_cast %264 : vector<1x1x1x7x8xf32> to vector<7x8xf32>
    %c1_389 = arith.constant 1 : index
    %c1_390 = arith.constant 1 : index
    %c2_391 = arith.constant 2 : index
    %c0_392 = arith.constant 0 : index
    %c0_393 = arith.constant 0 : index
    %266 = vector.load %arg9[%c1_389, %c1_390, %c2_391, %c0_392, %c0_393] : memref<2x2x9x9x8xf32, #tpu.memory_space<vmem>>, vector<1x1x1x7x8xf32>
    %267 = vector.shape_cast %266 : vector<1x1x1x7x8xf32> to vector<7x8xf32>
    %c1_394 = arith.constant 1 : index
    %c0_395 = arith.constant 0 : index
    %c2_396 = arith.constant 2 : index
    %c1_397 = arith.constant 1 : index
    %c0_398 = arith.constant 0 : index
    %268 = vector.load %arg9[%c1_394, %c0_395, %c2_396, %c1_397, %c0_398] : memref<2x2x9x9x8xf32, #tpu.memory_space<vmem>>, vector<1x1x1x7x8xf32>
    %269 = vector.shape_cast %268 : vector<1x1x1x7x8xf32> to vector<7x8xf32>
    %c1_399 = arith.constant 1 : index
    %c1_400 = arith.constant 1 : index
    %c2_401 = arith.constant 2 : index
    %c1_402 = arith.constant 1 : index
    %c0_403 = arith.constant 0 : index
    %270 = vector.load %arg9[%c1_399, %c1_400, %c2_401, %c1_402, %c0_403] : memref<2x2x9x9x8xf32, #tpu.memory_space<vmem>>, vector<1x1x1x7x8xf32>
    %271 = vector.shape_cast %270 : vector<1x1x1x7x8xf32> to vector<7x8xf32>
    %c1_404 = arith.constant 1 : index
    %c0_405 = arith.constant 0 : index
    %c2_406 = arith.constant 2 : index
    %c2_407 = arith.constant 2 : index
    %c0_408 = arith.constant 0 : index
    %272 = vector.load %arg9[%c1_404, %c0_405, %c2_406, %c2_407, %c0_408] : memref<2x2x9x9x8xf32, #tpu.memory_space<vmem>>, vector<1x1x1x7x8xf32>
    %273 = vector.shape_cast %272 : vector<1x1x1x7x8xf32> to vector<7x8xf32>
    %c0_409 = arith.constant 0 : index
    %c0_410 = arith.constant 0 : index
    %c3_411 = arith.constant 3 : index
    %c0_412 = arith.constant 0 : index
    %c0_413 = arith.constant 0 : index
    %274 = vector.load %arg9[%c0_409, %c0_410, %c3_411, %c0_412, %c0_413] : memref<2x2x9x9x8xf32, #tpu.memory_space<vmem>>, vector<1x1x1x7x8xf32>
    %275 = vector.shape_cast %274 : vector<1x1x1x7x8xf32> to vector<7x8xf32>
    %c0_414 = arith.constant 0 : index
    %c1_415 = arith.constant 1 : index
    %c3_416 = arith.constant 3 : index
    %c0_417 = arith.constant 0 : index
    %c0_418 = arith.constant 0 : index
    %276 = vector.load %arg9[%c0_414, %c1_415, %c3_416, %c0_417, %c0_418] : memref<2x2x9x9x8xf32, #tpu.memory_space<vmem>>, vector<1x1x1x7x8xf32>
    %277 = vector.shape_cast %276 : vector<1x1x1x7x8xf32> to vector<7x8xf32>
    %c0_419 = arith.constant 0 : index
    %c0_420 = arith.constant 0 : index
    %c3_421 = arith.constant 3 : index
    %c1_422 = arith.constant 1 : index
    %c0_423 = arith.constant 0 : index
    %278 = vector.load %arg9[%c0_419, %c0_420, %c3_421, %c1_422, %c0_423] : memref<2x2x9x9x8xf32, #tpu.memory_space<vmem>>, vector<1x1x1x7x8xf32>
    %279 = vector.shape_cast %278 : vector<1x1x1x7x8xf32> to vector<7x8xf32>
    %c0_424 = arith.constant 0 : index
    %c1_425 = arith.constant 1 : index
    %c3_426 = arith.constant 3 : index
    %c1_427 = arith.constant 1 : index
    %c0_428 = arith.constant 0 : index
    %280 = vector.load %arg9[%c0_424, %c1_425, %c3_426, %c1_427, %c0_428] : memref<2x2x9x9x8xf32, #tpu.memory_space<vmem>>, vector<1x1x1x7x8xf32>
    %281 = vector.shape_cast %280 : vector<1x1x1x7x8xf32> to vector<7x8xf32>
    %c0_429 = arith.constant 0 : index
    %c0_430 = arith.constant 0 : index
    %c3_431 = arith.constant 3 : index
    %c2_432 = arith.constant 2 : index
    %c0_433 = arith.constant 0 : index
    %282 = vector.load %arg9[%c0_429, %c0_430, %c3_431, %c2_432, %c0_433] : memref<2x2x9x9x8xf32, #tpu.memory_space<vmem>>, vector<1x1x1x7x8xf32>
    %283 = vector.shape_cast %282 : vector<1x1x1x7x8xf32> to vector<7x8xf32>
    %284 = tpu.concatenate %235, %237, %239, %241, %243, %245, %247, %249, %251, %253, %255, %257, %259, %261, %263, %265 in 1 : vector<7x8xf32>, vector<7x8xf32>, vector<7x8xf32>, vector<7x8xf32>, vector<7x8xf32>, vector<7x8xf32>, vector<7x8xf32>, vector<7x8xf32>, vector<7x8xf32>, vector<7x8xf32>, vector<7x8xf32>, vector<7x8xf32>, vector<7x8xf32>, vector<7x8xf32>, vector<7x8xf32>, vector<7x8xf32> -> vector<7x128xf32>
    %285 = tpu.concatenate %267, %269, %271, %273, %275, %277, %279, %281, %283 in 1 : vector<7x8xf32>, vector<7x8xf32>, vector<7x8xf32>, vector<7x8xf32>, vector<7x8xf32>, vector<7x8xf32>, vector<7x8xf32>, vector<7x8xf32>, vector<7x8xf32> -> vector<7x72xf32>
    %286 = tpu.concatenate %284, %285 in 1 : vector<7x128xf32>, vector<7x72xf32> -> vector<7x200xf32>
    %287 = arith.truncf %286 : vector<7x200xf32> to vector<7x200xbf16>
    %cst_434 = arith.constant dense<0.000000e+00> : vector<7x16xf32>
    %288 = tpu.matmul %287, %160, %cst_434 {dimension_numbers = #tpu.dot_dimension_numbers<[1], [0], [0], [1], [0, 0, 1, 1], [], []>} : vector<7x200xbf16>, vector<200x16xbf16>, vector<7x16xf32> -> vector<7x16xf32>
    %289 = vector.broadcast %161 : vector<1x16xf32> to vector<7x16xf32>
    %290 = arith.addf %288, %289 : vector<7x16xf32>
    %cst_435 = arith.constant 0.000000e+00 : f32
    %291 = vector.broadcast %cst_435 : f32 to vector<7x16xf32>
    %292 = arith.cmpf oge, %290, %291 : vector<7x16xf32>
    %cst_436 = arith.constant 3.000000e-01 : f32
    %293 = vector.broadcast %cst_436 : f32 to vector<7x16xf32>
    %294 = arith.mulf %293, %290 : vector<7x16xf32>
    %295 = arith.select %292, %290, %294 : vector<7x16xi1>, vector<7x16xf32>
    %296 = vector.extract_strided_slice %162 {offsets = [7, 0], sizes = [7, 16], strides = [1, 1]} : vector<49x16xf32> to vector<7x16xf32>
    %297 = arith.mulf %295, %296 : vector<7x16xf32>
    %298 = vector.shape_cast %297 : vector<7x16xf32> to vector<1x7x16xf32>
    %cst_437 = arith.constant dense<0.000000e+00> : vector<1xf32>
    %299 = vector.multi_reduction <add>, %298, %cst_437 [1, 2] : vector<1x7x16xf32> to vector<1xf32>
    %300 = vector.shape_cast %299 : vector<1xf32> to vector<1x1x1xf32>
    %301 = vector.extract %300[0, 0, 0] : f32 from vector<1x1x1xf32>
    %302 = vector.broadcast %301 : f32 to vector<1x1xf32>
    %303 = arith.addf %233, %302 : vector<1x1xf32>
    %c0_438 = arith.constant 0 : index
    %c0_439 = arith.constant 0 : index
    %c2_440 = arith.constant 2 : index
    %c0_441 = arith.constant 0 : index
    %c0_442 = arith.constant 0 : index
    %304 = vector.load %arg9[%c0_438, %c0_439, %c2_440, %c0_441, %c0_442] : memref<2x2x9x9x8xf32, #tpu.memory_space<vmem>>, vector<1x1x1x7x8xf32>
    %305 = vector.shape_cast %304 : vector<1x1x1x7x8xf32> to vector<7x8xf32>
    %c0_443 = arith.constant 0 : index
    %c1_444 = arith.constant 1 : index
    %c2_445 = arith.constant 2 : index
    %c0_446 = arith.constant 0 : index
    %c0_447 = arith.constant 0 : index
    %306 = vector.load %arg9[%c0_443, %c1_444, %c2_445, %c0_446, %c0_447] : memref<2x2x9x9x8xf32, #tpu.memory_space<vmem>>, vector<1x1x1x7x8xf32>
    %307 = vector.shape_cast %306 : vector<1x1x1x7x8xf32> to vector<7x8xf32>
    %c0_448 = arith.constant 0 : index
    %c0_449 = arith.constant 0 : index
    %c2_450 = arith.constant 2 : index
    %c1_451 = arith.constant 1 : index
    %c0_452 = arith.constant 0 : index
    %308 = vector.load %arg9[%c0_448, %c0_449, %c2_450, %c1_451, %c0_452] : memref<2x2x9x9x8xf32, #tpu.memory_space<vmem>>, vector<1x1x1x7x8xf32>
    %309 = vector.shape_cast %308 : vector<1x1x1x7x8xf32> to vector<7x8xf32>
    %c0_453 = arith.constant 0 : index
    %c1_454 = arith.constant 1 : index
    %c2_455 = arith.constant 2 : index
    %c1_456 = arith.constant 1 : index
    %c0_457 = arith.constant 0 : index
    %310 = vector.load %arg9[%c0_453, %c1_454, %c2_455, %c1_456, %c0_457] : memref<2x2x9x9x8xf32, #tpu.memory_space<vmem>>, vector<1x1x1x7x8xf32>
    %311 = vector.shape_cast %310 : vector<1x1x1x7x8xf32> to vector<7x8xf32>
    %c0_458 = arith.constant 0 : index
    %c0_459 = arith.constant 0 : index
    %c2_460 = arith.constant 2 : index
    %c2_461 = arith.constant 2 : index
    %c0_462 = arith.constant 0 : index
    %312 = vector.load %arg9[%c0_458, %c0_459, %c2_460, %c2_461, %c0_462] : memref<2x2x9x9x8xf32, #tpu.memory_space<vmem>>, vector<1x1x1x7x8xf32>
    %313 = vector.shape_cast %312 : vector<1x1x1x7x8xf32> to vector<7x8xf32>
    %c1_463 = arith.constant 1 : index
    %c0_464 = arith.constant 0 : index
    %c2_465 = arith.constant 2 : index
    %c0_466 = arith.constant 0 : index
    %c0_467 = arith.constant 0 : index
    %314 = vector.load %arg9[%c1_463, %c0_464, %c2_465, %c0_466, %c0_467] : memref<2x2x9x9x8xf32, #tpu.memory_space<vmem>>, vector<1x1x1x7x8xf32>
    %315 = vector.shape_cast %314 : vector<1x1x1x7x8xf32> to vector<7x8xf32>
    %c1_468 = arith.constant 1 : index
    %c1_469 = arith.constant 1 : index
    %c2_470 = arith.constant 2 : index
    %c0_471 = arith.constant 0 : index
    %c0_472 = arith.constant 0 : index
    %316 = vector.load %arg9[%c1_468, %c1_469, %c2_470, %c0_471, %c0_472] : memref<2x2x9x9x8xf32, #tpu.memory_space<vmem>>, vector<1x1x1x7x8xf32>
    %317 = vector.shape_cast %316 : vector<1x1x1x7x8xf32> to vector<7x8xf32>
    %c1_473 = arith.constant 1 : index
    %c0_474 = arith.constant 0 : index
    %c2_475 = arith.constant 2 : index
    %c1_476 = arith.constant 1 : index
    %c0_477 = arith.constant 0 : index
    %318 = vector.load %arg9[%c1_473, %c0_474, %c2_475, %c1_476, %c0_477] : memref<2x2x9x9x8xf32, #tpu.memory_space<vmem>>, vector<1x1x1x7x8xf32>
    %319 = vector.shape_cast %318 : vector<1x1x1x7x8xf32> to vector<7x8xf32>
    %c1_478 = arith.constant 1 : index
    %c1_479 = arith.constant 1 : index
    %c2_480 = arith.constant 2 : index
    %c1_481 = arith.constant 1 : index
    %c0_482 = arith.constant 0 : index
    %320 = vector.load %arg9[%c1_478, %c1_479, %c2_480, %c1_481, %c0_482] : memref<2x2x9x9x8xf32, #tpu.memory_space<vmem>>, vector<1x1x1x7x8xf32>
    %321 = vector.shape_cast %320 : vector<1x1x1x7x8xf32> to vector<7x8xf32>
    %c1_483 = arith.constant 1 : index
    %c0_484 = arith.constant 0 : index
    %c2_485 = arith.constant 2 : index
    %c2_486 = arith.constant 2 : index
    %c0_487 = arith.constant 0 : index
    %322 = vector.load %arg9[%c1_483, %c0_484, %c2_485, %c2_486, %c0_487] : memref<2x2x9x9x8xf32, #tpu.memory_space<vmem>>, vector<1x1x1x7x8xf32>
    %323 = vector.shape_cast %322 : vector<1x1x1x7x8xf32> to vector<7x8xf32>
    %c0_488 = arith.constant 0 : index
    %c0_489 = arith.constant 0 : index
    %c3_490 = arith.constant 3 : index
    %c0_491 = arith.constant 0 : index
    %c0_492 = arith.constant 0 : index
    %324 = vector.load %arg9[%c0_488, %c0_489, %c3_490, %c0_491, %c0_492] : memref<2x2x9x9x8xf32, #tpu.memory_space<vmem>>, vector<1x1x1x7x8xf32>
    %325 = vector.shape_cast %324 : vector<1x1x1x7x8xf32> to vector<7x8xf32>
    %c0_493 = arith.constant 0 : index
    %c1_494 = arith.constant 1 : index
    %c3_495 = arith.constant 3 : index
    %c0_496 = arith.constant 0 : index
    %c0_497 = arith.constant 0 : index
    %326 = vector.load %arg9[%c0_493, %c1_494, %c3_495, %c0_496, %c0_497] : memref<2x2x9x9x8xf32, #tpu.memory_space<vmem>>, vector<1x1x1x7x8xf32>
    %327 = vector.shape_cast %326 : vector<1x1x1x7x8xf32> to vector<7x8xf32>
    %c0_498 = arith.constant 0 : index
    %c0_499 = arith.constant 0 : index
    %c3_500 = arith.constant 3 : index
    %c1_501 = arith.constant 1 : index
    %c0_502 = arith.constant 0 : index
    %328 = vector.load %arg9[%c0_498, %c0_499, %c3_500, %c1_501, %c0_502] : memref<2x2x9x9x8xf32, #tpu.memory_space<vmem>>, vector<1x1x1x7x8xf32>
    %329 = vector.shape_cast %328 : vector<1x1x1x7x8xf32> to vector<7x8xf32>
    %c0_503 = arith.constant 0 : index
    %c1_504 = arith.constant 1 : index
    %c3_505 = arith.constant 3 : index
    %c1_506 = arith.constant 1 : index
    %c0_507 = arith.constant 0 : index
    %330 = vector.load %arg9[%c0_503, %c1_504, %c3_505, %c1_506, %c0_507] : memref<2x2x9x9x8xf32, #tpu.memory_space<vmem>>, vector<1x1x1x7x8xf32>
    %331 = vector.shape_cast %330 : vector<1x1x1x7x8xf32> to vector<7x8xf32>
    %c0_508 = arith.constant 0 : index
    %c0_509 = arith.constant 0 : index
    %c3_510 = arith.constant 3 : index
    %c2_511 = arith.constant 2 : index
    %c0_512 = arith.constant 0 : index
    %332 = vector.load %arg9[%c0_508, %c0_509, %c3_510, %c2_511, %c0_512] : memref<2x2x9x9x8xf32, #tpu.memory_space<vmem>>, vector<1x1x1x7x8xf32>
    %333 = vector.shape_cast %332 : vector<1x1x1x7x8xf32> to vector<7x8xf32>
    %c1_513 = arith.constant 1 : index
    %c0_514 = arith.constant 0 : index
    %c3_515 = arith.constant 3 : index
    %c0_516 = arith.constant 0 : index
    %c0_517 = arith.constant 0 : index
    %334 = vector.load %arg9[%c1_513, %c0_514, %c3_515, %c0_516, %c0_517] : memref<2x2x9x9x8xf32, #tpu.memory_space<vmem>>, vector<1x1x1x7x8xf32>
    %335 = vector.shape_cast %334 : vector<1x1x1x7x8xf32> to vector<7x8xf32>
    %c1_518 = arith.constant 1 : index
    %c1_519 = arith.constant 1 : index
    %c3_520 = arith.constant 3 : index
    %c0_521 = arith.constant 0 : index
    %c0_522 = arith.constant 0 : index
    %336 = vector.load %arg9[%c1_518, %c1_519, %c3_520, %c0_521, %c0_522] : memref<2x2x9x9x8xf32, #tpu.memory_space<vmem>>, vector<1x1x1x7x8xf32>
    %337 = vector.shape_cast %336 : vector<1x1x1x7x8xf32> to vector<7x8xf32>
    %c1_523 = arith.constant 1 : index
    %c0_524 = arith.constant 0 : index
    %c3_525 = arith.constant 3 : index
    %c1_526 = arith.constant 1 : index
    %c0_527 = arith.constant 0 : index
    %338 = vector.load %arg9[%c1_523, %c0_524, %c3_525, %c1_526, %c0_527] : memref<2x2x9x9x8xf32, #tpu.memory_space<vmem>>, vector<1x1x1x7x8xf32>
    %339 = vector.shape_cast %338 : vector<1x1x1x7x8xf32> to vector<7x8xf32>
    %c1_528 = arith.constant 1 : index
    %c1_529 = arith.constant 1 : index
    %c3_530 = arith.constant 3 : index
    %c1_531 = arith.constant 1 : index
    %c0_532 = arith.constant 0 : index
    %340 = vector.load %arg9[%c1_528, %c1_529, %c3_530, %c1_531, %c0_532] : memref<2x2x9x9x8xf32, #tpu.memory_space<vmem>>, vector<1x1x1x7x8xf32>
    %341 = vector.shape_cast %340 : vector<1x1x1x7x8xf32> to vector<7x8xf32>
    %c1_533 = arith.constant 1 : index
    %c0_534 = arith.constant 0 : index
    %c3_535 = arith.constant 3 : index
    %c2_536 = arith.constant 2 : index
    %c0_537 = arith.constant 0 : index
    %342 = vector.load %arg9[%c1_533, %c0_534, %c3_535, %c2_536, %c0_537] : memref<2x2x9x9x8xf32, #tpu.memory_space<vmem>>, vector<1x1x1x7x8xf32>
    %343 = vector.shape_cast %342 : vector<1x1x1x7x8xf32> to vector<7x8xf32>
    %c0_538 = arith.constant 0 : index
    %c0_539 = arith.constant 0 : index
    %c4_540 = arith.constant 4 : index
    %c0_541 = arith.constant 0 : index
    %c0_542 = arith.constant 0 : index
    %344 = vector.load %arg9[%c0_538, %c0_539, %c4_540, %c0_541, %c0_542] : memref<2x2x9x9x8xf32, #tpu.memory_space<vmem>>, vector<1x1x1x7x8xf32>
    %345 = vector.shape_cast %344 : vector<1x1x1x7x8xf32> to vector<7x8xf32>
    %c0_543 = arith.constant 0 : index
    %c1_544 = arith.constant 1 : index
    %c4_545 = arith.constant 4 : index
    %c0_546 = arith.constant 0 : index
    %c0_547 = arith.constant 0 : index
    %346 = vector.load %arg9[%c0_543, %c1_544, %c4_545, %c0_546, %c0_547] : memref<2x2x9x9x8xf32, #tpu.memory_space<vmem>>, vector<1x1x1x7x8xf32>
    %347 = vector.shape_cast %346 : vector<1x1x1x7x8xf32> to vector<7x8xf32>
    %c0_548 = arith.constant 0 : index
    %c0_549 = arith.constant 0 : index
    %c4_550 = arith.constant 4 : index
    %c1_551 = arith.constant 1 : index
    %c0_552 = arith.constant 0 : index
    %348 = vector.load %arg9[%c0_548, %c0_549, %c4_550, %c1_551, %c0_552] : memref<2x2x9x9x8xf32, #tpu.memory_space<vmem>>, vector<1x1x1x7x8xf32>
    %349 = vector.shape_cast %348 : vector<1x1x1x7x8xf32> to vector<7x8xf32>
    %c0_553 = arith.constant 0 : index
    %c1_554 = arith.constant 1 : index
    %c4_555 = arith.constant 4 : index
    %c1_556 = arith.constant 1 : index
    %c0_557 = arith.constant 0 : index
    %350 = vector.load %arg9[%c0_553, %c1_554, %c4_555, %c1_556, %c0_557] : memref<2x2x9x9x8xf32, #tpu.memory_space<vmem>>, vector<1x1x1x7x8xf32>
    %351 = vector.shape_cast %350 : vector<1x1x1x7x8xf32> to vector<7x8xf32>
    %c0_558 = arith.constant 0 : index
    %c0_559 = arith.constant 0 : index
    %c4_560 = arith.constant 4 : index
    %c2_561 = arith.constant 2 : index
    %c0_562 = arith.constant 0 : index
    %352 = vector.load %arg9[%c0_558, %c0_559, %c4_560, %c2_561, %c0_562] : memref<2x2x9x9x8xf32, #tpu.memory_space<vmem>>, vector<1x1x1x7x8xf32>
    %353 = vector.shape_cast %352 : vector<1x1x1x7x8xf32> to vector<7x8xf32>
    %354 = tpu.concatenate %305, %307, %309, %311, %313, %315, %317, %319, %321, %323, %325, %327, %329, %331, %333, %335 in 1 : vector<7x8xf32>, vector<7x8xf32>, vector<7x8xf32>, vector<7x8xf32>, vector<7x8xf32>, vector<7x8xf32>, vector<7x8xf32>, vector<7x8xf32>, vector<7x8xf32>, vector<7x8xf32>, vector<7x8xf32>, vector<7x8xf32>, vector<7x8xf32>, vector<7x8xf32>, vector<7x8xf32>, vector<7x8xf32> -> vector<7x128xf32>
    %355 = tpu.concatenate %337, %339, %341, %343, %345, %347, %349, %351, %353 in 1 : vector<7x8xf32>, vector<7x8xf32>, vector<7x8xf32>, vector<7x8xf32>, vector<7x8xf32>, vector<7x8xf32>, vector<7x8xf32>, vector<7x8xf32>, vector<7x8xf32> -> vector<7x72xf32>
    %356 = tpu.concatenate %354, %355 in 1 : vector<7x128xf32>, vector<7x72xf32> -> vector<7x200xf32>
    %357 = arith.truncf %356 : vector<7x200xf32> to vector<7x200xbf16>
    %cst_563 = arith.constant dense<0.000000e+00> : vector<7x16xf32>
    %358 = tpu.matmul %357, %160, %cst_563 {dimension_numbers = #tpu.dot_dimension_numbers<[1], [0], [0], [1], [0, 0, 1, 1], [], []>} : vector<7x200xbf16>, vector<200x16xbf16>, vector<7x16xf32> -> vector<7x16xf32>
    %359 = vector.broadcast %161 : vector<1x16xf32> to vector<7x16xf32>
    %360 = arith.addf %358, %359 : vector<7x16xf32>
    %cst_564 = arith.constant 0.000000e+00 : f32
    %361 = vector.broadcast %cst_564 : f32 to vector<7x16xf32>
    %362 = arith.cmpf oge, %360, %361 : vector<7x16xf32>
    %cst_565 = arith.constant 3.000000e-01 : f32
    %363 = vector.broadcast %cst_565 : f32 to vector<7x16xf32>
    %364 = arith.mulf %363, %360 : vector<7x16xf32>
    %365 = arith.select %362, %360, %364 : vector<7x16xi1>, vector<7x16xf32>
    %366 = vector.extract_strided_slice %162 {offsets = [14, 0], sizes = [7, 16], strides = [1, 1]} : vector<49x16xf32> to vector<7x16xf32>
    %367 = arith.mulf %365, %366 : vector<7x16xf32>
    %368 = vector.shape_cast %367 : vector<7x16xf32> to vector<1x7x16xf32>
    %cst_566 = arith.constant dense<0.000000e+00> : vector<1xf32>
    %369 = vector.multi_reduction <add>, %368, %cst_566 [1, 2] : vector<1x7x16xf32> to vector<1xf32>
    %370 = vector.shape_cast %369 : vector<1xf32> to vector<1x1x1xf32>
    %371 = vector.extract %370[0, 0, 0] : f32 from vector<1x1x1xf32>
    %372 = vector.broadcast %371 : f32 to vector<1x1xf32>
    %373 = arith.addf %303, %372 : vector<1x1xf32>
    %c0_567 = arith.constant 0 : index
    %c0_568 = arith.constant 0 : index
    %c3_569 = arith.constant 3 : index
    %c0_570 = arith.constant 0 : index
    %c0_571 = arith.constant 0 : index
    %374 = vector.load %arg9[%c0_567, %c0_568, %c3_569, %c0_570, %c0_571] : memref<2x2x9x9x8xf32, #tpu.memory_space<vmem>>, vector<1x1x1x7x8xf32>
    %375 = vector.shape_cast %374 : vector<1x1x1x7x8xf32> to vector<7x8xf32>
    %c0_572 = arith.constant 0 : index
    %c1_573 = arith.constant 1 : index
    %c3_574 = arith.constant 3 : index
    %c0_575 = arith.constant 0 : index
    %c0_576 = arith.constant 0 : index
    %376 = vector.load %arg9[%c0_572, %c1_573, %c3_574, %c0_575, %c0_576] : memref<2x2x9x9x8xf32, #tpu.memory_space<vmem>>, vector<1x1x1x7x8xf32>
    %377 = vector.shape_cast %376 : vector<1x1x1x7x8xf32> to vector<7x8xf32>
    %c0_577 = arith.constant 0 : index
    %c0_578 = arith.constant 0 : index
    %c3_579 = arith.constant 3 : index
    %c1_580 = arith.constant 1 : index
    %c0_581 = arith.constant 0 : index
    %378 = vector.load %arg9[%c0_577, %c0_578, %c3_579, %c1_580, %c0_581] : memref<2x2x9x9x8xf32, #tpu.memory_space<vmem>>, vector<1x1x1x7x8xf32>
    %379 = vector.shape_cast %378 : vector<1x1x1x7x8xf32> to vector<7x8xf32>
    %c0_582 = arith.constant 0 : index
    %c1_583 = arith.constant 1 : index
    %c3_584 = arith.constant 3 : index
    %c1_585 = arith.constant 1 : index
    %c0_586 = arith.constant 0 : index
    %380 = vector.load %arg9[%c0_582, %c1_583, %c3_584, %c1_585, %c0_586] : memref<2x2x9x9x8xf32, #tpu.memory_space<vmem>>, vector<1x1x1x7x8xf32>
    %381 = vector.shape_cast %380 : vector<1x1x1x7x8xf32> to vector<7x8xf32>
    %c0_587 = arith.constant 0 : index
    %c0_588 = arith.constant 0 : index
    %c3_589 = arith.constant 3 : index
    %c2_590 = arith.constant 2 : index
    %c0_591 = arith.constant 0 : index
    %382 = vector.load %arg9[%c0_587, %c0_588, %c3_589, %c2_590, %c0_591] : memref<2x2x9x9x8xf32, #tpu.memory_space<vmem>>, vector<1x1x1x7x8xf32>
    %383 = vector.shape_cast %382 : vector<1x1x1x7x8xf32> to vector<7x8xf32>
    %c1_592 = arith.constant 1 : index
    %c0_593 = arith.constant 0 : index
    %c3_594 = arith.constant 3 : index
    %c0_595 = arith.constant 0 : index
    %c0_596 = arith.constant 0 : index
    %384 = vector.load %arg9[%c1_592, %c0_593, %c3_594, %c0_595, %c0_596] : memref<2x2x9x9x8xf32, #tpu.memory_space<vmem>>, vector<1x1x1x7x8xf32>
    %385 = vector.shape_cast %384 : vector<1x1x1x7x8xf32> to vector<7x8xf32>
    %c1_597 = arith.constant 1 : index
    %c1_598 = arith.constant 1 : index
    %c3_599 = arith.constant 3 : index
    %c0_600 = arith.constant 0 : index
    %c0_601 = arith.constant 0 : index
    %386 = vector.load %arg9[%c1_597, %c1_598, %c3_599, %c0_600, %c0_601] : memref<2x2x9x9x8xf32, #tpu.memory_space<vmem>>, vector<1x1x1x7x8xf32>
    %387 = vector.shape_cast %386 : vector<1x1x1x7x8xf32> to vector<7x8xf32>
    %c1_602 = arith.constant 1 : index
    %c0_603 = arith.constant 0 : index
    %c3_604 = arith.constant 3 : index
    %c1_605 = arith.constant 1 : index
    %c0_606 = arith.constant 0 : index
    %388 = vector.load %arg9[%c1_602, %c0_603, %c3_604, %c1_605, %c0_606] : memref<2x2x9x9x8xf32, #tpu.memory_space<vmem>>, vector<1x1x1x7x8xf32>
    %389 = vector.shape_cast %388 : vector<1x1x1x7x8xf32> to vector<7x8xf32>
    %c1_607 = arith.constant 1 : index
    %c1_608 = arith.constant 1 : index
    %c3_609 = arith.constant 3 : index
    %c1_610 = arith.constant 1 : index
    %c0_611 = arith.constant 0 : index
    %390 = vector.load %arg9[%c1_607, %c1_608, %c3_609, %c1_610, %c0_611] : memref<2x2x9x9x8xf32, #tpu.memory_space<vmem>>, vector<1x1x1x7x8xf32>
    %391 = vector.shape_cast %390 : vector<1x1x1x7x8xf32> to vector<7x8xf32>
    %c1_612 = arith.constant 1 : index
    %c0_613 = arith.constant 0 : index
    %c3_614 = arith.constant 3 : index
    %c2_615 = arith.constant 2 : index
    %c0_616 = arith.constant 0 : index
    %392 = vector.load %arg9[%c1_612, %c0_613, %c3_614, %c2_615, %c0_616] : memref<2x2x9x9x8xf32, #tpu.memory_space<vmem>>, vector<1x1x1x7x8xf32>
    %393 = vector.shape_cast %392 : vector<1x1x1x7x8xf32> to vector<7x8xf32>
    %c0_617 = arith.constant 0 : index
    %c0_618 = arith.constant 0 : index
    %c4_619 = arith.constant 4 : index
    %c0_620 = arith.constant 0 : index
    %c0_621 = arith.constant 0 : index
    %394 = vector.load %arg9[%c0_617, %c0_618, %c4_619, %c0_620, %c0_621] : memref<2x2x9x9x8xf32, #tpu.memory_space<vmem>>, vector<1x1x1x7x8xf32>
    %395 = vector.shape_cast %394 : vector<1x1x1x7x8xf32> to vector<7x8xf32>
    %c0_622 = arith.constant 0 : index
    %c1_623 = arith.constant 1 : index
    %c4_624 = arith.constant 4 : index
    %c0_625 = arith.constant 0 : index
    %c0_626 = arith.constant 0 : index
    %396 = vector.load %arg9[%c0_622, %c1_623, %c4_624, %c0_625, %c0_626] : memref<2x2x9x9x8xf32, #tpu.memory_space<vmem>>, vector<1x1x1x7x8xf32>
    %397 = vector.shape_cast %396 : vector<1x1x1x7x8xf32> to vector<7x8xf32>
    %c0_627 = arith.constant 0 : index
    %c0_628 = arith.constant 0 : index
    %c4_629 = arith.constant 4 : index
    %c1_630 = arith.constant 1 : index
    %c0_631 = arith.constant 0 : index
    %398 = vector.load %arg9[%c0_627, %c0_628, %c4_629, %c1_630, %c0_631] : memref<2x2x9x9x8xf32, #tpu.memory_space<vmem>>, vector<1x1x1x7x8xf32>
    %399 = vector.shape_cast %398 : vector<1x1x1x7x8xf32> to vector<7x8xf32>
    %c0_632 = arith.constant 0 : index
    %c1_633 = arith.constant 1 : index
    %c4_634 = arith.constant 4 : index
    %c1_635 = arith.constant 1 : index
    %c0_636 = arith.constant 0 : index
    %400 = vector.load %arg9[%c0_632, %c1_633, %c4_634, %c1_635, %c0_636] : memref<2x2x9x9x8xf32, #tpu.memory_space<vmem>>, vector<1x1x1x7x8xf32>
    %401 = vector.shape_cast %400 : vector<1x1x1x7x8xf32> to vector<7x8xf32>
    %c0_637 = arith.constant 0 : index
    %c0_638 = arith.constant 0 : index
    %c4_639 = arith.constant 4 : index
    %c2_640 = arith.constant 2 : index
    %c0_641 = arith.constant 0 : index
    %402 = vector.load %arg9[%c0_637, %c0_638, %c4_639, %c2_640, %c0_641] : memref<2x2x9x9x8xf32, #tpu.memory_space<vmem>>, vector<1x1x1x7x8xf32>
    %403 = vector.shape_cast %402 : vector<1x1x1x7x8xf32> to vector<7x8xf32>
    %c1_642 = arith.constant 1 : index
    %c0_643 = arith.constant 0 : index
    %c4_644 = arith.constant 4 : index
    %c0_645 = arith.constant 0 : index
    %c0_646 = arith.constant 0 : index
    %404 = vector.load %arg9[%c1_642, %c0_643, %c4_644, %c0_645, %c0_646] : memref<2x2x9x9x8xf32, #tpu.memory_space<vmem>>, vector<1x1x1x7x8xf32>
    %405 = vector.shape_cast %404 : vector<1x1x1x7x8xf32> to vector<7x8xf32>
    %c1_647 = arith.constant 1 : index
    %c1_648 = arith.constant 1 : index
    %c4_649 = arith.constant 4 : index
    %c0_650 = arith.constant 0 : index
    %c0_651 = arith.constant 0 : index
    %406 = vector.load %arg9[%c1_647, %c1_648, %c4_649, %c0_650, %c0_651] : memref<2x2x9x9x8xf32, #tpu.memory_space<vmem>>, vector<1x1x1x7x8xf32>
    %407 = vector.shape_cast %406 : vector<1x1x1x7x8xf32> to vector<7x8xf32>
    %c1_652 = arith.constant 1 : index
    %c0_653 = arith.constant 0 : index
    %c4_654 = arith.constant 4 : index
    %c1_655 = arith.constant 1 : index
    %c0_656 = arith.constant 0 : index
    %408 = vector.load %arg9[%c1_652, %c0_653, %c4_654, %c1_655, %c0_656] : memref<2x2x9x9x8xf32, #tpu.memory_space<vmem>>, vector<1x1x1x7x8xf32>
    %409 = vector.shape_cast %408 : vector<1x1x1x7x8xf32> to vector<7x8xf32>
    %c1_657 = arith.constant 1 : index
    %c1_658 = arith.constant 1 : index
    %c4_659 = arith.constant 4 : index
    %c1_660 = arith.constant 1 : index
    %c0_661 = arith.constant 0 : index
    %410 = vector.load %arg9[%c1_657, %c1_658, %c4_659, %c1_660, %c0_661] : memref<2x2x9x9x8xf32, #tpu.memory_space<vmem>>, vector<1x1x1x7x8xf32>
    %411 = vector.shape_cast %410 : vector<1x1x1x7x8xf32> to vector<7x8xf32>
    %c1_662 = arith.constant 1 : index
    %c0_663 = arith.constant 0 : index
    %c4_664 = arith.constant 4 : index
    %c2_665 = arith.constant 2 : index
    %c0_666 = arith.constant 0 : index
    %412 = vector.load %arg9[%c1_662, %c0_663, %c4_664, %c2_665, %c0_666] : memref<2x2x9x9x8xf32, #tpu.memory_space<vmem>>, vector<1x1x1x7x8xf32>
    %413 = vector.shape_cast %412 : vector<1x1x1x7x8xf32> to vector<7x8xf32>
    %c0_667 = arith.constant 0 : index
    %c0_668 = arith.constant 0 : index
    %c5_669 = arith.constant 5 : index
    %c0_670 = arith.constant 0 : index
    %c0_671 = arith.constant 0 : index
    %414 = vector.load %arg9[%c0_667, %c0_668, %c5_669, %c0_670, %c0_671] : memref<2x2x9x9x8xf32, #tpu.memory_space<vmem>>, vector<1x1x1x7x8xf32>
    %415 = vector.shape_cast %414 : vector<1x1x1x7x8xf32> to vector<7x8xf32>
    %c0_672 = arith.constant 0 : index
    %c1_673 = arith.constant 1 : index
    %c5_674 = arith.constant 5 : index
    %c0_675 = arith.constant 0 : index
    %c0_676 = arith.constant 0 : index
    %416 = vector.load %arg9[%c0_672, %c1_673, %c5_674, %c0_675, %c0_676] : memref<2x2x9x9x8xf32, #tpu.memory_space<vmem>>, vector<1x1x1x7x8xf32>
    %417 = vector.shape_cast %416 : vector<1x1x1x7x8xf32> to vector<7x8xf32>
    %c0_677 = arith.constant 0 : index
    %c0_678 = arith.constant 0 : index
    %c5_679 = arith.constant 5 : index
    %c1_680 = arith.constant 1 : index
    %c0_681 = arith.constant 0 : index
    %418 = vector.load %arg9[%c0_677, %c0_678, %c5_679, %c1_680, %c0_681] : memref<2x2x9x9x8xf32, #tpu.memory_space<vmem>>, vector<1x1x1x7x8xf32>
    %419 = vector.shape_cast %418 : vector<1x1x1x7x8xf32> to vector<7x8xf32>
    %c0_682 = arith.constant 0 : index
    %c1_683 = arith.constant 1 : index
    %c5_684 = arith.constant 5 : index
    %c1_685 = arith.constant 1 : index
    %c0_686 = arith.constant 0 : index
    %420 = vector.load %arg9[%c0_682, %c1_683, %c5_684, %c1_685, %c0_686] : memref<2x2x9x9x8xf32, #tpu.memory_space<vmem>>, vector<1x1x1x7x8xf32>
    %421 = vector.shape_cast %420 : vector<1x1x1x7x8xf32> to vector<7x8xf32>
    %c0_687 = arith.constant 0 : index
    %c0_688 = arith.constant 0 : index
    %c5_689 = arith.constant 5 : index
    %c2_690 = arith.constant 2 : index
    %c0_691 = arith.constant 0 : index
    %422 = vector.load %arg9[%c0_687, %c0_688, %c5_689, %c2_690, %c0_691] : memref<2x2x9x9x8xf32, #tpu.memory_space<vmem>>, vector<1x1x1x7x8xf32>
    %423 = vector.shape_cast %422 : vector<1x1x1x7x8xf32> to vector<7x8xf32>
    %424 = tpu.concatenate %375, %377, %379, %381, %383, %385, %387, %389, %391, %393, %395, %397, %399, %401, %403, %405 in 1 : vector<7x8xf32>, vector<7x8xf32>, vector<7x8xf32>, vector<7x8xf32>, vector<7x8xf32>, vector<7x8xf32>, vector<7x8xf32>, vector<7x8xf32>, vector<7x8xf32>, vector<7x8xf32>, vector<7x8xf32>, vector<7x8xf32>, vector<7x8xf32>, vector<7x8xf32>, vector<7x8xf32>, vector<7x8xf32> -> vector<7x128xf32>
    %425 = tpu.concatenate %407, %409, %411, %413, %415, %417, %419, %421, %423 in 1 : vector<7x8xf32>, vector<7x8xf32>, vector<7x8xf32>, vector<7x8xf32>, vector<7x8xf32>, vector<7x8xf32>, vector<7x8xf32>, vector<7x8xf32>, vector<7x8xf32> -> vector<7x72xf32>
    %426 = tpu.concatenate %424, %425 in 1 : vector<7x128xf32>, vector<7x72xf32> -> vector<7x200xf32>
    %427 = arith.truncf %426 : vector<7x200xf32> to vector<7x200xbf16>
    %cst_692 = arith.constant dense<0.000000e+00> : vector<7x16xf32>
    %428 = tpu.matmul %427, %160, %cst_692 {dimension_numbers = #tpu.dot_dimension_numbers<[1], [0], [0], [1], [0, 0, 1, 1], [], []>} : vector<7x200xbf16>, vector<200x16xbf16>, vector<7x16xf32> -> vector<7x16xf32>
    %429 = vector.broadcast %161 : vector<1x16xf32> to vector<7x16xf32>
    %430 = arith.addf %428, %429 : vector<7x16xf32>
    %cst_693 = arith.constant 0.000000e+00 : f32
    %431 = vector.broadcast %cst_693 : f32 to vector<7x16xf32>
    %432 = arith.cmpf oge, %430, %431 : vector<7x16xf32>
    %cst_694 = arith.constant 3.000000e-01 : f32
    %433 = vector.broadcast %cst_694 : f32 to vector<7x16xf32>
    %434 = arith.mulf %433, %430 : vector<7x16xf32>
    %435 = arith.select %432, %430, %434 : vector<7x16xi1>, vector<7x16xf32>
    %436 = vector.extract_strided_slice %162 {offsets = [21, 0], sizes = [7, 16], strides = [1, 1]} : vector<49x16xf32> to vector<7x16xf32>
    %437 = arith.mulf %435, %436 : vector<7x16xf32>
    %438 = vector.shape_cast %437 : vector<7x16xf32> to vector<1x7x16xf32>
    %cst_695 = arith.constant dense<0.000000e+00> : vector<1xf32>
    %439 = vector.multi_reduction <add>, %438, %cst_695 [1, 2] : vector<1x7x16xf32> to vector<1xf32>
    %440 = vector.shape_cast %439 : vector<1xf32> to vector<1x1x1xf32>
    %441 = vector.extract %440[0, 0, 0] : f32 from vector<1x1x1xf32>
    %442 = vector.broadcast %441 : f32 to vector<1x1xf32>
    %443 = arith.addf %373, %442 : vector<1x1xf32>
    %c0_696 = arith.constant 0 : index
    %c0_697 = arith.constant 0 : index
    %c4_698 = arith.constant 4 : index
    %c0_699 = arith.constant 0 : index
    %c0_700 = arith.constant 0 : index
    %444 = vector.load %arg9[%c0_696, %c0_697, %c4_698, %c0_699, %c0_700] : memref<2x2x9x9x8xf32, #tpu.memory_space<vmem>>, vector<1x1x1x7x8xf32>
    %445 = vector.shape_cast %444 : vector<1x1x1x7x8xf32> to vector<7x8xf32>
    %c0_701 = arith.constant 0 : index
    %c1_702 = arith.constant 1 : index
    %c4_703 = arith.constant 4 : index
    %c0_704 = arith.constant 0 : index
    %c0_705 = arith.constant 0 : index
    %446 = vector.load %arg9[%c0_701, %c1_702, %c4_703, %c0_704, %c0_705] : memref<2x2x9x9x8xf32, #tpu.memory_space<vmem>>, vector<1x1x1x7x8xf32>
    %447 = vector.shape_cast %446 : vector<1x1x1x7x8xf32> to vector<7x8xf32>
    %c0_706 = arith.constant 0 : index
    %c0_707 = arith.constant 0 : index
    %c4_708 = arith.constant 4 : index
    %c1_709 = arith.constant 1 : index
    %c0_710 = arith.constant 0 : index
    %448 = vector.load %arg9[%c0_706, %c0_707, %c4_708, %c1_709, %c0_710] : memref<2x2x9x9x8xf32, #tpu.memory_space<vmem>>, vector<1x1x1x7x8xf32>
    %449 = vector.shape_cast %448 : vector<1x1x1x7x8xf32> to vector<7x8xf32>
    %c0_711 = arith.constant 0 : index
    %c1_712 = arith.constant 1 : index
    %c4_713 = arith.constant 4 : index
    %c1_714 = arith.constant 1 : index
    %c0_715 = arith.constant 0 : index
    %450 = vector.load %arg9[%c0_711, %c1_712, %c4_713, %c1_714, %c0_715] : memref<2x2x9x9x8xf32, #tpu.memory_space<vmem>>, vector<1x1x1x7x8xf32>
    %451 = vector.shape_cast %450 : vector<1x1x1x7x8xf32> to vector<7x8xf32>
    %c0_716 = arith.constant 0 : index
    %c0_717 = arith.constant 0 : index
    %c4_718 = arith.constant 4 : index
    %c2_719 = arith.constant 2 : index
    %c0_720 = arith.constant 0 : index
    %452 = vector.load %arg9[%c0_716, %c0_717, %c4_718, %c2_719, %c0_720] : memref<2x2x9x9x8xf32, #tpu.memory_space<vmem>>, vector<1x1x1x7x8xf32>
    %453 = vector.shape_cast %452 : vector<1x1x1x7x8xf32> to vector<7x8xf32>
    %c1_721 = arith.constant 1 : index
    %c0_722 = arith.constant 0 : index
    %c4_723 = arith.constant 4 : index
    %c0_724 = arith.constant 0 : index
    %c0_725 = arith.constant 0 : index
    %454 = vector.load %arg9[%c1_721, %c0_722, %c4_723, %c0_724, %c0_725] : memref<2x2x9x9x8xf32, #tpu.memory_space<vmem>>, vector<1x1x1x7x8xf32>
    %455 = vector.shape_cast %454 : vector<1x1x1x7x8xf32> to vector<7x8xf32>
    %c1_726 = arith.constant 1 : index
    %c1_727 = arith.constant 1 : index
    %c4_728 = arith.constant 4 : index
    %c0_729 = arith.constant 0 : index
    %c0_730 = arith.constant 0 : index
    %456 = vector.load %arg9[%c1_726, %c1_727, %c4_728, %c0_729, %c0_730] : memref<2x2x9x9x8xf32, #tpu.memory_space<vmem>>, vector<1x1x1x7x8xf32>
    %457 = vector.shape_cast %456 : vector<1x1x1x7x8xf32> to vector<7x8xf32>
    %c1_731 = arith.constant 1 : index
    %c0_732 = arith.constant 0 : index
    %c4_733 = arith.constant 4 : index
    %c1_734 = arith.constant 1 : index
    %c0_735 = arith.constant 0 : index
    %458 = vector.load %arg9[%c1_731, %c0_732, %c4_733, %c1_734, %c0_735] : memref<2x2x9x9x8xf32, #tpu.memory_space<vmem>>, vector<1x1x1x7x8xf32>
    %459 = vector.shape_cast %458 : vector<1x1x1x7x8xf32> to vector<7x8xf32>
    %c1_736 = arith.constant 1 : index
    %c1_737 = arith.constant 1 : index
    %c4_738 = arith.constant 4 : index
    %c1_739 = arith.constant 1 : index
    %c0_740 = arith.constant 0 : index
    %460 = vector.load %arg9[%c1_736, %c1_737, %c4_738, %c1_739, %c0_740] : memref<2x2x9x9x8xf32, #tpu.memory_space<vmem>>, vector<1x1x1x7x8xf32>
    %461 = vector.shape_cast %460 : vector<1x1x1x7x8xf32> to vector<7x8xf32>
    %c1_741 = arith.constant 1 : index
    %c0_742 = arith.constant 0 : index
    %c4_743 = arith.constant 4 : index
    %c2_744 = arith.constant 2 : index
    %c0_745 = arith.constant 0 : index
    %462 = vector.load %arg9[%c1_741, %c0_742, %c4_743, %c2_744, %c0_745] : memref<2x2x9x9x8xf32, #tpu.memory_space<vmem>>, vector<1x1x1x7x8xf32>
    %463 = vector.shape_cast %462 : vector<1x1x1x7x8xf32> to vector<7x8xf32>
    %c0_746 = arith.constant 0 : index
    %c0_747 = arith.constant 0 : index
    %c5_748 = arith.constant 5 : index
    %c0_749 = arith.constant 0 : index
    %c0_750 = arith.constant 0 : index
    %464 = vector.load %arg9[%c0_746, %c0_747, %c5_748, %c0_749, %c0_750] : memref<2x2x9x9x8xf32, #tpu.memory_space<vmem>>, vector<1x1x1x7x8xf32>
    %465 = vector.shape_cast %464 : vector<1x1x1x7x8xf32> to vector<7x8xf32>
    %c0_751 = arith.constant 0 : index
    %c1_752 = arith.constant 1 : index
    %c5_753 = arith.constant 5 : index
    %c0_754 = arith.constant 0 : index
    %c0_755 = arith.constant 0 : index
    %466 = vector.load %arg9[%c0_751, %c1_752, %c5_753, %c0_754, %c0_755] : memref<2x2x9x9x8xf32, #tpu.memory_space<vmem>>, vector<1x1x1x7x8xf32>
    %467 = vector.shape_cast %466 : vector<1x1x1x7x8xf32> to vector<7x8xf32>
    %c0_756 = arith.constant 0 : index
    %c0_757 = arith.constant 0 : index
    %c5_758 = arith.constant 5 : index
    %c1_759 = arith.constant 1 : index
    %c0_760 = arith.constant 0 : index
    %468 = vector.load %arg9[%c0_756, %c0_757, %c5_758, %c1_759, %c0_760] : memref<2x2x9x9x8xf32, #tpu.memory_space<vmem>>, vector<1x1x1x7x8xf32>
    %469 = vector.shape_cast %468 : vector<1x1x1x7x8xf32> to vector<7x8xf32>
    %c0_761 = arith.constant 0 : index
    %c1_762 = arith.constant 1 : index
    %c5_763 = arith.constant 5 : index
    %c1_764 = arith.constant 1 : index
    %c0_765 = arith.constant 0 : index
    %470 = vector.load %arg9[%c0_761, %c1_762, %c5_763, %c1_764, %c0_765] : memref<2x2x9x9x8xf32, #tpu.memory_space<vmem>>, vector<1x1x1x7x8xf32>
    %471 = vector.shape_cast %470 : vector<1x1x1x7x8xf32> to vector<7x8xf32>
    %c0_766 = arith.constant 0 : index
    %c0_767 = arith.constant 0 : index
    %c5_768 = arith.constant 5 : index
    %c2_769 = arith.constant 2 : index
    %c0_770 = arith.constant 0 : index
    %472 = vector.load %arg9[%c0_766, %c0_767, %c5_768, %c2_769, %c0_770] : memref<2x2x9x9x8xf32, #tpu.memory_space<vmem>>, vector<1x1x1x7x8xf32>
    %473 = vector.shape_cast %472 : vector<1x1x1x7x8xf32> to vector<7x8xf32>
    %c1_771 = arith.constant 1 : index
    %c0_772 = arith.constant 0 : index
    %c5_773 = arith.constant 5 : index
    %c0_774 = arith.constant 0 : index
    %c0_775 = arith.constant 0 : index
    %474 = vector.load %arg9[%c1_771, %c0_772, %c5_773, %c0_774, %c0_775] : memref<2x2x9x9x8xf32, #tpu.memory_space<vmem>>, vector<1x1x1x7x8xf32>
    %475 = vector.shape_cast %474 : vector<1x1x1x7x8xf32> to vector<7x8xf32>
    %c1_776 = arith.constant 1 : index
    %c1_777 = arith.constant 1 : index
    %c5_778 = arith.constant 5 : index
    %c0_779 = arith.constant 0 : index
    %c0_780 = arith.constant 0 : index
    %476 = vector.load %arg9[%c1_776, %c1_777, %c5_778, %c0_779, %c0_780] : memref<2x2x9x9x8xf32, #tpu.memory_space<vmem>>, vector<1x1x1x7x8xf32>
    %477 = vector.shape_cast %476 : vector<1x1x1x7x8xf32> to vector<7x8xf32>
    %c1_781 = arith.constant 1 : index
    %c0_782 = arith.constant 0 : index
    %c5_783 = arith.constant 5 : index
    %c1_784 = arith.constant 1 : index
    %c0_785 = arith.constant 0 : index
    %478 = vector.load %arg9[%c1_781, %c0_782, %c5_783, %c1_784, %c0_785] : memref<2x2x9x9x8xf32, #tpu.memory_space<vmem>>, vector<1x1x1x7x8xf32>
    %479 = vector.shape_cast %478 : vector<1x1x1x7x8xf32> to vector<7x8xf32>
    %c1_786 = arith.constant 1 : index
    %c1_787 = arith.constant 1 : index
    %c5_788 = arith.constant 5 : index
    %c1_789 = arith.constant 1 : index
    %c0_790 = arith.constant 0 : index
    %480 = vector.load %arg9[%c1_786, %c1_787, %c5_788, %c1_789, %c0_790] : memref<2x2x9x9x8xf32, #tpu.memory_space<vmem>>, vector<1x1x1x7x8xf32>
    %481 = vector.shape_cast %480 : vector<1x1x1x7x8xf32> to vector<7x8xf32>
    %c1_791 = arith.constant 1 : index
    %c0_792 = arith.constant 0 : index
    %c5_793 = arith.constant 5 : index
    %c2_794 = arith.constant 2 : index
    %c0_795 = arith.constant 0 : index
    %482 = vector.load %arg9[%c1_791, %c0_792, %c5_793, %c2_794, %c0_795] : memref<2x2x9x9x8xf32, #tpu.memory_space<vmem>>, vector<1x1x1x7x8xf32>
    %483 = vector.shape_cast %482 : vector<1x1x1x7x8xf32> to vector<7x8xf32>
    %c0_796 = arith.constant 0 : index
    %c0_797 = arith.constant 0 : index
    %c6_798 = arith.constant 6 : index
    %c0_799 = arith.constant 0 : index
    %c0_800 = arith.constant 0 : index
    %484 = vector.load %arg9[%c0_796, %c0_797, %c6_798, %c0_799, %c0_800] : memref<2x2x9x9x8xf32, #tpu.memory_space<vmem>>, vector<1x1x1x7x8xf32>
    %485 = vector.shape_cast %484 : vector<1x1x1x7x8xf32> to vector<7x8xf32>
    %c0_801 = arith.constant 0 : index
    %c1_802 = arith.constant 1 : index
    %c6_803 = arith.constant 6 : index
    %c0_804 = arith.constant 0 : index
    %c0_805 = arith.constant 0 : index
    %486 = vector.load %arg9[%c0_801, %c1_802, %c6_803, %c0_804, %c0_805] : memref<2x2x9x9x8xf32, #tpu.memory_space<vmem>>, vector<1x1x1x7x8xf32>
    %487 = vector.shape_cast %486 : vector<1x1x1x7x8xf32> to vector<7x8xf32>
    %c0_806 = arith.constant 0 : index
    %c0_807 = arith.constant 0 : index
    %c6_808 = arith.constant 6 : index
    %c1_809 = arith.constant 1 : index
    %c0_810 = arith.constant 0 : index
    %488 = vector.load %arg9[%c0_806, %c0_807, %c6_808, %c1_809, %c0_810] : memref<2x2x9x9x8xf32, #tpu.memory_space<vmem>>, vector<1x1x1x7x8xf32>
    %489 = vector.shape_cast %488 : vector<1x1x1x7x8xf32> to vector<7x8xf32>
    %c0_811 = arith.constant 0 : index
    %c1_812 = arith.constant 1 : index
    %c6_813 = arith.constant 6 : index
    %c1_814 = arith.constant 1 : index
    %c0_815 = arith.constant 0 : index
    %490 = vector.load %arg9[%c0_811, %c1_812, %c6_813, %c1_814, %c0_815] : memref<2x2x9x9x8xf32, #tpu.memory_space<vmem>>, vector<1x1x1x7x8xf32>
    %491 = vector.shape_cast %490 : vector<1x1x1x7x8xf32> to vector<7x8xf32>
    %c0_816 = arith.constant 0 : index
    %c0_817 = arith.constant 0 : index
    %c6_818 = arith.constant 6 : index
    %c2_819 = arith.constant 2 : index
    %c0_820 = arith.constant 0 : index
    %492 = vector.load %arg9[%c0_816, %c0_817, %c6_818, %c2_819, %c0_820] : memref<2x2x9x9x8xf32, #tpu.memory_space<vmem>>, vector<1x1x1x7x8xf32>
    %493 = vector.shape_cast %492 : vector<1x1x1x7x8xf32> to vector<7x8xf32>
    %494 = tpu.concatenate %445, %447, %449, %451, %453, %455, %457, %459, %461, %463, %465, %467, %469, %471, %473, %475 in 1 : vector<7x8xf32>, vector<7x8xf32>, vector<7x8xf32>, vector<7x8xf32>, vector<7x8xf32>, vector<7x8xf32>, vector<7x8xf32>, vector<7x8xf32>, vector<7x8xf32>, vector<7x8xf32>, vector<7x8xf32>, vector<7x8xf32>, vector<7x8xf32>, vector<7x8xf32>, vector<7x8xf32>, vector<7x8xf32> -> vector<7x128xf32>
    %495 = tpu.concatenate %477, %479, %481, %483, %485, %487, %489, %491, %493 in 1 : vector<7x8xf32>, vector<7x8xf32>, vector<7x8xf32>, vector<7x8xf32>, vector<7x8xf32>, vector<7x8xf32>, vector<7x8xf32>, vector<7x8xf32>, vector<7x8xf32> -> vector<7x72xf32>
    %496 = tpu.concatenate %494, %495 in 1 : vector<7x128xf32>, vector<7x72xf32> -> vector<7x200xf32>
    %497 = arith.truncf %496 : vector<7x200xf32> to vector<7x200xbf16>
    %cst_821 = arith.constant dense<0.000000e+00> : vector<7x16xf32>
    %498 = tpu.matmul %497, %160, %cst_821 {dimension_numbers = #tpu.dot_dimension_numbers<[1], [0], [0], [1], [0, 0, 1, 1], [], []>} : vector<7x200xbf16>, vector<200x16xbf16>, vector<7x16xf32> -> vector<7x16xf32>
    %499 = vector.broadcast %161 : vector<1x16xf32> to vector<7x16xf32>
    %500 = arith.addf %498, %499 : vector<7x16xf32>
    %cst_822 = arith.constant 0.000000e+00 : f32
    %501 = vector.broadcast %cst_822 : f32 to vector<7x16xf32>
    %502 = arith.cmpf oge, %500, %501 : vector<7x16xf32>
    %cst_823 = arith.constant 3.000000e-01 : f32
    %503 = vector.broadcast %cst_823 : f32 to vector<7x16xf32>
    %504 = arith.mulf %503, %500 : vector<7x16xf32>
    %505 = arith.select %502, %500, %504 : vector<7x16xi1>, vector<7x16xf32>
    %506 = vector.extract_strided_slice %162 {offsets = [28, 0], sizes = [7, 16], strides = [1, 1]} : vector<49x16xf32> to vector<7x16xf32>
    %507 = arith.mulf %505, %506 : vector<7x16xf32>
    %508 = vector.shape_cast %507 : vector<7x16xf32> to vector<1x7x16xf32>
    %cst_824 = arith.constant dense<0.000000e+00> : vector<1xf32>
    %509 = vector.multi_reduction <add>, %508, %cst_824 [1, 2] : vector<1x7x16xf32> to vector<1xf32>
    %510 = vector.shape_cast %509 : vector<1xf32> to vector<1x1x1xf32>
    %511 = vector.extract %510[0, 0, 0] : f32 from vector<1x1x1xf32>
    %512 = vector.broadcast %511 : f32 to vector<1x1xf32>
    %513 = arith.addf %443, %512 : vector<1x1xf32>
    %c0_825 = arith.constant 0 : index
    %c0_826 = arith.constant 0 : index
    %c5_827 = arith.constant 5 : index
    %c0_828 = arith.constant 0 : index
    %c0_829 = arith.constant 0 : index
    %514 = vector.load %arg9[%c0_825, %c0_826, %c5_827, %c0_828, %c0_829] : memref<2x2x9x9x8xf32, #tpu.memory_space<vmem>>, vector<1x1x1x7x8xf32>
    %515 = vector.shape_cast %514 : vector<1x1x1x7x8xf32> to vector<7x8xf32>
    %c0_830 = arith.constant 0 : index
    %c1_831 = arith.constant 1 : index
    %c5_832 = arith.constant 5 : index
    %c0_833 = arith.constant 0 : index
    %c0_834 = arith.constant 0 : index
    %516 = vector.load %arg9[%c0_830, %c1_831, %c5_832, %c0_833, %c0_834] : memref<2x2x9x9x8xf32, #tpu.memory_space<vmem>>, vector<1x1x1x7x8xf32>
    %517 = vector.shape_cast %516 : vector<1x1x1x7x8xf32> to vector<7x8xf32>
    %c0_835 = arith.constant 0 : index
    %c0_836 = arith.constant 0 : index
    %c5_837 = arith.constant 5 : index
    %c1_838 = arith.constant 1 : index
    %c0_839 = arith.constant 0 : index
    %518 = vector.load %arg9[%c0_835, %c0_836, %c5_837, %c1_838, %c0_839] : memref<2x2x9x9x8xf32, #tpu.memory_space<vmem>>, vector<1x1x1x7x8xf32>
    %519 = vector.shape_cast %518 : vector<1x1x1x7x8xf32> to vector<7x8xf32>
    %c0_840 = arith.constant 0 : index
    %c1_841 = arith.constant 1 : index
    %c5_842 = arith.constant 5 : index
    %c1_843 = arith.constant 1 : index
    %c0_844 = arith.constant 0 : index
    %520 = vector.load %arg9[%c0_840, %c1_841, %c5_842, %c1_843, %c0_844] : memref<2x2x9x9x8xf32, #tpu.memory_space<vmem>>, vector<1x1x1x7x8xf32>
    %521 = vector.shape_cast %520 : vector<1x1x1x7x8xf32> to vector<7x8xf32>
    %c0_845 = arith.constant 0 : index
    %c0_846 = arith.constant 0 : index
    %c5_847 = arith.constant 5 : index
    %c2_848 = arith.constant 2 : index
    %c0_849 = arith.constant 0 : index
    %522 = vector.load %arg9[%c0_845, %c0_846, %c5_847, %c2_848, %c0_849] : memref<2x2x9x9x8xf32, #tpu.memory_space<vmem>>, vector<1x1x1x7x8xf32>
    %523 = vector.shape_cast %522 : vector<1x1x1x7x8xf32> to vector<7x8xf32>
    %c1_850 = arith.constant 1 : index
    %c0_851 = arith.constant 0 : index
    %c5_852 = arith.constant 5 : index
    %c0_853 = arith.constant 0 : index
    %c0_854 = arith.constant 0 : index
    %524 = vector.load %arg9[%c1_850, %c0_851, %c5_852, %c0_853, %c0_854] : memref<2x2x9x9x8xf32, #tpu.memory_space<vmem>>, vector<1x1x1x7x8xf32>
    %525 = vector.shape_cast %524 : vector<1x1x1x7x8xf32> to vector<7x8xf32>
    %c1_855 = arith.constant 1 : index
    %c1_856 = arith.constant 1 : index
    %c5_857 = arith.constant 5 : index
    %c0_858 = arith.constant 0 : index
    %c0_859 = arith.constant 0 : index
    %526 = vector.load %arg9[%c1_855, %c1_856, %c5_857, %c0_858, %c0_859] : memref<2x2x9x9x8xf32, #tpu.memory_space<vmem>>, vector<1x1x1x7x8xf32>
    %527 = vector.shape_cast %526 : vector<1x1x1x7x8xf32> to vector<7x8xf32>
    %c1_860 = arith.constant 1 : index
    %c0_861 = arith.constant 0 : index
    %c5_862 = arith.constant 5 : index
    %c1_863 = arith.constant 1 : index
    %c0_864 = arith.constant 0 : index
    %528 = vector.load %arg9[%c1_860, %c0_861, %c5_862, %c1_863, %c0_864] : memref<2x2x9x9x8xf32, #tpu.memory_space<vmem>>, vector<1x1x1x7x8xf32>
    %529 = vector.shape_cast %528 : vector<1x1x1x7x8xf32> to vector<7x8xf32>
    %c1_865 = arith.constant 1 : index
    %c1_866 = arith.constant 1 : index
    %c5_867 = arith.constant 5 : index
    %c1_868 = arith.constant 1 : index
    %c0_869 = arith.constant 0 : index
    %530 = vector.load %arg9[%c1_865, %c1_866, %c5_867, %c1_868, %c0_869] : memref<2x2x9x9x8xf32, #tpu.memory_space<vmem>>, vector<1x1x1x7x8xf32>
    %531 = vector.shape_cast %530 : vector<1x1x1x7x8xf32> to vector<7x8xf32>
    %c1_870 = arith.constant 1 : index
    %c0_871 = arith.constant 0 : index
    %c5_872 = arith.constant 5 : index
    %c2_873 = arith.constant 2 : index
    %c0_874 = arith.constant 0 : index
    %532 = vector.load %arg9[%c1_870, %c0_871, %c5_872, %c2_873, %c0_874] : memref<2x2x9x9x8xf32, #tpu.memory_space<vmem>>, vector<1x1x1x7x8xf32>
    %533 = vector.shape_cast %532 : vector<1x1x1x7x8xf32> to vector<7x8xf32>
    %c0_875 = arith.constant 0 : index
    %c0_876 = arith.constant 0 : index
    %c6_877 = arith.constant 6 : index
    %c0_878 = arith.constant 0 : index
    %c0_879 = arith.constant 0 : index
    %534 = vector.load %arg9[%c0_875, %c0_876, %c6_877, %c0_878, %c0_879] : memref<2x2x9x9x8xf32, #tpu.memory_space<vmem>>, vector<1x1x1x7x8xf32>
    %535 = vector.shape_cast %534 : vector<1x1x1x7x8xf32> to vector<7x8xf32>
    %c0_880 = arith.constant 0 : index
    %c1_881 = arith.constant 1 : index
    %c6_882 = arith.constant 6 : index
    %c0_883 = arith.constant 0 : index
    %c0_884 = arith.constant 0 : index
    %536 = vector.load %arg9[%c0_880, %c1_881, %c6_882, %c0_883, %c0_884] : memref<2x2x9x9x8xf32, #tpu.memory_space<vmem>>, vector<1x1x1x7x8xf32>
    %537 = vector.shape_cast %536 : vector<1x1x1x7x8xf32> to vector<7x8xf32>
    %c0_885 = arith.constant 0 : index
    %c0_886 = arith.constant 0 : index
    %c6_887 = arith.constant 6 : index
    %c1_888 = arith.constant 1 : index
    %c0_889 = arith.constant 0 : index
    %538 = vector.load %arg9[%c0_885, %c0_886, %c6_887, %c1_888, %c0_889] : memref<2x2x9x9x8xf32, #tpu.memory_space<vmem>>, vector<1x1x1x7x8xf32>
    %539 = vector.shape_cast %538 : vector<1x1x1x7x8xf32> to vector<7x8xf32>
    %c0_890 = arith.constant 0 : index
    %c1_891 = arith.constant 1 : index
    %c6_892 = arith.constant 6 : index
    %c1_893 = arith.constant 1 : index
    %c0_894 = arith.constant 0 : index
    %540 = vector.load %arg9[%c0_890, %c1_891, %c6_892, %c1_893, %c0_894] : memref<2x2x9x9x8xf32, #tpu.memory_space<vmem>>, vector<1x1x1x7x8xf32>
    %541 = vector.shape_cast %540 : vector<1x1x1x7x8xf32> to vector<7x8xf32>
    %c0_895 = arith.constant 0 : index
    %c0_896 = arith.constant 0 : index
    %c6_897 = arith.constant 6 : index
    %c2_898 = arith.constant 2 : index
    %c0_899 = arith.constant 0 : index
    %542 = vector.load %arg9[%c0_895, %c0_896, %c6_897, %c2_898, %c0_899] : memref<2x2x9x9x8xf32, #tpu.memory_space<vmem>>, vector<1x1x1x7x8xf32>
    %543 = vector.shape_cast %542 : vector<1x1x1x7x8xf32> to vector<7x8xf32>
    %c1_900 = arith.constant 1 : index
    %c0_901 = arith.constant 0 : index
    %c6_902 = arith.constant 6 : index
    %c0_903 = arith.constant 0 : index
    %c0_904 = arith.constant 0 : index
    %544 = vector.load %arg9[%c1_900, %c0_901, %c6_902, %c0_903, %c0_904] : memref<2x2x9x9x8xf32, #tpu.memory_space<vmem>>, vector<1x1x1x7x8xf32>
    %545 = vector.shape_cast %544 : vector<1x1x1x7x8xf32> to vector<7x8xf32>
    %c1_905 = arith.constant 1 : index
    %c1_906 = arith.constant 1 : index
    %c6_907 = arith.constant 6 : index
    %c0_908 = arith.constant 0 : index
    %c0_909 = arith.constant 0 : index
    %546 = vector.load %arg9[%c1_905, %c1_906, %c6_907, %c0_908, %c0_909] : memref<2x2x9x9x8xf32, #tpu.memory_space<vmem>>, vector<1x1x1x7x8xf32>
    %547 = vector.shape_cast %546 : vector<1x1x1x7x8xf32> to vector<7x8xf32>
    %c1_910 = arith.constant 1 : index
    %c0_911 = arith.constant 0 : index
    %c6_912 = arith.constant 6 : index
    %c1_913 = arith.constant 1 : index
    %c0_914 = arith.constant 0 : index
    %548 = vector.load %arg9[%c1_910, %c0_911, %c6_912, %c1_913, %c0_914] : memref<2x2x9x9x8xf32, #tpu.memory_space<vmem>>, vector<1x1x1x7x8xf32>
    %549 = vector.shape_cast %548 : vector<1x1x1x7x8xf32> to vector<7x8xf32>
    %c1_915 = arith.constant 1 : index
    %c1_916 = arith.constant 1 : index
    %c6_917 = arith.constant 6 : index
    %c1_918 = arith.constant 1 : index
    %c0_919 = arith.constant 0 : index
    %550 = vector.load %arg9[%c1_915, %c1_916, %c6_917, %c1_918, %c0_919] : memref<2x2x9x9x8xf32, #tpu.memory_space<vmem>>, vector<1x1x1x7x8xf32>
    %551 = vector.shape_cast %550 : vector<1x1x1x7x8xf32> to vector<7x8xf32>
    %c1_920 = arith.constant 1 : index
    %c0_921 = arith.constant 0 : index
    %c6_922 = arith.constant 6 : index
    %c2_923 = arith.constant 2 : index
    %c0_924 = arith.constant 0 : index
    %552 = vector.load %arg9[%c1_920, %c0_921, %c6_922, %c2_923, %c0_924] : memref<2x2x9x9x8xf32, #tpu.memory_space<vmem>>, vector<1x1x1x7x8xf32>
    %553 = vector.shape_cast %552 : vector<1x1x1x7x8xf32> to vector<7x8xf32>
    %c0_925 = arith.constant 0 : index
    %c0_926 = arith.constant 0 : index
    %c7_927 = arith.constant 7 : index
    %c0_928 = arith.constant 0 : index
    %c0_929 = arith.constant 0 : index
    %554 = vector.load %arg9[%c0_925, %c0_926, %c7_927, %c0_928, %c0_929] : memref<2x2x9x9x8xf32, #tpu.memory_space<vmem>>, vector<1x1x1x7x8xf32>
    %555 = vector.shape_cast %554 : vector<1x1x1x7x8xf32> to vector<7x8xf32>
    %c0_930 = arith.constant 0 : index
    %c1_931 = arith.constant 1 : index
    %c7_932 = arith.constant 7 : index
    %c0_933 = arith.constant 0 : index
    %c0_934 = arith.constant 0 : index
    %556 = vector.load %arg9[%c0_930, %c1_931, %c7_932, %c0_933, %c0_934] : memref<2x2x9x9x8xf32, #tpu.memory_space<vmem>>, vector<1x1x1x7x8xf32>
    %557 = vector.shape_cast %556 : vector<1x1x1x7x8xf32> to vector<7x8xf32>
    %c0_935 = arith.constant 0 : index
    %c0_936 = arith.constant 0 : index
    %c7_937 = arith.constant 7 : index
    %c1_938 = arith.constant 1 : index
    %c0_939 = arith.constant 0 : index
    %558 = vector.load %arg9[%c0_935, %c0_936, %c7_937, %c1_938, %c0_939] : memref<2x2x9x9x8xf32, #tpu.memory_space<vmem>>, vector<1x1x1x7x8xf32>
    %559 = vector.shape_cast %558 : vector<1x1x1x7x8xf32> to vector<7x8xf32>
    %c0_940 = arith.constant 0 : index
    %c1_941 = arith.constant 1 : index
    %c7_942 = arith.constant 7 : index
    %c1_943 = arith.constant 1 : index
    %c0_944 = arith.constant 0 : index
    %560 = vector.load %arg9[%c0_940, %c1_941, %c7_942, %c1_943, %c0_944] : memref<2x2x9x9x8xf32, #tpu.memory_space<vmem>>, vector<1x1x1x7x8xf32>
    %561 = vector.shape_cast %560 : vector<1x1x1x7x8xf32> to vector<7x8xf32>
    %c0_945 = arith.constant 0 : index
    %c0_946 = arith.constant 0 : index
    %c7_947 = arith.constant 7 : index
    %c2_948 = arith.constant 2 : index
    %c0_949 = arith.constant 0 : index
    %562 = vector.load %arg9[%c0_945, %c0_946, %c7_947, %c2_948, %c0_949] : memref<2x2x9x9x8xf32, #tpu.memory_space<vmem>>, vector<1x1x1x7x8xf32>
    %563 = vector.shape_cast %562 : vector<1x1x1x7x8xf32> to vector<7x8xf32>
    %564 = tpu.concatenate %515, %517, %519, %521, %523, %525, %527, %529, %531, %533, %535, %537, %539, %541, %543, %545 in 1 : vector<7x8xf32>, vector<7x8xf32>, vector<7x8xf32>, vector<7x8xf32>, vector<7x8xf32>, vector<7x8xf32>, vector<7x8xf32>, vector<7x8xf32>, vector<7x8xf32>, vector<7x8xf32>, vector<7x8xf32>, vector<7x8xf32>, vector<7x8xf32>, vector<7x8xf32>, vector<7x8xf32>, vector<7x8xf32> -> vector<7x128xf32>
    %565 = tpu.concatenate %547, %549, %551, %553, %555, %557, %559, %561, %563 in 1 : vector<7x8xf32>, vector<7x8xf32>, vector<7x8xf32>, vector<7x8xf32>, vector<7x8xf32>, vector<7x8xf32>, vector<7x8xf32>, vector<7x8xf32>, vector<7x8xf32> -> vector<7x72xf32>
    %566 = tpu.concatenate %564, %565 in 1 : vector<7x128xf32>, vector<7x72xf32> -> vector<7x200xf32>
    %567 = arith.truncf %566 : vector<7x200xf32> to vector<7x200xbf16>
    %cst_950 = arith.constant dense<0.000000e+00> : vector<7x16xf32>
    %568 = tpu.matmul %567, %160, %cst_950 {dimension_numbers = #tpu.dot_dimension_numbers<[1], [0], [0], [1], [0, 0, 1, 1], [], []>} : vector<7x200xbf16>, vector<200x16xbf16>, vector<7x16xf32> -> vector<7x16xf32>
    %569 = vector.broadcast %161 : vector<1x16xf32> to vector<7x16xf32>
    %570 = arith.addf %568, %569 : vector<7x16xf32>
    %cst_951 = arith.constant 0.000000e+00 : f32
    %571 = vector.broadcast %cst_951 : f32 to vector<7x16xf32>
    %572 = arith.cmpf oge, %570, %571 : vector<7x16xf32>
    %cst_952 = arith.constant 3.000000e-01 : f32
    %573 = vector.broadcast %cst_952 : f32 to vector<7x16xf32>
    %574 = arith.mulf %573, %570 : vector<7x16xf32>
    %575 = arith.select %572, %570, %574 : vector<7x16xi1>, vector<7x16xf32>
    %576 = vector.extract_strided_slice %162 {offsets = [35, 0], sizes = [7, 16], strides = [1, 1]} : vector<49x16xf32> to vector<7x16xf32>
    %577 = arith.mulf %575, %576 : vector<7x16xf32>
    %578 = vector.shape_cast %577 : vector<7x16xf32> to vector<1x7x16xf32>
    %cst_953 = arith.constant dense<0.000000e+00> : vector<1xf32>
    %579 = vector.multi_reduction <add>, %578, %cst_953 [1, 2] : vector<1x7x16xf32> to vector<1xf32>
    %580 = vector.shape_cast %579 : vector<1xf32> to vector<1x1x1xf32>
    %581 = vector.extract %580[0, 0, 0] : f32 from vector<1x1x1xf32>
    %582 = vector.broadcast %581 : f32 to vector<1x1xf32>
    %583 = arith.addf %513, %582 : vector<1x1xf32>
    %c0_954 = arith.constant 0 : index
    %c0_955 = arith.constant 0 : index
    %c6_956 = arith.constant 6 : index
    %c0_957 = arith.constant 0 : index
    %c0_958 = arith.constant 0 : index
    %584 = vector.load %arg9[%c0_954, %c0_955, %c6_956, %c0_957, %c0_958] : memref<2x2x9x9x8xf32, #tpu.memory_space<vmem>>, vector<1x1x1x7x8xf32>
    %585 = vector.shape_cast %584 : vector<1x1x1x7x8xf32> to vector<7x8xf32>
    %c0_959 = arith.constant 0 : index
    %c1_960 = arith.constant 1 : index
    %c6_961 = arith.constant 6 : index
    %c0_962 = arith.constant 0 : index
    %c0_963 = arith.constant 0 : index
    %586 = vector.load %arg9[%c0_959, %c1_960, %c6_961, %c0_962, %c0_963] : memref<2x2x9x9x8xf32, #tpu.memory_space<vmem>>, vector<1x1x1x7x8xf32>
    %587 = vector.shape_cast %586 : vector<1x1x1x7x8xf32> to vector<7x8xf32>
    %c0_964 = arith.constant 0 : index
    %c0_965 = arith.constant 0 : index
    %c6_966 = arith.constant 6 : index
    %c1_967 = arith.constant 1 : index
    %c0_968 = arith.constant 0 : index
    %588 = vector.load %arg9[%c0_964, %c0_965, %c6_966, %c1_967, %c0_968] : memref<2x2x9x9x8xf32, #tpu.memory_space<vmem>>, vector<1x1x1x7x8xf32>
    %589 = vector.shape_cast %588 : vector<1x1x1x7x8xf32> to vector<7x8xf32>
    %c0_969 = arith.constant 0 : index
    %c1_970 = arith.constant 1 : index
    %c6_971 = arith.constant 6 : index
    %c1_972 = arith.constant 1 : index
    %c0_973 = arith.constant 0 : index
    %590 = vector.load %arg9[%c0_969, %c1_970, %c6_971, %c1_972, %c0_973] : memref<2x2x9x9x8xf32, #tpu.memory_space<vmem>>, vector<1x1x1x7x8xf32>
    %591 = vector.shape_cast %590 : vector<1x1x1x7x8xf32> to vector<7x8xf32>
    %c0_974 = arith.constant 0 : index
    %c0_975 = arith.constant 0 : index
    %c6_976 = arith.constant 6 : index
    %c2_977 = arith.constant 2 : index
    %c0_978 = arith.constant 0 : index
    %592 = vector.load %arg9[%c0_974, %c0_975, %c6_976, %c2_977, %c0_978] : memref<2x2x9x9x8xf32, #tpu.memory_space<vmem>>, vector<1x1x1x7x8xf32>
    %593 = vector.shape_cast %592 : vector<1x1x1x7x8xf32> to vector<7x8xf32>
    %c1_979 = arith.constant 1 : index
    %c0_980 = arith.constant 0 : index
    %c6_981 = arith.constant 6 : index
    %c0_982 = arith.constant 0 : index
    %c0_983 = arith.constant 0 : index
    %594 = vector.load %arg9[%c1_979, %c0_980, %c6_981, %c0_982, %c0_983] : memref<2x2x9x9x8xf32, #tpu.memory_space<vmem>>, vector<1x1x1x7x8xf32>
    %595 = vector.shape_cast %594 : vector<1x1x1x7x8xf32> to vector<7x8xf32>
    %c1_984 = arith.constant 1 : index
    %c1_985 = arith.constant 1 : index
    %c6_986 = arith.constant 6 : index
    %c0_987 = arith.constant 0 : index
    %c0_988 = arith.constant 0 : index
    %596 = vector.load %arg9[%c1_984, %c1_985, %c6_986, %c0_987, %c0_988] : memref<2x2x9x9x8xf32, #tpu.memory_space<vmem>>, vector<1x1x1x7x8xf32>
    %597 = vector.shape_cast %596 : vector<1x1x1x7x8xf32> to vector<7x8xf32>
    %c1_989 = arith.constant 1 : index
    %c0_990 = arith.constant 0 : index
    %c6_991 = arith.constant 6 : index
    %c1_992 = arith.constant 1 : index
    %c0_993 = arith.constant 0 : index
    %598 = vector.load %arg9[%c1_989, %c0_990, %c6_991, %c1_992, %c0_993] : memref<2x2x9x9x8xf32, #tpu.memory_space<vmem>>, vector<1x1x1x7x8xf32>
    %599 = vector.shape_cast %598 : vector<1x1x1x7x8xf32> to vector<7x8xf32>
    %c1_994 = arith.constant 1 : index
    %c1_995 = arith.constant 1 : index
    %c6_996 = arith.constant 6 : index
    %c1_997 = arith.constant 1 : index
    %c0_998 = arith.constant 0 : index
    %600 = vector.load %arg9[%c1_994, %c1_995, %c6_996, %c1_997, %c0_998] : memref<2x2x9x9x8xf32, #tpu.memory_space<vmem>>, vector<1x1x1x7x8xf32>
    %601 = vector.shape_cast %600 : vector<1x1x1x7x8xf32> to vector<7x8xf32>
    %c1_999 = arith.constant 1 : index
    %c0_1000 = arith.constant 0 : index
    %c6_1001 = arith.constant 6 : index
    %c2_1002 = arith.constant 2 : index
    %c0_1003 = arith.constant 0 : index
    %602 = vector.load %arg9[%c1_999, %c0_1000, %c6_1001, %c2_1002, %c0_1003] : memref<2x2x9x9x8xf32, #tpu.memory_space<vmem>>, vector<1x1x1x7x8xf32>
    %603 = vector.shape_cast %602 : vector<1x1x1x7x8xf32> to vector<7x8xf32>
    %c0_1004 = arith.constant 0 : index
    %c0_1005 = arith.constant 0 : index
    %c7_1006 = arith.constant 7 : index
    %c0_1007 = arith.constant 0 : index
    %c0_1008 = arith.constant 0 : index
    %604 = vector.load %arg9[%c0_1004, %c0_1005, %c7_1006, %c0_1007, %c0_1008] : memref<2x2x9x9x8xf32, #tpu.memory_space<vmem>>, vector<1x1x1x7x8xf32>
    %605 = vector.shape_cast %604 : vector<1x1x1x7x8xf32> to vector<7x8xf32>
    %c0_1009 = arith.constant 0 : index
    %c1_1010 = arith.constant 1 : index
    %c7_1011 = arith.constant 7 : index
    %c0_1012 = arith.constant 0 : index
    %c0_1013 = arith.constant 0 : index
    %606 = vector.load %arg9[%c0_1009, %c1_1010, %c7_1011, %c0_1012, %c0_1013] : memref<2x2x9x9x8xf32, #tpu.memory_space<vmem>>, vector<1x1x1x7x8xf32>
    %607 = vector.shape_cast %606 : vector<1x1x1x7x8xf32> to vector<7x8xf32>
    %c0_1014 = arith.constant 0 : index
    %c0_1015 = arith.constant 0 : index
    %c7_1016 = arith.constant 7 : index
    %c1_1017 = arith.constant 1 : index
    %c0_1018 = arith.constant 0 : index
    %608 = vector.load %arg9[%c0_1014, %c0_1015, %c7_1016, %c1_1017, %c0_1018] : memref<2x2x9x9x8xf32, #tpu.memory_space<vmem>>, vector<1x1x1x7x8xf32>
    %609 = vector.shape_cast %608 : vector<1x1x1x7x8xf32> to vector<7x8xf32>
    %c0_1019 = arith.constant 0 : index
    %c1_1020 = arith.constant 1 : index
    %c7_1021 = arith.constant 7 : index
    %c1_1022 = arith.constant 1 : index
    %c0_1023 = arith.constant 0 : index
    %610 = vector.load %arg9[%c0_1019, %c1_1020, %c7_1021, %c1_1022, %c0_1023] : memref<2x2x9x9x8xf32, #tpu.memory_space<vmem>>, vector<1x1x1x7x8xf32>
    %611 = vector.shape_cast %610 : vector<1x1x1x7x8xf32> to vector<7x8xf32>
    %c0_1024 = arith.constant 0 : index
    %c0_1025 = arith.constant 0 : index
    %c7_1026 = arith.constant 7 : index
    %c2_1027 = arith.constant 2 : index
    %c0_1028 = arith.constant 0 : index
    %612 = vector.load %arg9[%c0_1024, %c0_1025, %c7_1026, %c2_1027, %c0_1028] : memref<2x2x9x9x8xf32, #tpu.memory_space<vmem>>, vector<1x1x1x7x8xf32>
    %613 = vector.shape_cast %612 : vector<1x1x1x7x8xf32> to vector<7x8xf32>
    %c1_1029 = arith.constant 1 : index
    %c0_1030 = arith.constant 0 : index
    %c7_1031 = arith.constant 7 : index
    %c0_1032 = arith.constant 0 : index
    %c0_1033 = arith.constant 0 : index
    %614 = vector.load %arg9[%c1_1029, %c0_1030, %c7_1031, %c0_1032, %c0_1033] : memref<2x2x9x9x8xf32, #tpu.memory_space<vmem>>, vector<1x1x1x7x8xf32>
    %615 = vector.shape_cast %614 : vector<1x1x1x7x8xf32> to vector<7x8xf32>
    %c1_1034 = arith.constant 1 : index
    %c1_1035 = arith.constant 1 : index
    %c7_1036 = arith.constant 7 : index
    %c0_1037 = arith.constant 0 : index
    %c0_1038 = arith.constant 0 : index
    %616 = vector.load %arg9[%c1_1034, %c1_1035, %c7_1036, %c0_1037, %c0_1038] : memref<2x2x9x9x8xf32, #tpu.memory_space<vmem>>, vector<1x1x1x7x8xf32>
    %617 = vector.shape_cast %616 : vector<1x1x1x7x8xf32> to vector<7x8xf32>
    %c1_1039 = arith.constant 1 : index
    %c0_1040 = arith.constant 0 : index
    %c7_1041 = arith.constant 7 : index
    %c1_1042 = arith.constant 1 : index
    %c0_1043 = arith.constant 0 : index
    %618 = vector.load %arg9[%c1_1039, %c0_1040, %c7_1041, %c1_1042, %c0_1043] : memref<2x2x9x9x8xf32, #tpu.memory_space<vmem>>, vector<1x1x1x7x8xf32>
    %619 = vector.shape_cast %618 : vector<1x1x1x7x8xf32> to vector<7x8xf32>
    %c1_1044 = arith.constant 1 : index
    %c1_1045 = arith.constant 1 : index
    %c7_1046 = arith.constant 7 : index
    %c1_1047 = arith.constant 1 : index
    %c0_1048 = arith.constant 0 : index
    %620 = vector.load %arg9[%c1_1044, %c1_1045, %c7_1046, %c1_1047, %c0_1048] : memref<2x2x9x9x8xf32, #tpu.memory_space<vmem>>, vector<1x1x1x7x8xf32>
    %621 = vector.shape_cast %620 : vector<1x1x1x7x8xf32> to vector<7x8xf32>
    %c1_1049 = arith.constant 1 : index
    %c0_1050 = arith.constant 0 : index
    %c7_1051 = arith.constant 7 : index
    %c2_1052 = arith.constant 2 : index
    %c0_1053 = arith.constant 0 : index
    %622 = vector.load %arg9[%c1_1049, %c0_1050, %c7_1051, %c2_1052, %c0_1053] : memref<2x2x9x9x8xf32, #tpu.memory_space<vmem>>, vector<1x1x1x7x8xf32>
    %623 = vector.shape_cast %622 : vector<1x1x1x7x8xf32> to vector<7x8xf32>
    %c0_1054 = arith.constant 0 : index
    %c0_1055 = arith.constant 0 : index
    %c8 = arith.constant 8 : index
    %c0_1056 = arith.constant 0 : index
    %c0_1057 = arith.constant 0 : index
    %624 = vector.load %arg9[%c0_1054, %c0_1055, %c8, %c0_1056, %c0_1057] : memref<2x2x9x9x8xf32, #tpu.memory_space<vmem>>, vector<1x1x1x7x8xf32>
    %625 = vector.shape_cast %624 : vector<1x1x1x7x8xf32> to vector<7x8xf32>
    %c0_1058 = arith.constant 0 : index
    %c1_1059 = arith.constant 1 : index
    %c8_1060 = arith.constant 8 : index
    %c0_1061 = arith.constant 0 : index
    %c0_1062 = arith.constant 0 : index
    %626 = vector.load %arg9[%c0_1058, %c1_1059, %c8_1060, %c0_1061, %c0_1062] : memref<2x2x9x9x8xf32, #tpu.memory_space<vmem>>, vector<1x1x1x7x8xf32>
    %627 = vector.shape_cast %626 : vector<1x1x1x7x8xf32> to vector<7x8xf32>
    %c0_1063 = arith.constant 0 : index
    %c0_1064 = arith.constant 0 : index
    %c8_1065 = arith.constant 8 : index
    %c1_1066 = arith.constant 1 : index
    %c0_1067 = arith.constant 0 : index
    %628 = vector.load %arg9[%c0_1063, %c0_1064, %c8_1065, %c1_1066, %c0_1067] : memref<2x2x9x9x8xf32, #tpu.memory_space<vmem>>, vector<1x1x1x7x8xf32>
    %629 = vector.shape_cast %628 : vector<1x1x1x7x8xf32> to vector<7x8xf32>
    %c0_1068 = arith.constant 0 : index
    %c1_1069 = arith.constant 1 : index
    %c8_1070 = arith.constant 8 : index
    %c1_1071 = arith.constant 1 : index
    %c0_1072 = arith.constant 0 : index
    %630 = vector.load %arg9[%c0_1068, %c1_1069, %c8_1070, %c1_1071, %c0_1072] : memref<2x2x9x9x8xf32, #tpu.memory_space<vmem>>, vector<1x1x1x7x8xf32>
    %631 = vector.shape_cast %630 : vector<1x1x1x7x8xf32> to vector<7x8xf32>
    %c0_1073 = arith.constant 0 : index
    %c0_1074 = arith.constant 0 : index
    %c8_1075 = arith.constant 8 : index
    %c2_1076 = arith.constant 2 : index
    %c0_1077 = arith.constant 0 : index
    %632 = vector.load %arg9[%c0_1073, %c0_1074, %c8_1075, %c2_1076, %c0_1077] : memref<2x2x9x9x8xf32, #tpu.memory_space<vmem>>, vector<1x1x1x7x8xf32>
    %633 = vector.shape_cast %632 : vector<1x1x1x7x8xf32> to vector<7x8xf32>
    %634 = tpu.concatenate %585, %587, %589, %591, %593, %595, %597, %599, %601, %603, %605, %607, %609, %611, %613, %615 in 1 : vector<7x8xf32>, vector<7x8xf32>, vector<7x8xf32>, vector<7x8xf32>, vector<7x8xf32>, vector<7x8xf32>, vector<7x8xf32>, vector<7x8xf32>, vector<7x8xf32>, vector<7x8xf32>, vector<7x8xf32>, vector<7x8xf32>, vector<7x8xf32>, vector<7x8xf32>, vector<7x8xf32>, vector<7x8xf32> -> vector<7x128xf32>
    %635 = tpu.concatenate %617, %619, %621, %623, %625, %627, %629, %631, %633 in 1 : vector<7x8xf32>, vector<7x8xf32>, vector<7x8xf32>, vector<7x8xf32>, vector<7x8xf32>, vector<7x8xf32>, vector<7x8xf32>, vector<7x8xf32>, vector<7x8xf32> -> vector<7x72xf32>
    %636 = tpu.concatenate %634, %635 in 1 : vector<7x128xf32>, vector<7x72xf32> -> vector<7x200xf32>
    %637 = arith.truncf %636 : vector<7x200xf32> to vector<7x200xbf16>
    %cst_1078 = arith.constant dense<0.000000e+00> : vector<7x16xf32>
    %638 = tpu.matmul %637, %160, %cst_1078 {dimension_numbers = #tpu.dot_dimension_numbers<[1], [0], [0], [1], [0, 0, 1, 1], [], []>} : vector<7x200xbf16>, vector<200x16xbf16>, vector<7x16xf32> -> vector<7x16xf32>
    %639 = vector.broadcast %161 : vector<1x16xf32> to vector<7x16xf32>
    %640 = arith.addf %638, %639 : vector<7x16xf32>
    %cst_1079 = arith.constant 0.000000e+00 : f32
    %641 = vector.broadcast %cst_1079 : f32 to vector<7x16xf32>
    %642 = arith.cmpf oge, %640, %641 : vector<7x16xf32>
    %cst_1080 = arith.constant 3.000000e-01 : f32
    %643 = vector.broadcast %cst_1080 : f32 to vector<7x16xf32>
    %644 = arith.mulf %643, %640 : vector<7x16xf32>
    %645 = arith.select %642, %640, %644 : vector<7x16xi1>, vector<7x16xf32>
    %646 = vector.extract_strided_slice %162 {offsets = [42, 0], sizes = [7, 16], strides = [1, 1]} : vector<49x16xf32> to vector<7x16xf32>
    %647 = arith.mulf %645, %646 : vector<7x16xf32>
    %648 = vector.shape_cast %647 : vector<7x16xf32> to vector<1x7x16xf32>
    %cst_1081 = arith.constant dense<0.000000e+00> : vector<1xf32>
    %649 = vector.multi_reduction <add>, %648, %cst_1081 [1, 2] : vector<1x7x16xf32> to vector<1xf32>
    %650 = vector.shape_cast %649 : vector<1xf32> to vector<1x1x1xf32>
    %651 = vector.extract %650[0, 0, 0] : f32 from vector<1x1x1xf32>
    %652 = vector.broadcast %651 : f32 to vector<1x1xf32>
    %653 = arith.addf %583, %652 : vector<1x1xf32>
    %c0_1082 = arith.constant 0 : index
    %c0_1083 = arith.constant 0 : index
    %654 = vector.load %arg7[%c0_1082, %c0_1083] : memref<1x1xf32, #tpu.memory_space<vmem>>, vector<1x1xf32>
    %655 = arith.addf %653, %654 : vector<1x1xf32>
    %cst_1084 = arith.constant 0.000000e+00 : f32
    %656 = vector.broadcast %cst_1084 : f32 to vector<1x1xf32>
    %657 = arith.subf %656, %655 : vector<1x1xf32>
    %658 = math.exp %657 : vector<1x1xf32>
    %cst_1085 = arith.constant 1.000000e+00 : f32
    %659 = vector.broadcast %cst_1085 : f32 to vector<1x1xf32>
    %660 = arith.addf %659, %658 : vector<1x1xf32>
    %661 = tpu.reciprocal %660 {approx = true} : vector<1x1xf32> -> vector<1x1xf32>
    %662 = vector.shape_cast %661 : vector<1x1xf32> to vector<1x1x1xf32>
    %663 = vector.broadcast %662 : vector<1x1x1xf32> to vector<1x1x128xf32>
    %c0_1086 = arith.constant 0 : index
    %c0_1087 = arith.constant 0 : index
    %c0_1088 = arith.constant 0 : index
    %664 = vector.load %arg8[%c0_1086, %c0_1087, %c0_1088] : memref<1x1x128xf32, #tpu.memory_space<vmem>>, vector<1x1x128xf32>
    tpu.vector_store %arg8[%c0_1086, %c0_1087, %c0_1088], %663 {strides = array<i32>} : memref<1x1x128xf32, #tpu.memory_space<vmem>>, vector<1x1x128xf32>,
    return
  }
  func.func @transform_0(%arg0: i32) -> (i32, i32, i32, i32, i32) {
    %c0_i32 = arith.constant 0 : i32
    %c0_i32_0 = arith.constant 0 : i32
    %c0_i32_1 = arith.constant 0 : i32
    %c0_i32_2 = arith.constant 0 : i32
    %c0_i32_3 = arith.constant 0 : i32
    return %arg0, %c0_i32, %c0_i32_0, %c0_i32_1, %c0_i32_2 : i32, i32, i32, i32, i32
  }
  func.func @transform_1(%arg0: i32) -> (i32, i32) {
    %c0_i32 = arith.constant 0 : i32
    %c0_i32_0 = arith.constant 0 : i32
    %c0_i32_1 = arith.constant 0 : i32
    return %c0_i32, %c0_i32_0 : i32, i32
  }
  func.func @transform_2(%arg0: i32) -> (i32, i32) {
    %c0_i32 = arith.constant 0 : i32
    %c0_i32_0 = arith.constant 0 : i32
    %c0_i32_1 = arith.constant 0 : i32
    return %c0_i32, %c0_i32_0 : i32, i32
  }
  func.func @transform_3(%arg0: i32) -> (i32, i32) {
    %c0_i32 = arith.constant 0 : i32
    %c0_i32_0 = arith.constant 0 : i32
    %c0_i32_1 = arith.constant 0 : i32
    return %c0_i32, %c0_i32_0 : i32, i32
  }
  func.func @transform_4(%arg0: i32) -> (i32, i32) {
    %c0_i32 = arith.constant 0 : i32
    %c0_i32_0 = arith.constant 0 : i32
    %c0_i32_1 = arith.constant 0 : i32
    return %c0_i32, %c0_i32_0 : i32, i32
  }
  func.func @transform_5(%arg0: i32) -> (i32, i32) {
    %c0_i32 = arith.constant 0 : i32
    %c0_i32_0 = arith.constant 0 : i32
    %c0_i32_1 = arith.constant 0 : i32
    return %c0_i32, %c0_i32_0 : i32, i32
  }
  func.func @transform_6(%arg0: i32) -> (i32, i32) {
    %c0_i32 = arith.constant 0 : i32
    %c0_i32_0 = arith.constant 0 : i32
    %c0_i32_1 = arith.constant 0 : i32
    return %c0_i32, %c0_i32_0 : i32, i32
  }
  func.func @transform_7(%arg0: i32) -> (i32, i32, i32) {
    %c0_i32 = arith.constant 0 : i32
    %c0_i32_0 = arith.constant 0 : i32
    %c0_i32_1 = arith.constant 0 : i32
    return %arg0, %c0_i32, %c0_i32_0 : i32, i32, i32
  }
}

</mosaic_0001>

<llo_original>
// kernel: discriminator_sgan_forward.1
$region0: #{discriminator_sgan_forward.1}
  #allocation0 [shape = 'u32[]', space=smem, size = 0x4, offset = 0x4, fixed_abs, tag = 'smem constant byte address 0x4 - core index']
  #allocation1 [shape = 'u32[144,128]{1,0:T(1,128)}', space=vmem, size = 0x12000, scoped, tag = 'internal scratch']
  #allocation2 [shape = 'f32[2,2,9,9,8]{4,3,2,1,0:T(8,128)}', space=vmem, size = 0x48000, scoped, tag = 'scratch operand']
  #allocation3 [shape = 'f32[1,1]{1,0:T(1,128)S(1)}', space=vmem, size = 0x200, scoped, tag = 'scoped memory for discriminator_sgan_forward.1']
  %s0 = inlined_call_operand.vmem [shape: f32[2,2,2,49,25], index: 0, kind: input, shape index: {}]
  %s1 = inlined_call_operand.vmem [shape: bf16[25,8], index: 1, kind: input, shape index: {}]
  %s2 = inlined_call_operand.vmem [shape: f32[1,8], index: 2, kind: input, shape index: {}]
  %s3 = inlined_call_operand.vmem [shape: bf16[200,16], index: 3, kind: input, shape index: {}]
  %s4 = inlined_call_operand.vmem [shape: f32[1,16], index: 4, kind: input, shape index: {}]
  %s5 = inlined_call_operand.vmem [shape: f32[49,16], index: 5, kind: input, shape index: {}]
  %s6 = inlined_call_operand.<no memory space> [shape: f32[1,1], index: 6, kind: input, shape index: {}]
  %s7 = inlined_call_operand.vmem [shape: f32[2,1,128], index: 7, kind: output, shape index: {}]
  %s8 = sld [smem:[#allocation0]]
  $region61: #{discriminator_sgan_forward.1} parent=0
    _
  %s10 = ssub.s32 1, %s8
  %s11 = scalar_select 0, %s10, %s8
  %v12 = vstv %s6
  %13 = vst [vmem:[#allocation3] sm:$0x1] %v12
  loop: start=0, step=1, limit=4
  $region2: #{discriminator_sgan_forward.1} parent=0 // loop_pre_header
    _
  $region3: #{discriminator_sgan_forward.1} parent=0 // loop_header
    %s15 = sphi 0, %s19
    %p16 = scmp.ge.s32.totalorder %s15, 4
    %s25 = sphi 0, %s27
    %s28 = sphi 0, %s25
    %s29 = sphi 0, %s28
    %s45 = sphi 0, %s29
    %s49 = sphi 0, %s49
    %s51 = sphi 0, %s49
    %s52 = sphi 0, %s51
    %s66 = sphi 0, %s52
    %s70 = sphi 0, %s70
    %s72 = sphi 0, %s70
    %s73 = sphi 0, %s72
    %s87 = sphi 0, %s73
    %s91 = sphi 0, %s91
    %s93 = sphi 0, %s91
    %s94 = sphi 0, %s93
    %s108 = sphi 0, %s94
    %s112 = sphi 0, %s112
    %s114 = sphi 0, %s112
    %s115 = sphi 0, %s114
    %s129 = sphi 0, %s115
    %s133 = sphi 0, %s133
    %s135 = sphi 0, %s133
    %s136 = sphi 0, %s135
    %s150 = sphi 0, %s136
    %s154 = sphi 0, %s154
    %s156 = sphi 0, %s154
    %s157 = sphi 0, %s156
    %s171 = sphi 0, %s157
    %s177 = sphi 0, %s179
    %s180 = sphi 0, %s177
    %s181 = sphi 0, %s180
    %s197 = sphi 0, %s181
  $region4: #{discriminator_sgan_forward.1} parent=0 // loop_header_branch
    %18 = sbr.rel (%p16) target = $region8
  $region5: #{discriminator_sgan_forward.1} parent=0 // loop_body
    %s20 = ssub.s32 %s15, 1
    %s21 = ssub.s32 %s15, 2
    %s22 = sadd.s32 %s15, 1
    %s23 = ssub.s32 %s15, %s22
    %p24 = scmp.eq.s32.totalorder %s23, 0
    %s26 = sadd.s32 %s25, 1
    %s27 = scalar_select %p24, %s25, %s26
    %p30 = pneg %p24
    %p31 = scmp.eq.s32.totalorder %s15, 1
    %p32 = por %p30, %p31
    %p33 = scmp.ne.s32.totalorder %s25, %s28
    %p34 = scmp.eq.s32.totalorder %s15, 0
    %p35 = por %p33, %p34
    %p36 = scmp.ne.s32.totalorder %s25, %s28
    %p37 = scmp.eq.s32.totalorder %s20, 1
    %p38 = por %p36, %p37
    %p39 = scmp.ne.s32.totalorder %s28, %s29
    %p40 = scmp.eq.s32.totalorder %s20, 0
    %p41 = por %p39, %p40
    %p42 = scmp.ne.s32.totalorder %s28, %s29
    %p43 = scmp.eq.s32.totalorder %s21, 1
    %p44 = por %p42, %p43
    %p46 = scmp.ne.s32.totalorder %s29, %s45
    %p47 = scmp.eq.s32.totalorder %s21, 0
    %p48 = por %p46, %p47
    %s50 = sadd.s32 %s49, 1
    %p53 = scmp.eq.s32.totalorder %s15, 1
    %p54 = scmp.ne.s32.totalorder %s49, %s51
    %p55 = scmp.eq.s32.totalorder %s15, 0
    %p56 = por %p54, %p55
    %p57 = scmp.ne.s32.totalorder %s49, %s51
    %p58 = scmp.eq.s32.totalorder %s20, 1
    %p59 = por %p57, %p58
    %p60 = scmp.ne.s32.totalorder %s51, %s52
    %p61 = scmp.eq.s32.totalorder %s20, 0
    %p62 = por %p60, %p61
    %p63 = scmp.ne.s32.totalorder %s51, %s52
    %p64 = scmp.eq.s32.totalorder %s21, 1
    %p65 = por %p63, %p64
    %p67 = scmp.ne.s32.totalorder %s52, %s66
    %p68 = scmp.eq.s32.totalorder %s21, 0
    %p69 = por %p67, %p68
    %s71 = sadd.s32 %s70, 1
    %p74 = scmp.eq.s32.totalorder %s15, 1
    %p75 = scmp.ne.s32.totalorder %s70, %s72
    %p76 = scmp.eq.s32.totalorder %s15, 0
    %p77 = por %p75, %p76
    %p78 = scmp.ne.s32.totalorder %s70, %s72
    %p79 = scmp.eq.s32.totalorder %s20, 1
    %p80 = por %p78, %p79
    %p81 = scmp.ne.s32.totalorder %s72, %s73
    %p82 = scmp.eq.s32.totalorder %s20, 0
    %p83 = por %p81, %p82
    %p84 = scmp.ne.s32.totalorder %s72, %s73
    %p85 = scmp.eq.s32.totalorder %s21, 1
    %p86 = por %p84, %p85
    %p88 = scmp.ne.s32.totalorder %s73, %s87
    %p89 = scmp.eq.s32.totalorder %s21, 0
    %p90 = por %p88, %p89
    %s92 = sadd.s32 %s91, 1
    %p95 = scmp.eq.s32.totalorder %s15, 1
    %p96 = scmp.ne.s32.totalorder %s91, %s93
    %p97 = scmp.eq.s32.totalorder %s15, 0
    %p98 = por %p96, %p97
    %p99 = scmp.ne.s32.totalorder %s91, %s93
    %p100 = scmp.eq.s32.totalorder %s20, 1
    %p101 = por %p99, %p100
    %p102 = scmp.ne.s32.totalorder %s93, %s94
    %p103 = scmp.eq.s32.totalorder %s20, 0
    %p104 = por %p102, %p103
    %p105 = scmp.ne.s32.totalorder %s93, %s94
    %p106 = scmp.eq.s32.totalorder %s21, 1
    %p107 = por %p105, %p106
    %p109 = scmp.ne.s32.totalorder %s94, %s108
    %p110 = scmp.eq.s32.totalorder %s21, 0
    %p111 = por %p109, %p110
    %s113 = sadd.s32 %s112, 1
    %p116 = scmp.eq.s32.totalorder %s15, 1
    %p117 = scmp.ne.s32.totalorder %s112, %s114
    %p118 = scmp.eq.s32.totalorder %s15, 0
    %p119 = por %p117, %p118
    %p120 = scmp.ne.s32.totalorder %s112, %s114
    %p121 = scmp.eq.s32.totalorder %s20, 1
    %p122 = por %p120, %p121
    %p123 = scmp.ne.s32.totalorder %s114, %s115
    %p124 = scmp.eq.s32.totalorder %s20, 0
    %p125 = por %p123, %p124
    %p126 = scmp.ne.s32.totalorder %s114, %s115
    %p127 = scmp.eq.s32.totalorder %s21, 1
    %p128 = por %p126, %p127
    %p130 = scmp.ne.s32.totalorder %s115, %s129
    %p131 = scmp.eq.s32.totalorder %s21, 0
    %p132 = por %p130, %p131
    %s134 = sadd.s32 %s133, 1
    %p137 = scmp.eq.s32.totalorder %s15, 1
    %p138 = scmp.ne.s32.totalorder %s133, %s135
    %p139 = scmp.eq.s32.totalorder %s15, 0
    %p140 = por %p138, %p139
    %p141 = scmp.ne.s32.totalorder %s133, %s135
    %p142 = scmp.eq.s32.totalorder %s20, 1
    %p143 = por %p141, %p142
    %p144 = scmp.ne.s32.totalorder %s135, %s136
    %p145 = scmp.eq.s32.totalorder %s20, 0
    %p146 = por %p144, %p145
    %p147 = scmp.ne.s32.totalorder %s135, %s136
    %p148 = scmp.eq.s32.totalorder %s21, 1
    %p149 = por %p147, %p148
    %p151 = scmp.ne.s32.totalorder %s136, %s150
    %p152 = scmp.eq.s32.totalorder %s21, 0
    %p153 = por %p151, %p152
    %s155 = sadd.s32 %s154, 1
    %p158 = scmp.eq.s32.totalorder %s15, 1
    %p159 = scmp.ne.s32.totalorder %s154, %s156
    %p160 = scmp.eq.s32.totalorder %s15, 0
    %p161 = por %p159, %p160
    %p162 = scmp.ne.s32.totalorder %s154, %s156
    %p163 = scmp.eq.s32.totalorder %s20, 1
    %p164 = por %p162, %p163
    %p165 = scmp.ne.s32.totalorder %s156, %s157
    %p166 = scmp.eq.s32.totalorder %s20, 0
    %p167 = por %p165, %p166
    %p168 = scmp.ne.s32.totalorder %s156, %s157
    %p169 = scmp.eq.s32.totalorder %s21, 1
    %p170 = por %p168, %p169
    %p172 = scmp.ne.s32.totalorder %s157, %s171
    %p173 = scmp.eq.s32.totalorder %s21, 0
    %p174 = por %p172, %p173
    %s175 = ssub.s32 %s15, %s22
    %p176 = scmp.eq.s32.totalorder %s175, 0
    %s178 = sadd.s32 %s177, 1
    %s179 = scalar_select %p176, %s177, %s178
    %p182 = pneg %p176
    %p183 = scmp.eq.s32.totalorder %s15, 1
    %p184 = por %p182, %p183
    %p185 = scmp.ne.s32.totalorder %s177, %s180
    %p186 = scmp.eq.s32.totalorder %s15, 0
    %p187 = por %p185, %p186
    %p188 = scmp.ne.s32.totalorder %s177, %s180
    %p189 = scmp.eq.s32.totalorder %s20, 1
    %p190 = por %p188, %p189
    %p191 = scmp.ne.s32.totalorder %s180, %s181
    %p192 = scmp.eq.s32.totalorder %s20, 0
    %p193 = por %p191, %p192
    %p194 = scmp.ne.s32.totalorder %s180, %s181
    %p195 = scmp.eq.s32.totalorder %s21, 1
    %p196 = por %p194, %p195
    %p198 = scmp.ne.s32.totalorder %s181, %s197
    %p199 = scmp.eq.s32.totalorder %s21, 0
    %p200 = por %p198, %p199
    %p201 = scmp.le.s32.totalorder 1, %s15
    %p202 = scmp.lt.s32.totalorder %s15, 3
    %p203 = pnand %p201, %p202
    %p204 = pneg %p203
    // Predicated region
    $region9: #{discriminator_sgan_forward.1} parent=5 // pred_check
      _
    $region10: #{discriminator_sgan_forward.1} parent=5 // pred_check_branch
      %206 = sbr.rel (%p203) target = $region12
    $region11: #{discriminator_sgan_forward.1} parent=5 // pred_region
      %s207 = ssub.s32 %s15, 1
      // Predicated region
      $region13: #{discriminator_sgan_forward.1} parent=11 // pred_check
        %p208 = pneg %p62
      $region14: #{discriminator_sgan_forward.1} parent=11 // pred_check_branch
        %210 = sbr.rel (%p208) target = $region16
      $region15: #{discriminator_sgan_forward.1} parent=11 // pred_region
        _
      $region16: #{discriminator_sgan_forward.1} parent=11 // pred_fallthru
        _
      // Predicated region
      $region17: #{discriminator_sgan_forward.1} parent=11 // pred_check
        %p211 = pneg %p83
      $region18: #{discriminator_sgan_forward.1} parent=11 // pred_check_branch
        %213 = sbr.rel (%p211) target = $region20
      $region19: #{discriminator_sgan_forward.1} parent=11 // pred_region
        _
      $region20: #{discriminator_sgan_forward.1} parent=11 // pred_fallthru
        _
      // Predicated region
      $region21: #{discriminator_sgan_forward.1} parent=11 // pred_check
        %p214 = pneg %p104
      $region22: #{discriminator_sgan_forward.1} parent=11 // pred_check_branch
        %216 = sbr.rel (%p214) target = $region24
      $region23: #{discriminator_sgan_forward.1} parent=11 // pred_region
        _
      $region24: #{discriminator_sgan_forward.1} parent=11 // pred_fallthru
        _
      // Predicated region
      $region25: #{discriminator_sgan_forward.1} parent=11 // pred_check
        %p217 = pneg %p125
      $region26: #{discriminator_sgan_forward.1} parent=11 // pred_check_branch
        %219 = sbr.rel (%p217) target = $region28
      $region27: #{discriminator_sgan_forward.1} parent=11 // pred_region
        _
      $region28: #{discriminator_sgan_forward.1} parent=11 // pred_fallthru
        _
      // Predicated region
      $region29: #{discriminator_sgan_forward.1} parent=11 // pred_check
        %p220 = pneg %p146
      $region30: #{discriminator_sgan_forward.1} parent=11 // pred_check_branch
        %222 = sbr.rel (%p220) target = $region32
      $region31: #{discriminator_sgan_forward.1} parent=11 // pred_region
        _
      $region32: #{discriminator_sgan_forward.1} parent=11 // pred_fallthru
        _
      // Predicated region
      $region33: #{discriminator_sgan_forward.1} parent=11 // pred_check
        %p223 = pneg %p167
      $region34: #{discriminator_sgan_forward.1} parent=11 // pred_check_branch
        %225 = sbr.rel (%p223) target = $region36
      $region35: #{discriminator_sgan_forward.1} parent=11 // pred_region
        _
      $region36: #{discriminator_sgan_forward.1} parent=11 // pred_fallthru
        _
    $region12: #{discriminator_sgan_forward.1} parent=5 // pred_fallthru
      _
    %p226 = scmp.lt.s32.totalorder %s15, 2
    // Predicated region
    $region37: #{discriminator_sgan_forward.1} parent=5 // pred_check
      %p227 = pneg %p226
    $region38: #{discriminator_sgan_forward.1} parent=5 // pred_check_branch
      %229 = sbr.rel (%p227) target = $region40
    $region39: #{discriminator_sgan_forward.1} parent=5 // pred_region
      // Predicated region
      $region41: #{discriminator_sgan_forward.1} parent=39 // pred_check
        %p230 = pneg %p35
      $region42: #{discriminator_sgan_forward.1} parent=39 // pred_check_branch
        %232 = sbr.rel (%p230) target = $region44
      $region43: #{discriminator_sgan_forward.1} parent=39 // pred_region
        %p233 = scmp.lt.s32.totalorder %s15, 1
        %s234 = scalar_select %p233, %s15, 1
        %s235 = smul.addr %s234, 28
        %s236 = smul.addr %s235, 8
        %s237 = scalar_lea.vmem %s0, %s236
      $region44: #{discriminator_sgan_forward.1} parent=39 // pred_fallthru
        _
    $region40: #{discriminator_sgan_forward.1} parent=5 // pred_fallthru
      _
    %p238 = scmp.le.s32.totalorder 1, %s15
    %p239 = scmp.lt.s32.totalorder %s15, 3
    %p240 = pnand %p238, %p239
    %p241 = pneg %p240
    // Predicated region
    $region45: #{discriminator_sgan_forward.1} parent=5 // pred_check
      _
    $region46: #{discriminator_sgan_forward.1} parent=5 // pred_check_branch
      %243 = sbr.rel (%p240) target = $region48
    $region47: #{discriminator_sgan_forward.1} parent=5 // pred_region
      %s244 = ssub.s32 %s15, 1
      %p245 = scmp.lt.s32.totalorder %s20, 1
      %s246 = scalar_select %p245, %s20, 1
      %s247 = smul.addr %s246, 28
      %s248 = smul.addr %s247, 8
      %s249 = scalar_lea.vmem %s0, %s248
      %p250 = pneg %p41
      %p251 = pneg %p38
      %p252 = pneg %p62
      %p253 = pneg %p59
      %p254 = pneg %p83
      %p255 = pneg %p80
      %p256 = pneg %p104
      %p257 = pneg %p101
      %p258 = pneg %p125
      %p259 = pneg %p122
      %p260 = pneg %p146
      %p261 = pneg %p143
      %p262 = pneg %p167
      %p263 = pneg %p164
      %p264 = pneg %p193
      %p265 = pneg %p190
      %p266 = scmp.lt.s32.totalorder %s20, 1
      %s267 = scalar_select %p266, %s20, 1
      %s268 = scalar_lea.vmem %s7, %s267
      %p269 = scmp.lt.s32.totalorder %s20, 1
      %s270 = scalar_select %p269, %s20, 1
      %s271 = smul.addr %s270, 28
      %s272 = smul.addr %s271, 8
      %s273 = scalar_lea.vmem %s0, %s272
      %p274 = scmp.lt.s32.totalorder %s20, 1
      %s275 = scalar_select %p274, %s20, 1
      %s276 = scalar_lea.vmem %s7, %s275
      %vm278 = vcmask 64512
      %279 = vst.msk [vmem:[#allocation2] sm:$0xff] %vm278, 0.0
      %vm280 = vcmask 57344
      %281 = vst.msk [vmem:[#allocation2 + $0x8] sm:$0x1] %vm280, 0.0
      %282 = vst.msk [vmem:[#allocation2 + $0x10] sm:$0xff] %vm278, 0.0
      %283 = vst.msk [vmem:[#allocation2 + $0x18] sm:$0x1] %vm280, 0.0
      %284 = vst.msk [vmem:[#allocation2 + $0x20] sm:$0xff] %vm278, 0.0
      %285 = vst.msk [vmem:[#allocation2 + $0x28] sm:$0x1] %vm280, 0.0
      %286 = vst.msk [vmem:[#allocation2 + $0x30] sm:$0xff] %vm278, 0.0
      %287 = vst.msk [vmem:[#allocation2 + $0x38] sm:$0x1] %vm280, 0.0
      %288 = vst.msk [vmem:[#allocation2 + $0x40] sm:$0xff] %vm278, 0.0
      %289 = vst.msk [vmem:[#allocation2 + $0x48] sm:$0x1] %vm280, 0.0
      %290 = vst.msk [vmem:[#allocation2 + $0x50] sm:$0xff] %vm278, 0.0
      %291 = vst.msk [vmem:[#allocation2 + $0x58] sm:$0x1] %vm280, 0.0
      %292 = vst.msk [vmem:[#allocation2 + $0x60] sm:$0xff] %vm278, 0.0
      %293 = vst.msk [vmem:[#allocation2 + $0x68] sm:$0x1] %vm280, 0.0
      %294 = vst.msk [vmem:[#allocation2 + $0x70] sm:$0xff] %vm278, 0.0
      %295 = vst.msk [vmem:[#allocation2 + $0x78] sm:$0x1] %vm280, 0.0
      %296 = vst.msk [vmem:[#allocation2 + $0x80] sm:$0xff] %vm278, 0.0
      %297 = vst.msk [vmem:[#allocation2 + $0x88] sm:$0x1] %vm280, 0.0
      %298 = vst.msk [vmem:[#allocation2 + $0x90] sm:$0xff] %vm278, 0.0
      %299 = vst.msk [vmem:[#allocation2 + $0x98] sm:$0x1] %vm280, 0.0
      %300 = vst.msk [vmem:[#allocation2 + $0xa0] sm:$0xff] %vm278, 0.0
      %301 = vst.msk [vmem:[#allocation2 + $0xa8] sm:$0x1] %vm280, 0.0
      %302 = vst.msk [vmem:[#allocation2 + $0xb0] sm:$0xff] %vm278, 0.0
      %303 = vst.msk [vmem:[#allocation2 + $0xb8] sm:$0x1] %vm280, 0.0
      %304 = vst.msk [vmem:[#allocation2 + $0xc0] sm:$0xff] %vm278, 0.0
      %305 = vst.msk [vmem:[#allocation2 + $0xc8] sm:$0x1] %vm280, 0.0
      %306 = vst.msk [vmem:[#allocation2 + $0xd0] sm:$0xff] %vm278, 0.0
      %307 = vst.msk [vmem:[#allocation2 + $0xd8] sm:$0x1] %vm280, 0.0
      %308 = vst.msk [vmem:[#allocation2 + $0xe0] sm:$0xff] %vm278, 0.0
      %309 = vst.msk [vmem:[#allocation2 + $0xe8] sm:$0x1] %vm280, 0.0
      %310 = vst.msk [vmem:[#allocation2 + $0xf0] sm:$0xff] %vm278, 0.0
      %311 = vst.msk [vmem:[#allocation2 + $0xf8] sm:$0x1] %vm280, 0.0
      %312 = vst.msk [vmem:[#allocation2 + $0x100] sm:$0xff] %vm278, 0.0
      %313 = vst.msk [vmem:[#allocation2 + $0x108] sm:$0x1] %vm280, 0.0
      %314 = vst.msk [vmem:[#allocation2 + $0x110] sm:$0xff] %vm278, 0.0
      %315 = vst.msk [vmem:[#allocation2 + $0x118] sm:$0x1] %vm280, 0.0
      %316 = vst.msk [vmem:[#allocation2 + $0x120] sm:$0xff] %vm278, 0.0
      %317 = vst.msk [vmem:[#allocation2 + $0x128] sm:$0x1] %vm280, 0.0
      %318 = vst.msk [vmem:[#allocation2 + $0x130] sm:$0xff] %vm278, 0.0
      %319 = vst.msk [vmem:[#allocation2 + $0x138] sm:$0x1] %vm280, 0.0
      %320 = vst.msk [vmem:[#allocation2 + $0x140] sm:$0xff] %vm278, 0.0
      %321 = vst.msk [vmem:[#allocation2 + $0x148] sm:$0x1] %vm280, 0.0
      %322 = vst.msk [vmem:[#allocation2 + $0x150] sm:$0xff] %vm278, 0.0
      %323 = vst.msk [vmem:[#allocation2 + $0x158] sm:$0x1] %vm280, 0.0
      %324 = vst.msk [vmem:[#allocation2 + $0x160] sm:$0xff] %vm278, 0.0
      %325 = vst.msk [vmem:[#allocation2 + $0x168] sm:$0x1] %vm280, 0.0
      %326 = vst.msk [vmem:[#allocation2 + $0x170] sm:$0xff] %vm278, 0.0
      %327 = vst.msk [vmem:[#allocation2 + $0x178] sm:$0x1] %vm280, 0.0
      %328 = vst.msk [vmem:[#allocation2 + $0x180] sm:$0xff] %vm278, 0.0
      %329 = vst.msk [vmem:[#allocation2 + $0x188] sm:$0x1] %vm280, 0.0
      %330 = vst.msk [vmem:[#allocation2 + $0x190] sm:$0xff] %vm278, 0.0
      %331 = vst.msk [vmem:[#allocation2 + $0x198] sm:$0x1] %vm280, 0.0
      %332 = vst.msk [vmem:[#allocation2 + $0x1a0] sm:$0xff] %vm278, 0.0
      %333 = vst.msk [vmem:[#allocation2 + $0x1a8] sm:$0x1] %vm280, 0.0
      %334 = vst.msk [vmem:[#allocation2 + $0x1b0] sm:$0xff] %vm278, 0.0
      %335 = vst.msk [vmem:[#allocation2 + $0x1b8] sm:$0x1] %vm280, 0.0
      %336 = vst.msk [vmem:[#allocation2 + $0x1c0] sm:$0xff] %vm278, 0.0
      %337 = vst.msk [vmem:[#allocation2 + $0x1c8] sm:$0x1] %vm280, 0.0
      %338 = vst.msk [vmem:[#allocation2 + $0x1d0] sm:$0xff] %vm278, 0.0
      %339 = vst.msk [vmem:[#allocation2 + $0x1d8] sm:$0x1] %vm280, 0.0
      %340 = vst.msk [vmem:[#allocation2 + $0x1e0] sm:$0xff] %vm278, 0.0
      %341 = vst.msk [vmem:[#allocation2 + $0x1e8] sm:$0x1] %vm280, 0.0
      %342 = vst.msk [vmem:[#allocation2 + $0x1f0] sm:$0xff] %vm278, 0.0
      %343 = vst.msk [vmem:[#allocation2 + $0x1f8] sm:$0x1] %vm280, 0.0
      %344 = vst.msk [vmem:[#allocation2 + $0x200] sm:$0xff] %vm278, 0.0
      %345 = vst.msk [vmem:[#allocation2 + $0x208] sm:$0x1] %vm280, 0.0
      %346 = vst.msk [vmem:[#allocation2 + $0x210] sm:$0xff] %vm278, 0.0
      %347 = vst.msk [vmem:[#allocation2 + $0x218] sm:$0x1] %vm280, 0.0
      %348 = vst.msk [vmem:[#allocation2 + $0x220] sm:$0xff] %vm278, 0.0
      %349 = vst.msk [vmem:[#allocation2 + $0x228] sm:$0x1] %vm280, 0.0
      %350 = vst.msk [vmem:[#allocation2 + $0x230] sm:$0xff] %vm278, 0.0
      %351 = vst.msk [vmem:[#allocation2 + $0x238] sm:$0x1] %vm280, 0.0
      %v352 = vld [vmem:[%s1] sm:$0xf]
      %v353 = vld [vmem:[%s1 + $0x4] sm:$0xf]
      %v354 = vld [vmem:[%s1 + $0x8] sm:$0xf]
      %v355 = vld [vmem:[%s1 + $0xc] sm:$0x1]
      %v356 = vld [vmem:[%s2] sm:$0x1]
      %v357 = vld [vmem:[%s273] sm:$0xff]
      %v358 = vld [vmem:[%s273 + $0x8] sm:$0xff]
      %v359 = vld [vmem:[%s273 + $0x10] sm:$0xff]
      %v360 = vld [vmem:[%s273 + $0x18] sm:$0xff]
      %v361 = vld [vmem:[%s273 + $0x20] sm:$0xff]
      %v362 = vld [vmem:[%s273 + $0x28] sm:$0xff]
      %v363 = vld [vmem:[%s273 + $0x30] sm:$0x1]
      %v364 = vpack.c.bf16 %v358, %v357
      %v365 = vpack.c.bf16 %v360, %v359
      %v366 = vpack.c.bf16 %v362, %v361
      %v367 = vpack.c.bf16 %v363, %v363
      %v369 = vlaneseq
      %v370 = vshrl.u32 %v369, 7
      %v371 = vsub.s32 0, %v370
      %v372 = vrot.slane %v356, %v371
      %v378 = vunpack.c.l.b16 %v352
      %v379 = vunpack.c.l.b16 %v353
      %v380 = vunpack.c.l.b16 %v354
      %v381 = vunpack.c.l.b16 %v355
      %v382 = vpack.c.b16 %v379, %v378
      %v383 = vpack.c.b16 %v381, %v380
      %vm385 = vcmask 203776
      %v387 = vsel %vm385, %v364, 0
      %v390 = vsel %vm385, %v365, 0
      %v393 = vsel %vm385, %v366, 0
      %v396 = vsel %vm385, %v367, 0
      %vm398 = vcmask 1043456
      %vm399 = vcmask 1044480
      %v400 = vsel %vm398, 4294967295, 65535
      %v401 = vsel %vm399, %v400, 0
      %v403 = vand.u32 %v383, %v401
      %405 = vmatprep.subr.bf16.mxu0 0
      %406 = vmatpush1.bf16.msra.mxu0 0
      %407 = vmatprep.subr.bf16.mxu0 0
      %408 = vmatpush1.bf16.msra.mxu0 0
      %409 = vmatprep.subr.bf16.mxu0 0
      %410 = vmatpush1.bf16.msra.mxu0 0
      %411 = vmatprep.subr.bf16.mxu0 0
      %412 = vmatpush1.bf16.msra.mxu0 0
      %413 = vmatprep.subr.bf16.mxu0 0
      %414 = vmatpush1.bf16.msra.mxu0 0
      %415 = vmatprep.subr.bf16.mxu0 0
      %416 = vmatpush1.bf16.msra.mxu0 0
      %417 = vmatprep.subr.bf16.mxu0 0
      %418 = vmatpush1.bf16.msra.mxu0 %v403
      %419 = vmatprep.subr.bf16.mxu0 0
      %420 = vmatpush1.bf16.msra.mxu0 %v382
      %421 = vmatprep.subr.bf16.mxu0 0
      %422 = vmatpush2.bf16.msra.mxu0 0
      %423 = vmatprep.subr.bf16.mxu0 0
      %424 = vmatpush2.bf16.msra.mxu0 0
      %425 = vmatprep.subr.bf16.mxu0 0
      %426 = vmatpush2.bf16.msra.mxu0 0
      %427 = vmatprep.subr.bf16.mxu0 0
      %428 = vmatpush2.bf16.msra.mxu0 0
      %429 = vmatprep.subr.bf16.mxu0 0
      %430 = vmatpush2.bf16.msra.mxu0 0
      %431 = vmatprep.subr.bf16.mxu0 0
      %432 = vmatpush2.bf16.msra.mxu0 0
      %433 = vmatprep.subr.bf16.mxu0 0
      %434 = vmatpush2.bf16.msra.mxu0 0
      %435 = vmatprep.subr.bf16.mxu0 0
      %436 = vmatpush2.bf16.msra.mxu0 0
      %437 = vmatprep.mubr.bf16.mxu0 0
      %438 = vmatmul.mubr.bf16.gmra.mxu0 %v387
      %v439 = vpop.f32.mrf.mxu0
      %v440 = vadd.f32 %v372, %v439
      %v441 = vpop.f32.mrf.mxu0
      %v442 = vpop.f32.mrf.mxu0
      %v443 = vadd.f32 %v372, %v442
      %v444 = vpop.f32.mrf.mxu0
      %445 = vmatprep.mubr.bf16.mxu0 0
      %446 = vmatmul.mubr.bf16.gmra.mxu0 %v390
      %v447 = vpop.f32.mrf.mxu0
      %v448 = vadd.f32 %v372, %v447
      %v449 = vpop.f32.mrf.mxu0
      %v450 = vpop.f32.mrf.mxu0
      %v451 = vadd.f32 %v372, %v450
      %v452 = vpop.f32.mrf.mxu0
      %453 = vmatprep.mubr.bf16.mxu0 0
      %454 = vmatmul.mubr.bf16.gmra.mxu0 %v393
      %v455 = vpop.f32.mrf.mxu0
      %v456 = vadd.f32 %v372, %v455
      %v457 = vpop.f32.mrf.mxu0
      %v458 = vpop.f32.mrf.mxu0
      %v459 = vadd.f32 %v372, %v458
      %v460 = vpop.f32.mrf.mxu0
      %461 = vmatprep.mubr.bf16.mxu0 0
      %462 = vmatmul.mubr.bf16.gmra.mxu0 %v396
      %v463 = vpop.f32.mrf.mxu0
      %v464 = vadd.f32 %v372, %v463
      %v465 = vpop.f32.mrf.mxu0
      %v466 = vpop.f32.mrf.mxu0
      %v467 = vpop.f32.mrf.mxu0
      %468 = vdwg.mxu0
      %vm469 = vcmp.ge.f32.partialorder %v440, 0.0
      %vm470 = vcmp.ge.f32.partialorder %v443, 0.0
      %vm471 = vcmp.ge.f32.partialorder %v448, 0.0
      %vm472 = vcmp.ge.f32.partialorder %v451, 0.0
      %vm473 = vcmp.ge.f32.partialorder %v456, 0.0
      %vm474 = vcmp.ge.f32.partialorder %v459, 0.0
      %vm475 = vcmp.ge.f32.partialorder %v464, 0.0
      %v476 = vmul.f32 %v440, 0.3
      %v477 = vmul.f32 %v443, 0.3
      %v478 = vmul.f32 %v448, 0.3
      %v479 = vmul.f32 %v451, 0.3
      %v480 = vmul.f32 %v456, 0.3
      %v481 = vmul.f32 %v459, 0.3
      %v482 = vmul.f32 %v464, 0.3
      %v483 = vsel %vm469, %v440, %v476
      %v484 = vsel %vm470, %v443, %v477
      %v485 = vsel %vm471, %v448, %v478
      %v486 = vsel %vm472, %v451, %v479
      %v487 = vsel %vm473, %v456, %v480
      %v488 = vsel %vm474, %v459, %v481
      %v489 = vsel %vm475, %v464, %v482
      %s490 = scalar_lea.vmem [#allocation2], 16
      %vm491 = vcmask 63488
      %492 = vst.msk [vmem:[%s490 + $0x1] sm:$0x7f] %vm491, %v483
      %s493 = scalar_lea.vmem [#allocation2], 32
      %vm494 = vcmask 64519
      %495 = vst.msk [vmem:[%s493 - $0x6] sm:$0x80] %vm494, %v483
      %vm496 = vcmask 62464
      %497 = vst.msk [vmem:[%s493 + $0x2] sm:$0x3f] %vm496, %v484
      %s498 = scalar_lea.vmem [#allocation2], 48
      %vm499 = vcmask 64518
      %500 = vst.msk [vmem:[%s498 - $0x5] sm:$0xc0] %vm499, %v484
      %vm501 = vcmask 61440
      %502 = vst.msk [vmem:[%s498 + $0x3] sm:$0x1f] %vm501, %v485
      %s503 = scalar_lea.vmem [#allocation2], 64
      %vm504 = vcmask 64517
      %505 = vst.msk [vmem:[%s503 - $0x4] sm:$0xe0] %vm504, %v485
      %vm506 = vcmask 60416
      %507 = vst.msk [vmem:[%s503 + $0x4] sm:$0xf] %vm506, %v486
      %s508 = scalar_lea.vmem [#allocation2], 80
      %vm509 = vcmask 64516
      %510 = vst.msk [vmem:[%s508 - $0x3] sm:$0xf0] %vm509, %v486
      %vm511 = vcmask 59392
      %512 = vst.msk [vmem:[%s508 + $0x5] sm:$0x7] %vm511, %v487
      %s513 = scalar_lea.vmem [#allocation2], 96
      %vm514 = vcmask 64515
      %515 = vst.msk [vmem:[%s513 - $0x2] sm:$0xf8] %vm514, %v487
      %vm516 = vcmask 58368
      %517 = vst.msk [vmem:[%s513 + $0x6] sm:$0x3] %vm516, %v488
      %s518 = scalar_lea.vmem [#allocation2], 112
      %vm519 = vcmask 64514
      %520 = vst.msk [vmem:[%s518 - $0x1] sm:$0xfc] %vm519, %v488
      %521 = vst.msk [vmem:[%s518 + $0x7] sm:$0x1] %vm280, %v489
      %s522 = scalar_lea.vmem %s273, 56
      %v523 = vld [vmem:[%s522] sm:$0xff]
      %v524 = vld [vmem:[%s522 + $0x8] sm:$0xff]
      %v525 = vld [vmem:[%s522 + $0x10] sm:$0xff]
      %v526 = vld [vmem:[%s522 + $0x18] sm:$0xff]
      %v527 = vld [vmem:[%s522 + $0x20] sm:$0xff]
      %v528 = vld [vmem:[%s522 + $0x28] sm:$0xff]
      %v529 = vld [vmem:[%s522 + $0x30] sm:$0x1]
      %v530 = vpack.c.bf16 %v524, %v523
      %v531 = vpack.c.bf16 %v526, %v525
      %v532 = vpack.c.bf16 %v528, %v527
      %v533 = vpack.c.bf16 %v529, %v529
      %v535 = vsel %vm385, %v530, 0
      %v538 = vsel %vm385, %v531, 0
      %v541 = vsel %vm385, %v532, 0
      %v544 = vsel %vm385, %v533, 0
      %546 = vmatprep.subr.bf16.mxu0 0
      %547 = vmatpush1.bf16.msra.mxu0 0
      %548 = vmatprep.subr.bf16.mxu0 0
      %549 = vmatpush1.bf16.msra.mxu0 0
      %550 = vmatprep.subr.bf16.mxu0 0
      %551 = vmatpush1.bf16.msra.mxu0 0
      %552 = vmatprep.subr.bf16.mxu0 0
      %553 = vmatpush1.bf16.msra.mxu0 0
      %554 = vmatprep.subr.bf16.mxu0 0
      %555 = vmatpush1.bf16.msra.mxu0 0
      %556 = vmatprep.subr.bf16.mxu0 0
      %557 = vmatpush1.bf16.msra.mxu0 0
      %558 = vmatprep.subr.bf16.mxu0 0
      %559 = vmatpush1.bf16.msra.mxu0 %v403
      %560 = vmatprep.subr.bf16.mxu0 0
      %561 = vmatpush1.bf16.msra.mxu0 %v382
      %562 = vmatprep.subr.bf16.mxu0 0
      %563 = vmatpush2.bf16.msra.mxu0 0
      %564 = vmatprep.subr.bf16.mxu0 0
      %565 = vmatpush2.bf16.msra.mxu0 0
      %566 = vmatprep.subr.bf16.mxu0 0
      %567 = vmatpush2.bf16.msra.mxu0 0
      %568 = vmatprep.subr.bf16.mxu0 0
      %569 = vmatpush2.bf16.msra.mxu0 0
      %570 = vmatprep.subr.bf16.mxu0 0
      %571 = vmatpush2.bf16.msra.mxu0 0
      %572 = vmatprep.subr.bf16.mxu0 0
      %573 = vmatpush2.bf16.msra.mxu0 0
      %574 = vmatprep.subr.bf16.mxu0 0
      %575 = vmatpush2.bf16.msra.mxu0 0
      %576 = vmatprep.subr.bf16.mxu0 0
      %577 = vmatpush2.bf16.msra.mxu0 0
      %578 = vmatprep.mubr.bf16.mxu0 0
      %579 = vmatmul.mubr.bf16.gmra.mxu0 %v535
      %v580 = vpop.f32.mrf.mxu0
      %v581 = vadd.f32 %v372, %v580
      %v582 = vpop.f32.mrf.mxu0
      %v583 = vpop.f32.mrf.mxu0
      %v584 = vadd.f32 %v372, %v583
      %v585 = vpop.f32.mrf.mxu0
      %586 = vmatprep.mubr.bf16.mxu0 0
      %587 = vmatmul.mubr.bf16.gmra.mxu0 %v538
      %v588 = vpop.f32.mrf.mxu0
      %v589 = vadd.f32 %v372, %v588
      %v590 = vpop.f32.mrf.mxu0
      %v591 = vpop.f32.mrf.mxu0
      %v592 = vadd.f32 %v372, %v591
      %v593 = vpop.f32.mrf.mxu0
      %594 = vmatprep.mubr.bf16.mxu0 0
      %595 = vmatmul.mubr.bf16.gmra.mxu0 %v541
      %v596 = vpop.f32.mrf.mxu0
      %v597 = vadd.f32 %v372, %v596
      %v598 = vpop.f32.mrf.mxu0
      %v599 = vpop.f32.mrf.mxu0
      %v600 = vadd.f32 %v372, %v599
      %v601 = vpop.f32.mrf.mxu0
      %602 = vmatprep.mubr.bf16.mxu0 0
      %603 = vmatmul.mubr.bf16.gmra.mxu0 %v544
      %v604 = vpop.f32.mrf.mxu0
      %v605 = vadd.f32 %v372, %v604
      %v606 = vpop.f32.mrf.mxu0
      %v607 = vpop.f32.mrf.mxu0
      %v608 = vpop.f32.mrf.mxu0
      %609 = vdwg.mxu0
      %vm610 = vcmp.ge.f32.partialorder %v581, 0.0
      %vm611 = vcmp.ge.f32.partialorder %v584, 0.0
      %vm612 = vcmp.ge.f32.partialorder %v589, 0.0
      %vm613 = vcmp.ge.f32.partialorder %v592, 0.0
      %vm614 = vcmp.ge.f32.partialorder %v597, 0.0
      %vm615 = vcmp.ge.f32.partialorder %v600, 0.0
      %vm616 = vcmp.ge.f32.partialorder %v605, 0.0
      %v617 = vmul.f32 %v581, 0.3
      %v618 = vmul.f32 %v584, 0.3
      %v619 = vmul.f32 %v589, 0.3
      %v620 = vmul.f32 %v592, 0.3
      %v621 = vmul.f32 %v597, 0.3
      %v622 = vmul.f32 %v600, 0.3
      %v623 = vmul.f32 %v605, 0.3
      %v624 = vsel %vm610, %v581, %v617
      %v625 = vsel %vm611, %v584, %v618
      %v626 = vsel %vm612, %v589, %v619
      %v627 = vsel %vm613, %v592, %v620
      %v628 = vsel %vm614, %v597, %v621
      %v629 = vsel %vm615, %v600, %v622
      %v630 = vsel %vm616, %v605, %v623
      %s631 = scalar_lea.vmem [#allocation2], 160
      %632 = vst.msk [vmem:[%s631 + $0x1] sm:$0x7f] %vm491, %v624
      %s633 = scalar_lea.vmem [#allocation2], 176
      %634 = vst.msk [vmem:[%s633 - $0x6] sm:$0x80] %vm494, %v624
      %635 = vst.msk [vmem:[%s633 + $0x2] sm:$0x3f] %vm496, %v625
      %s636 = scalar_lea.vmem [#allocation2], 192
      %637 = vst.msk [vmem:[%s636 - $0x5] sm:$0xc0] %vm499, %v625
      %638 = vst.msk [vmem:[%s636 + $0x3] sm:$0x1f] %vm501, %v626
      %s639 = scalar_lea.vmem [#allocation2], 208
      %640 = vst.msk [vmem:[%s639 - $0x4] sm:$0xe0] %vm504, %v626
      %641 = vst.msk [vmem:[%s639 + $0x4] sm:$0xf] %vm506, %v627
      %s642 = scalar_lea.vmem [#allocation2], 224
      %643 = vst.msk [vmem:[%s642 - $0x3] sm:$0xf0] %vm509, %v627
      %644 = vst.msk [vmem:[%s642 + $0x5] sm:$0x7] %vm511, %v628
      %s645 = scalar_lea.vmem [#allocation2], 240
      %646 = vst.msk [vmem:[%s645 - $0x2] sm:$0xf8] %vm514, %v628
      %647 = vst.msk [vmem:[%s645 + $0x6] sm:$0x3] %vm516, %v629
      %s648 = scalar_lea.vmem [#allocation2], 256
      %649 = vst.msk [vmem:[%s648 - $0x1] sm:$0xfc] %vm519, %v629
      %650 = vst.msk [vmem:[%s648 + $0x7] sm:$0x1] %vm280, %v630
      %s651 = scalar_lea.vmem %s273, 112
      %v652 = vld [vmem:[%s651] sm:$0xff]
      %v653 = vld [vmem:[%s651 + $0x8] sm:$0xff]
      %v654 = vld [vmem:[%s651 + $0x10] sm:$0xff]
      %v655 = vld [vmem:[%s651 + $0x18] sm:$0xff]
      %v656 = vld [vmem:[%s651 + $0x20] sm:$0xff]
      %v657 = vld [vmem:[%s651 + $0x28] sm:$0xff]
      %v658 = vld [vmem:[%s651 + $0x30] sm:$0x1]
      %v659 = vpack.c.bf16 %v653, %v652
      %v660 = vpack.c.bf16 %v655, %v654
      %v661 = vpack.c.bf16 %v657, %v656
      %v662 = vpack.c.bf16 %v658, %v658
      %v664 = vsel %vm385, %v659, 0
      %v667 = vsel %vm385, %v660, 0
      %v670 = vsel %vm385, %v661, 0
      %v673 = vsel %vm385, %v662, 0
      %675 = vmatprep.subr.bf16.mxu0 0
      %676 = vmatpush1.bf16.msra.mxu0 0
      %677 = vmatprep.subr.bf16.mxu0 0
      %678 = vmatpush1.bf16.msra.mxu0 0
      %679 = vmatprep.subr.bf16.mxu0 0
      %680 = vmatpush1.bf16.msra.mxu0 0
      %681 = vmatprep.subr.bf16.mxu0 0
      %682 = vmatpush1.bf16.msra.mxu0 0
      %683 = vmatprep.subr.bf16.mxu0 0
      %684 = vmatpush1.bf16.msra.mxu0 0
      %685 = vmatprep.subr.bf16.mxu0 0
      %686 = vmatpush1.bf16.msra.mxu0 0
      %687 = vmatprep.subr.bf16.mxu0 0
      %688 = vmatpush1.bf16.msra.mxu0 %v403
      %689 = vmatprep.subr.bf16.mxu0 0
      %690 = vmatpush1.bf16.msra.mxu0 %v382
      %691 = vmatprep.subr.bf16.mxu0 0
      %692 = vmatpush2.bf16.msra.mxu0 0
      %693 = vmatprep.subr.bf16.mxu0 0
      %694 = vmatpush2.bf16.msra.mxu0 0
      %695 = vmatprep.subr.bf16.mxu0 0
      %696 = vmatpush2.bf16.msra.mxu0 0
      %697 = vmatprep.subr.bf16.mxu0 0
      %698 = vmatpush2.bf16.msra.mxu0 0
      %699 = vmatprep.subr.bf16.mxu0 0
      %700 = vmatpush2.bf16.msra.mxu0 0
      %701 = vmatprep.subr.bf16.mxu0 0
      %702 = vmatpush2.bf16.msra.mxu0 0
      %703 = vmatprep.subr.bf16.mxu0 0
      %704 = vmatpush2.bf16.msra.mxu0 0
      %705 = vmatprep.subr.bf16.mxu0 0
      %706 = vmatpush2.bf16.msra.mxu0 0
      %707 = vmatprep.mubr.bf16.mxu0 0
      %708 = vmatmul.mubr.bf16.gmra.mxu0 %v664
      %v709 = vpop.f32.mrf.mxu0
      %v710 = vadd.f32 %v372, %v709
      %v711 = vpop.f32.mrf.mxu0
      %v712 = vpop.f32.mrf.mxu0
      %v713 = vadd.f32 %v372, %v712
      %v714 = vpop.f32.mrf.mxu0
      %715 = vmatprep.mubr.bf16.mxu0 0
      %716 = vmatmul.mubr.bf16.gmra.mxu0 %v667
      %v717 = vpop.f32.mrf.mxu0
      %v718 = vadd.f32 %v372, %v717
      %v719 = vpop.f32.mrf.mxu0
      %v720 = vpop.f32.mrf.mxu0
      %v721 = vadd.f32 %v372, %v720
      %v722 = vpop.f32.mrf.mxu0
      %723 = vmatprep.mubr.bf16.mxu0 0
      %724 = vmatmul.mubr.bf16.gmra.mxu0 %v670
      %v725 = vpop.f32.mrf.mxu0
      %v726 = vadd.f32 %v372, %v725
      %v727 = vpop.f32.mrf.mxu0
      %v728 = vpop.f32.mrf.mxu0
      %v729 = vadd.f32 %v372, %v728
      %v730 = vpop.f32.mrf.mxu0
      %731 = vmatprep.mubr.bf16.mxu0 0
      %732 = vmatmul.mubr.bf16.gmra.mxu0 %v673
      %v733 = vpop.f32.mrf.mxu0
      %v734 = vadd.f32 %v372, %v733
      %v735 = vpop.f32.mrf.mxu0
      %v736 = vpop.f32.mrf.mxu0
      %v737 = vpop.f32.mrf.mxu0
      %738 = vdwg.mxu0
      %vm739 = vcmp.ge.f32.partialorder %v710, 0.0
      %vm740 = vcmp.ge.f32.partialorder %v713, 0.0
      %vm741 = vcmp.ge.f32.partialorder %v718, 0.0
      %vm742 = vcmp.ge.f32.partialorder %v721, 0.0
      %vm743 = vcmp.ge.f32.partialorder %v726, 0.0
      %vm744 = vcmp.ge.f32.partialorder %v729, 0.0
      %vm745 = vcmp.ge.f32.partialorder %v734, 0.0
      %v746 = vmul.f32 %v710, 0.3
      %v747 = vmul.f32 %v713, 0.3
      %v748 = vmul.f32 %v718, 0.3
      %v749 = vmul.f32 %v721, 0.3
      %v750 = vmul.f32 %v726, 0.3
      %v751 = vmul.f32 %v729, 0.3
      %v752 = vmul.f32 %v734, 0.3
      %v753 = vsel %vm739, %v710, %v746
      %v754 = vsel %vm740, %v713, %v747
      %v755 = vsel %vm741, %v718, %v748
      %v756 = vsel %vm742, %v721, %v749
      %v757 = vsel %vm743, %v726, %v750
      %v758 = vsel %vm744, %v729, %v751
      %v759 = vsel %vm745, %v734, %v752
      %s760 = scalar_lea.vmem [#allocation2], 304
      %761 = vst.msk [vmem:[%s760 + $0x1] sm:$0x7f] %vm491, %v753
      %s762 = scalar_lea.vmem [#allocation2], 320
      %763 = vst.msk [vmem:[%s762 - $0x6] sm:$0x80] %vm494, %v753
      %764 = vst.msk [vmem:[%s762 + $0x2] sm:$0x3f] %vm496, %v754
      %s765 = scalar_lea.vmem [#allocation2], 336
      %766 = vst.msk [vmem:[%s765 - $0x5] sm:$0xc0] %vm499, %v754
      %767 = vst.msk [vmem:[%s765 + $0x3] sm:$0x1f] %vm501, %v755
      %s768 = scalar_lea.vmem [#allocation2], 352
      %769 = vst.msk [vmem:[%s768 - $0x4] sm:$0xe0] %vm504, %v755
      %770 = vst.msk [vmem:[%s768 + $0x4] sm:$0xf] %vm506, %v756
      %s771 = scalar_lea.vmem [#allocation2], 368
      %772 = vst.msk [vmem:[%s771 - $0x3] sm:$0xf0] %vm509, %v756
      %773 = vst.msk [vmem:[%s771 + $0x5] sm:$0x7] %vm511, %v757
      %s774 = scalar_lea.vmem [#allocation2], 384
      %775 = vst.msk [vmem:[%s774 - $0x2] sm:$0xf8] %vm514, %v757
      %776 = vst.msk [vmem:[%s774 + $0x6] sm:$0x3] %vm516, %v758
      %s777 = scalar_lea.vmem [#allocation2], 400
      %778 = vst.msk [vmem:[%s777 - $0x1] sm:$0xfc] %vm519, %v758
      %779 = vst.msk [vmem:[%s777 + $0x7] sm:$0x1] %vm280, %v759
      %s780 = scalar_lea.vmem %s273, 168
      %v781 = vld [vmem:[%s780] sm:$0xff]
      %v782 = vld [vmem:[%s780 + $0x8] sm:$0xff]
      %v783 = vld [vmem:[%s780 + $0x10] sm:$0xff]
      %v784 = vld [vmem:[%s780 + $0x18] sm:$0xff]
      %v785 = vld [vmem:[%s780 + $0x20] sm:$0xff]
      %v786 = vld [vmem:[%s780 + $0x28] sm:$0xff]
      %v787 = vld [vmem:[%s780 + $0x30] sm:$0x1]
      %v788 = vpack.c.bf16 %v782, %v781
      %v789 = vpack.c.bf16 %v784, %v783
      %v790 = vpack.c.bf16 %v786, %v785
      %v791 = vpack.c.bf16 %v787, %v787
      %v793 = vsel %vm385, %v788, 0
      %v796 = vsel %vm385, %v789, 0
      %v799 = vsel %vm385, %v790, 0
      %v802 = vsel %vm385, %v791, 0
      %804 = vmatprep.subr.bf16.mxu0 0
      %805 = vmatpush1.bf16.msra.mxu0 0
      %806 = vmatprep.subr.bf16.mxu0 0
      %807 = vmatpush1.bf16.msra.mxu0 0
      %808 = vmatprep.subr.bf16.mxu0 0
      %809 = vmatpush1.bf16.msra.mxu0 0
      %810 = vmatprep.subr.bf16.mxu0 0
      %811 = vmatpush1.bf16.msra.mxu0 0
      %812 = vmatprep.subr.bf16.mxu0 0
      %813 = vmatpush1.bf16.msra.mxu0 0
      %814 = vmatprep.subr.bf16.mxu0 0
      %815 = vmatpush1.bf16.msra.mxu0 0
      %816 = vmatprep.subr.bf16.mxu0 0
      %817 = vmatpush1.bf16.msra.mxu0 %v403
      %818 = vmatprep.subr.bf16.mxu0 0
      %819 = vmatpush1.bf16.msra.mxu0 %v382
      %820 = vmatprep.subr.bf16.mxu0 0
      %821 = vmatpush2.bf16.msra.mxu0 0
      %822 = vmatprep.subr.bf16.mxu0 0
      %823 = vmatpush2.bf16.msra.mxu0 0
      %824 = vmatprep.subr.bf16.mxu0 0
      %825 = vmatpush2.bf16.msra.mxu0 0
      %826 = vmatprep.subr.bf16.mxu0 0
      %827 = vmatpush2.bf16.msra.mxu0 0
      %828 = vmatprep.subr.bf16.mxu0 0
      %829 = vmatpush2.bf16.msra.mxu0 0
      %830 = vmatprep.subr.bf16.mxu0 0
      %831 = vmatpush2.bf16.msra.mxu0 0
      %832 = vmatprep.subr.bf16.mxu0 0
      %833 = vmatpush2.bf16.msra.mxu0 0
      %834 = vmatprep.subr.bf16.mxu0 0
      %835 = vmatpush2.bf16.msra.mxu0 0
      %836 = vmatprep.mubr.bf16.mxu0 0
      %837 = vmatmul.mubr.bf16.gmra.mxu0 %v793
      %v838 = vpop.f32.mrf.mxu0
      %v839 = vadd.f32 %v372, %v838
      %v840 = vpop.f32.mrf.mxu0
      %v841 = vpop.f32.mrf.mxu0
      %v842 = vadd.f32 %v372, %v841
      %v843 = vpop.f32.mrf.mxu0
      %844 = vmatprep.mubr.bf16.mxu0 0
      %845 = vmatmul.mubr.bf16.gmra.mxu0 %v796
      %v846 = vpop.f32.mrf.mxu0
      %v847 = vadd.f32 %v372, %v846
      %v848 = vpop.f32.mrf.mxu0
      %v849 = vpop.f32.mrf.mxu0
      %v850 = vadd.f32 %v372, %v849
      %v851 = vpop.f32.mrf.mxu0
      %852 = vmatprep.mubr.bf16.mxu0 0
      %853 = vmatmul.mubr.bf16.gmra.mxu0 %v799
      %v854 = vpop.f32.mrf.mxu0
      %v855 = vadd.f32 %v372, %v854
      %v856 = vpop.f32.mrf.mxu0
      %v857 = vpop.f32.mrf.mxu0
      %v858 = vadd.f32 %v372, %v857
      %v859 = vpop.f32.mrf.mxu0
      %860 = vmatprep.mubr.bf16.mxu0 0
      %861 = vmatmul.mubr.bf16.gmra.mxu0 %v802
      %v862 = vpop.f32.mrf.mxu0
      %v863 = vadd.f32 %v372, %v862
      %v864 = vpop.f32.mrf.mxu0
      %v865 = vpop.f32.mrf.mxu0
      %v866 = vpop.f32.mrf.mxu0
      %867 = vdwg.mxu0
      %vm868 = vcmp.ge.f32.partialorder %v839, 0.0
      %vm869 = vcmp.ge.f32.partialorder %v842, 0.0
      %vm870 = vcmp.ge.f32.partialorder %v847, 0.0
      %vm871 = vcmp.ge.f32.partialorder %v850, 0.0
      %vm872 = vcmp.ge.f32.partialorder %v855, 0.0
      %vm873 = vcmp.ge.f32.partialorder %v858, 0.0
      %vm874 = vcmp.ge.f32.partialorder %v863, 0.0
      %v875 = vmul.f32 %v839, 0.3
      %v876 = vmul.f32 %v842, 0.3
      %v877 = vmul.f32 %v847, 0.3
      %v878 = vmul.f32 %v850, 0.3
      %v879 = vmul.f32 %v855, 0.3
      %v880 = vmul.f32 %v858, 0.3
      %v881 = vmul.f32 %v863, 0.3
      %v882 = vsel %vm868, %v839, %v875
      %v883 = vsel %vm869, %v842, %v876
      %v884 = vsel %vm870, %v847, %v877
      %v885 = vsel %vm871, %v850, %v878
      %v886 = vsel %vm872, %v855, %v879
      %v887 = vsel %vm873, %v858, %v880
      %v888 = vsel %vm874, %v863, %v881
      %s889 = scalar_lea.vmem [#allocation2], 448
      %890 = vst.msk [vmem:[%s889 + $0x1] sm:$0x7f] %vm491, %v882
      %s891 = scalar_lea.vmem [#allocation2], 464
      %892 = vst.msk [vmem:[%s891 - $0x6] sm:$0x80] %vm494, %v882
      %893 = vst.msk [vmem:[%s891 + $0x2] sm:$0x3f] %vm496, %v883
      %s894 = scalar_lea.vmem [#allocation2], 480
      %895 = vst.msk [vmem:[%s894 - $0x5] sm:$0xc0] %vm499, %v883
      %896 = vst.msk [vmem:[%s894 + $0x3] sm:$0x1f] %vm501, %v884
      %s897 = scalar_lea.vmem [#allocation2], 496
      %898 = vst.msk [vmem:[%s897 - $0x4] sm:$0xe0] %vm504, %v884
      %899 = vst.msk [vmem:[%s897 + $0x4] sm:$0xf] %vm506, %v885
      %s900 = scalar_lea.vmem [#allocation2], 512
      %901 = vst.msk [vmem:[%s900 - $0x3] sm:$0xf0] %vm509, %v885
      %902 = vst.msk [vmem:[%s900 + $0x5] sm:$0x7] %vm511, %v886
      %s903 = scalar_lea.vmem [#allocation2], 528
      %904 = vst.msk [vmem:[%s903 - $0x2] sm:$0xf8] %vm514, %v886
      %905 = vst.msk [vmem:[%s903 + $0x6] sm:$0x3] %vm516, %v887
      %s906 = scalar_lea.vmem [#allocation2], 544
      %907 = vst.msk [vmem:[%s906 - $0x1] sm:$0xfc] %vm519, %v887
      %908 = vst.msk [vmem:[%s906 + $0x7] sm:$0x1] %vm280, %v888
      %v909 = vld [vmem:[%s3] sm:$0xf]
      %v910 = vld [vmem:[%s3 + $0x4] sm:$0xf]
      %v911 = vld [vmem:[%s3 + $0x8] sm:$0xf]
      %v912 = vld [vmem:[%s3 + $0xc] sm:$0xf]
      %v913 = vld [vmem:[%s3 + $0x10] sm:$0xf]
      %v914 = vld [vmem:[%s3 + $0x14] sm:$0xf]
      %v915 = vld [vmem:[%s3 + $0x18] sm:$0xf]
      %v916 = vld [vmem:[%s3 + $0x1c] sm:$0xf]
      %v917 = vld [vmem:[%s3 + $0x20] sm:$0xf]
      %v918 = vld [vmem:[%s3 + $0x24] sm:$0xf]
      %v919 = vld [vmem:[%s3 + $0x28] sm:$0xf]
      %v920 = vld [vmem:[%s3 + $0x2c] sm:$0xf]
      %v921 = vld [vmem:[%s3 + $0x30] sm:$0xf]
      %v922 = vld [vmem:[%s3 + $0x34] sm:$0xf]
      %v923 = vld [vmem:[%s3 + $0x38] sm:$0xf]
      %v924 = vld [vmem:[%s3 + $0x3c] sm:$0xf]
      %v925 = vld [vmem:[%s3 + $0x40] sm:$0xf]
      %v926 = vld [vmem:[%s3 + $0x44] sm:$0xf]
      %v927 = vld [vmem:[%s3 + $0x48] sm:$0xf]
      %v928 = vld [vmem:[%s3 + $0x4c] sm:$0xf]
      %v929 = vld [vmem:[%s3 + $0x50] sm:$0xf]
      %v930 = vld [vmem:[%s3 + $0x54] sm:$0xf]
      %v931 = vld [vmem:[%s3 + $0x58] sm:$0xf]
      %v932 = vld [vmem:[%s3 + $0x5c] sm:$0xf]
      %v933 = vld [vmem:[%s3 + $0x60] sm:$0xf]
      %v934 = vld [vmem:[%s4] sm:$0x1]
      %v935 = vld [vmem:[%s5] sm:$0xff]
      %v936 = vld [vmem:[%s5 + $0x8] sm:$0xff]
      %v937 = vld [vmem:[%s5 + $0x10] sm:$0xff]
      %v938 = vld [vmem:[%s5 + $0x18] sm:$0xff]
      %v939 = vld [vmem:[%s5 + $0x20] sm:$0xff]
      %v940 = vld [vmem:[%s5 + $0x28] sm:$0xff]
      %v941 = vld [vmem:[%s5 + $0x30] sm:$0x1]
      %v942 = vld [vmem:[#allocation2] sm:$0x7f]
      %s943 = scalar_lea.vmem [#allocation2], 144
      %v944 = vld [vmem:[%s943] sm:$0x7f]
      %v945 = vld [vmem:[#allocation2 + $0x1] sm:$0x7f]
      %v946 = vld [vmem:[%s943 + $0x1] sm:$0x7f]
      %v947 = vld [vmem:[#allocation2 + $0x2] sm:$0x7f]
      %s948 = scalar_lea.vmem [#allocation2], 288
      %v949 = vld [vmem:[%s948] sm:$0x7f]
      %s950 = scalar_lea.vmem [#allocation2], 432
      %v951 = vld [vmem:[%s950] sm:$0x7f]
      %v952 = vld [vmem:[%s948 + $0x1] sm:$0x7f]
      %v953 = vld [vmem:[%s950 + $0x1] sm:$0x7f]
      %v954 = vld [vmem:[%s948 + $0x2] sm:$0x7f]
      %v955 = vld [vmem:[%s490] sm:$0x7f]
      %v956 = vld [vmem:[%s631] sm:$0x7f]
      %v957 = vld [vmem:[%s490 + $0x1] sm:$0x7f]
      %v958 = vld [vmem:[%s631 + $0x1] sm:$0x7f]
      %v959 = vld [vmem:[%s490 + $0x2] sm:$0x7f]
      %v960 = vld [vmem:[%s760] sm:$0x7f]
      %v961 = vld [vmem:[%s889] sm:$0x7f]
      %v962 = vld [vmem:[%s760 + $0x1] sm:$0x7f]
      %v963 = vld [vmem:[%s889 + $0x1] sm:$0x7f]
      %v964 = vld [vmem:[%s760 + $0x2] sm:$0x7f]
      %v965 = vld [vmem:[%s493] sm:$0x7f]
      %v966 = vld [vmem:[%s633] sm:$0x7f]
      %v967 = vld [vmem:[%s493 + $0x1] sm:$0x7f]
      %v968 = vld [vmem:[%s633 + $0x1] sm:$0x7f]
      %v969 = vld [vmem:[%s493 + $0x2] sm:$0x7f]
      %971 = vrot.lane.b32.xlu0 %v944, 8
      %v972 = vpop.permute.xlu0 %971
      %975 = vrot.lane.b32.xlu0 %v945, 16
      %v976 = vpop.permute.xlu0 %975
      %979 = vrot.lane.b32.xlu0 %v946, 24
      %v980 = vpop.permute.xlu0 %979
      %983 = vrot.lane.b32.xlu0 %v947, 32
      %v984 = vpop.permute.xlu0 %983
      %987 = vrot.lane.b32.xlu0 %v949, 40
      %v988 = vpop.permute.xlu0 %987
      %991 = vrot.lane.b32.xlu0 %v951, 48
      %v992 = vpop.permute.xlu0 %991
      %995 = vrot.lane.b32.xlu0 %v952, 56
      %v996 = vpop.permute.xlu0 %995
      %999 = vrot.lane.b32.xlu0 %v953, 64
      %v1000 = vpop.permute.xlu0 %999
      %1003 = vrot.lane.b32.xlu0 %v954, 72
      %v1004 = vpop.permute.xlu0 %1003
      %1007 = vrot.lane.b32.xlu0 %v955, 80
      %v1008 = vpop.permute.xlu0 %1007
      %1011 = vrot.lane.b32.xlu0 %v956, 88
      %v1012 = vpop.permute.xlu0 %1011
      %1015 = vrot.lane.b32.xlu0 %v957, 96
      %v1016 = vpop.permute.xlu0 %1015
      %1019 = vrot.lane.b32.xlu0 %v958, 104
      %v1020 = vpop.permute.xlu0 %1019
      %1023 = vrot.lane.b32.xlu0 %v959, 112
      %v1024 = vpop.permute.xlu0 %1023
      %1027 = vrot.lane.b32.xlu0 %v960, 120
      %v1028 = vpop.permute.xlu0 %1027
      %v1030 = vsel %vm278, %v942, %v972
      %vm1031 = vcmask 130048
      %v1032 = vsel %vm1031, %v1030, %v976
      %vm1033 = vcmask 195584
      %v1034 = vsel %vm1033, %v1032, %v980
      %vm1035 = vcmask 261120
      %v1036 = vsel %vm1035, %v1034, %v984
      %vm1037 = vcmask 326656
      %v1038 = vsel %vm1037, %v1036, %v988
      %vm1039 = vcmask 392192
      %v1040 = vsel %vm1039, %v1038, %v992
      %vm1041 = vcmask 457728
      %v1042 = vsel %vm1041, %v1040, %v996
      %vm1043 = vcmask 523264
      %v1044 = vsel %vm1043, %v1042, %v1000
      %vm1045 = vcmask 588800
      %v1046 = vsel %vm1045, %v1044, %v1004
      %vm1047 = vcmask 654336
      %v1048 = vsel %vm1047, %v1046, %v1008
      %vm1049 = vcmask 719872
      %v1050 = vsel %vm1049, %v1048, %v1012
      %vm1051 = vcmask 785408
      %v1052 = vsel %vm1051, %v1050, %v1016
      %vm1053 = vcmask 850944
      %v1054 = vsel %vm1053, %v1052, %v1020
      %vm1055 = vcmask 916480
      %v1056 = vsel %vm1055, %v1054, %v1024
      %vm1057 = vcmask 982016
      %v1058 = vsel %vm1057, %v1056, %v1028
      %1060 = vrot.lane.b32.xlu0 %v962, 8
      %v1061 = vpop.permute.xlu0 %1060
      %1064 = vrot.lane.b32.xlu0 %v963, 16
      %v1065 = vpop.permute.xlu0 %1064
      %1068 = vrot.lane.b32.xlu0 %v964, 24
      %v1069 = vpop.permute.xlu0 %1068
      %1072 = vrot.lane.b32.xlu0 %v965, 32
      %v1073 = vpop.permute.xlu0 %1072
      %1076 = vrot.lane.b32.xlu0 %v966, 40
      %v1077 = vpop.permute.xlu0 %1076
      %1080 = vrot.lane.b32.xlu0 %v967, 48
      %v1081 = vpop.permute.xlu0 %1080
      %1084 = vrot.lane.b32.xlu0 %v968, 56
      %v1085 = vpop.permute.xlu0 %1084
      %1088 = vrot.lane.b32.xlu0 %v969, 64
      %v1089 = vpop.permute.xlu0 %1088
      %v1091 = vsel %vm278, %v961, %v1061
      %v1092 = vsel %vm1031, %v1091, %v1065
      %v1093 = vsel %vm1033, %v1092, %v1069
      %v1094 = vsel %vm1035, %v1093, %v1073
      %v1095 = vsel %vm1037, %v1094, %v1077
      %v1096 = vsel %vm1039, %v1095, %v1081
      %v1097 = vsel %vm1041, %v1096, %v1085
      %v1098 = vsel %vm1043, %v1097, %v1089
      %v1099 = vpack.c.bf16 %v1058, %v1058
      %v1100 = vpack.c.bf16 %v1098, %v1098
      %v1102 = vlaneseq
      %v1103 = vshrl.u32 %v1102, 7
      %v1104 = vsub.s32 0, %v1103
      %v1105 = vrot.slane %v934, %v1104
      %v1132 = vunpack.c.l.b16 %v909
      %v1133 = vunpack.c.l.b16 %v910
      %v1134 = vunpack.c.l.b16 %v911
      %v1135 = vunpack.c.l.b16 %v912
      %v1136 = vunpack.c.l.b16 %v913
      %v1137 = vunpack.c.l.b16 %v914
      %v1138 = vunpack.c.l.b16 %v915
      %v1139 = vunpack.c.l.b16 %v916
      %v1140 = vunpack.c.l.b16 %v917
      %v1141 = vunpack.c.l.b16 %v918
      %v1142 = vunpack.c.l.b16 %v919
      %v1143 = vunpack.c.l.b16 %v920
      %v1144 = vunpack.c.l.b16 %v921
      %v1145 = vunpack.c.l.b16 %v922
      %v1146 = vunpack.c.l.b16 %v923
      %v1147 = vunpack.c.l.b16 %v924
      %v1148 = vunpack.c.l.b16 %v925
      %v1149 = vunpack.c.l.b16 %v926
      %v1150 = vunpack.c.l.b16 %v927
      %v1151 = vunpack.c.l.b16 %v928
      %v1152 = vunpack.c.l.b16 %v929
      %v1153 = vunpack.c.l.b16 %v930
      %v1154 = vunpack.c.l.b16 %v931
      %v1155 = vunpack.c.l.b16 %v932
      %v1156 = vunpack.c.l.b16 %v933
      %v1157 = vpack.c.b16 %v1133, %v1132
      %v1158 = vpack.c.b16 %v1135, %v1134
      %v1159 = vpack.c.b16 %v1137, %v1136
      %v1160 = vpack.c.b16 %v1139, %v1138
      %v1161 = vpack.c.b16 %v1141, %v1140
      %v1162 = vpack.c.b16 %v1143, %v1142
      %v1163 = vpack.c.b16 %v1145, %v1144
      %v1164 = vpack.c.b16 %v1147, %v1146
      %v1165 = vpack.c.b16 %v1149, %v1148
      %v1166 = vpack.c.b16 %v1151, %v1150
      %v1167 = vpack.c.b16 %v1153, %v1152
      %v1168 = vpack.c.b16 %v1155, %v1154
      %v1169 = vpack.c.b16 %v1156, %v1156
      %v1183 = vsel %vm1045, %v1100, 0
      %v1186 = vsel %vm398, %v1169, 0
      %1188 = vmatprep.subr.bf16.mxu0 0
      %1189 = vmatpush1.bf16.msra.mxu0 %v1164
      %1190 = vmatprep.subr.bf16.mxu0 0
      %1191 = vmatpush1.bf16.msra.mxu0 %v1163
      %1192 = vmatprep.subr.bf16.mxu0 0
      %1193 = vmatpush1.bf16.msra.mxu0 %v1162
      %1194 = vmatprep.subr.bf16.mxu0 0
      %1195 = vmatpush1.bf16.msra.mxu0 %v1161
      %1196 = vmatprep.subr.bf16.mxu0 0
      %1197 = vmatpush1.bf16.msra.mxu0 %v1160
      %1198 = vmatprep.subr.bf16.mxu0 0
      %1199 = vmatpush1.bf16.msra.mxu0 %v1159
      %1200 = vmatprep.subr.bf16.mxu0 0
      %1201 = vmatpush1.bf16.msra.mxu0 %v1158
      %1202 = vmatprep.subr.bf16.mxu0 0
      %1203 = vmatpush1.bf16.msra.mxu0 %v1157
      %1204 = vmatprep.subr.bf16.mxu0 0
      %1205 = vmatpush2.bf16.msra.mxu0 0
      %1206 = vmatprep.subr.bf16.mxu0 0
      %1207 = vmatpush2.bf16.msra.mxu0 0
      %1208 = vmatprep.subr.bf16.mxu0 0
      %1209 = vmatpush2.bf16.msra.mxu0 0
      %1210 = vmatprep.subr.bf16.mxu0 0
      %1211 = vmatpush2.bf16.msra.mxu0 %v1186
      %1212 = vmatprep.subr.bf16.mxu0 0
      %1213 = vmatpush2.bf16.msra.mxu0 %v1168
      %1214 = vmatprep.subr.bf16.mxu0 0
      %1215 = vmatpush2.bf16.msra.mxu0 %v1167
      %1216 = vmatprep.subr.bf16.mxu0 0
      %1217 = vmatpush2.bf16.msra.mxu0 %v1166
      %1218 = vmatprep.subr.bf16.mxu0 0
      %1219 = vmatpush2.bf16.msra.mxu0 %v1165
      %1220 = vmatprep.mubr.bf16.mxu0 %v1183
      %1221 = vmatmul.mubr.bf16.gmra.mxu0 %v1099
      %v1222 = vpop.f32.mrf.mxu0
      %v1223 = vadd.f32 %v1105, %v1222
      %v1224 = vpop.f32.mrf.mxu0
      %v1225 = vpop.f32.mrf.mxu0
      %v1226 = vpop.f32.mrf.mxu0
      %1227 = vdwg.mxu0
      %vm1228 = vcmp.ge.f32.partialorder %v1223, 0.0
      %v1229 = vmul.f32 %v1223, 0.3
      %v1230 = vsel %vm1228, %v1223, %v1229
      %v1231 = vmul.f32 %v1230, %v935
      %vm1232 = vcmask 129024
      %v1233 = vsel %vm1232, %v1231, 0.0
      %1234 = vadd.xlane.f32.xlu0 %v1233
      %v1235 = vpop.xlane.xlu0 %1234
      %v1236 = vrot.slane %v1235, 4
      %v1237 = vadd.f32 %v1235, %v1236
      %v1238 = vrot.slane %v1237, 2
      %v1239 = vadd.f32 %v1237, %v1238
      %v1240 = vrot.slane %v1239, 1
      %v1241 = vadd.f32 %v1239, %v1240
      %s1242 = vtos %v1241
      %v1243 = vstv %s1242
      %v1244 = vadd.f32 %v1243, 0.0
      %v1245 = vld [vmem:[%s762] sm:$0x7f]
      %v1246 = vld [vmem:[%s891] sm:$0x7f]
      %v1247 = vld [vmem:[%s762 + $0x1] sm:$0x7f]
      %v1248 = vld [vmem:[%s891 + $0x1] sm:$0x7f]
      %v1249 = vld [vmem:[%s762 + $0x2] sm:$0x7f]
      %v1250 = vld [vmem:[%s498] sm:$0x7f]
      %v1251 = vld [vmem:[%s636] sm:$0x7f]
      %v1252 = vld [vmem:[%s498 + $0x1] sm:$0x7f]
      %v1253 = vld [vmem:[%s636 + $0x1] sm:$0x7f]
      %v1254 = vld [vmem:[%s498 + $0x2] sm:$0x7f]
      %1255 = vrot.lane.b32.xlu0 %v956, 8
      %v1256 = vpop.permute.xlu0 %1255
      %1258 = vrot.lane.b32.xlu0 %v957, 16
      %v1259 = vpop.permute.xlu0 %1258
      %1261 = vrot.lane.b32.xlu0 %v958, 24
      %v1262 = vpop.permute.xlu0 %1261
      %1264 = vrot.lane.b32.xlu0 %v959, 32
      %v1265 = vpop.permute.xlu0 %1264
      %1267 = vrot.lane.b32.xlu0 %v960, 40
      %v1268 = vpop.permute.xlu0 %1267
      %1271 = vrot.lane.b32.xlu0 %v961, 48
      %v1272 = vpop.permute.xlu0 %1271
      %1274 = vrot.lane.b32.xlu0 %v962, 56
      %v1275 = vpop.permute.xlu0 %1274
      %1277 = vrot.lane.b32.xlu0 %v963, 64
      %v1278 = vpop.permute.xlu0 %1277
      %1280 = vrot.lane.b32.xlu0 %v964, 72
      %v1281 = vpop.permute.xlu0 %1280
      %1283 = vrot.lane.b32.xlu0 %v965, 80
      %v1284 = vpop.permute.xlu0 %1283
      %1286 = vrot.lane.b32.xlu0 %v966, 88
      %v1287 = vpop.permute.xlu0 %1286
      %1289 = vrot.lane.b32.xlu0 %v967, 96
      %v1290 = vpop.permute.xlu0 %1289
      %1292 = vrot.lane.b32.xlu0 %v968, 104
      %v1293 = vpop.permute.xlu0 %1292
      %1295 = vrot.lane.b32.xlu0 %v969, 112
      %v1296 = vpop.permute.xlu0 %1295
      %1299 = vrot.lane.b32.xlu0 %v1245, 120
      %v1300 = vpop.permute.xlu0 %1299
      %v1302 = vsel %vm278, %v955, %v1256
      %v1303 = vsel %vm1031, %v1302, %v1259
      %v1304 = vsel %vm1033, %v1303, %v1262
      %v1305 = vsel %vm1035, %v1304, %v1265
      %v1306 = vsel %vm1037, %v1305, %v1268
      %v1307 = vsel %vm1039, %v1306, %v1272
      %v1308 = vsel %vm1041, %v1307, %v1275
      %v1309 = vsel %vm1043, %v1308, %v1278
      %v1310 = vsel %vm1045, %v1309, %v1281
      %v1311 = vsel %vm1047, %v1310, %v1284
      %v1312 = vsel %vm1049, %v1311, %v1287
      %v1313 = vsel %vm1051, %v1312, %v1290
      %v1314 = vsel %vm1053, %v1313, %v1293
      %v1315 = vsel %vm1055, %v1314, %v1296
      %v1316 = vsel %vm1057, %v1315, %v1300
      %1318 = vrot.lane.b32.xlu0 %v1247, 8
      %v1319 = vpop.permute.xlu0 %1318
      %1322 = vrot.lane.b32.xlu0 %v1248, 16
      %v1323 = vpop.permute.xlu0 %1322
      %1326 = vrot.lane.b32.xlu0 %v1249, 24
      %v1327 = vpop.permute.xlu0 %1326
      %1330 = vrot.lane.b32.xlu0 %v1250, 32
      %v1331 = vpop.permute.xlu0 %1330
      %1334 = vrot.lane.b32.xlu0 %v1251, 40
      %v1335 = vpop.permute.xlu0 %1334
      %1338 = vrot.lane.b32.xlu0 %v1252, 48
      %v1339 = vpop.permute.xlu0 %1338
      %1342 = vrot.lane.b32.xlu0 %v1253, 56
      %v1343 = vpop.permute.xlu0 %1342
      %1346 = vrot.lane.b32.xlu0 %v1254, 64
      %v1347 = vpop.permute.xlu0 %1346
      %v1349 = vsel %vm278, %v1246, %v1319
      %v1350 = vsel %vm1031, %v1349, %v1323
      %v1351 = vsel %vm1033, %v1350, %v1327
      %v1352 = vsel %vm1035, %v1351, %v1331
      %v1353 = vsel %vm1037, %v1352, %v1335
      %v1354 = vsel %vm1039, %v1353, %v1339
      %v1355 = vsel %vm1041, %v1354, %v1343
      %v1356 = vsel %vm1043, %v1355, %v1347
      %v1357 = vpack.c.bf16 %v1316, %v1316
      %v1358 = vpack.c.bf16 %v1356, %v1356
      %v1360 = vsel %vm1045, %v1358, 0
      %1362 = vmatprep.subr.bf16.mxu0 0
      %1363 = vmatpush1.bf16.msra.mxu0 %v1164
      %1364 = vmatprep.subr.bf16.mxu0 0
      %1365 = vmatpush1.bf16.msra.mxu0 %v1163
      %1366 = vmatprep.subr.bf16.mxu0 0
      %1367 = vmatpush1.bf16.msra.mxu0 %v1162
      %1368 = vmatprep.subr.bf16.mxu0 0
      %1369 = vmatpush1.bf16.msra.mxu0 %v1161
      %1370 = vmatprep.subr.bf16.mxu0 0
      %1371 = vmatpush1.bf16.msra.mxu0 %v1160
      %1372 = vmatprep.subr.bf16.mxu0 0
      %1373 = vmatpush1.bf16.msra.mxu0 %v1159
      %1374 = vmatprep.subr.bf16.mxu0 0
      %1375 = vmatpush1.bf16.msra.mxu0 %v1158
      %1376 = vmatprep.subr.bf16.mxu0 0
      %1377 = vmatpush1.bf16.msra.mxu0 %v1157
      %1378 = vmatprep.subr.bf16.mxu0 0
      %1379 = vmatpush2.bf16.msra.mxu0 0
      %1380 = vmatprep.subr.bf16.mxu0 0
      %1381 = vmatpush2.bf16.msra.mxu0 0
      %1382 = vmatprep.subr.bf16.mxu0 0
      %1383 = vmatpush2.bf16.msra.mxu0 0
      %1384 = vmatprep.subr.bf16.mxu0 0
      %1385 = vmatpush2.bf16.msra.mxu0 %v1186
      %1386 = vmatprep.subr.bf16.mxu0 0
      %1387 = vmatpush2.bf16.msra.mxu0 %v1168
      %1388 = vmatprep.subr.bf16.mxu0 0
      %1389 = vmatpush2.bf16.msra.mxu0 %v1167
      %1390 = vmatprep.subr.bf16.mxu0 0
      %1391 = vmatpush2.bf16.msra.mxu0 %v1166
      %1392 = vmatprep.subr.bf16.mxu0 0
      %1393 = vmatpush2.bf16.msra.mxu0 %v1165
      %1394 = vmatprep.mubr.bf16.mxu0 %v1360
      %1395 = vmatmul.mubr.bf16.gmra.mxu0 %v1357
      %v1396 = vpop.f32.mrf.mxu0
      %v1397 = vadd.f32 %v1105, %v1396
      %v1398 = vpop.f32.mrf.mxu0
      %v1399 = vpop.f32.mrf.mxu0
      %v1400 = vpop.f32.mrf.mxu0
      %1401 = vdwg.mxu0
      %vm1402 = vcmp.ge.f32.partialorder %v1397, 0.0
      %v1403 = vmul.f32 %v1397, 0.3
      %v1404 = vsel %vm1402, %v1397, %v1403
      %vm1407 = vcmask 1040384
      %v1408 = vrot.slane %v935, 7
      %v1409 = vrot.slane %v936, 7
      %v1410 = vsel %vm1407, %v1408, %v1409
      %v1412 = vmul.f32 %v1404, %v1410
      %v1413 = vsel %vm1232, %v1412, 0.0
      %1414 = vadd.xlane.f32.xlu0 %v1413
      %v1415 = vpop.xlane.xlu0 %1414
      %v1416 = vrot.slane %v1415, 4
      %v1417 = vadd.f32 %v1415, %v1416
      %v1418 = vrot.slane %v1417, 2
      %v1419 = vadd.f32 %v1417, %v1418
      %v1420 = vrot.slane %v1419, 1
      %v1421 = vadd.f32 %v1419, %v1420
      %s1422 = vtos %v1421
      %v1423 = vstv %s1422
      %v1424 = vadd.f32 %v1244, %v1423
      %v1425 = vld [vmem:[%s765] sm:$0x7f]
      %v1426 = vld [vmem:[%s894] sm:$0x7f]
      %v1427 = vld [vmem:[%s765 + $0x1] sm:$0x7f]
      %v1428 = vld [vmem:[%s894 + $0x1] sm:$0x7f]
      %v1429 = vld [vmem:[%s765 + $0x2] sm:$0x7f]
      %v1430 = vld [vmem:[%s503] sm:$0x7f]
      %v1431 = vld [vmem:[%s639] sm:$0x7f]
      %v1432 = vld [vmem:[%s503 + $0x1] sm:$0x7f]
      %v1433 = vld [vmem:[%s639 + $0x1] sm:$0x7f]
      %v1434 = vld [vmem:[%s503 + $0x2] sm:$0x7f]
      %1435 = vrot.lane.b32.xlu0 %v966, 8
      %v1436 = vpop.permute.xlu0 %1435
      %1438 = vrot.lane.b32.xlu0 %v967, 16
      %v1439 = vpop.permute.xlu0 %1438
      %1441 = vrot.lane.b32.xlu0 %v968, 24
      %v1442 = vpop.permute.xlu0 %1441
      %1444 = vrot.lane.b32.xlu0 %v969, 32
      %v1445 = vpop.permute.xlu0 %1444
      %1447 = vrot.lane.b32.xlu0 %v1245, 40
      %v1448 = vpop.permute.xlu0 %1447
      %1451 = vrot.lane.b32.xlu0 %v1246, 48
      %v1452 = vpop.permute.xlu0 %1451
      %1454 = vrot.lane.b32.xlu0 %v1247, 56
      %v1455 = vpop.permute.xlu0 %1454
      %1457 = vrot.lane.b32.xlu0 %v1248, 64
      %v1458 = vpop.permute.xlu0 %1457
      %1460 = vrot.lane.b32.xlu0 %v1249, 72
      %v1461 = vpop.permute.xlu0 %1460
      %1463 = vrot.lane.b32.xlu0 %v1250, 80
      %v1464 = vpop.permute.xlu0 %1463
      %1466 = vrot.lane.b32.xlu0 %v1251, 88
      %v1467 = vpop.permute.xlu0 %1466
      %1469 = vrot.lane.b32.xlu0 %v1252, 96
      %v1470 = vpop.permute.xlu0 %1469
      %1472 = vrot.lane.b32.xlu0 %v1253, 104
      %v1473 = vpop.permute.xlu0 %1472
      %1475 = vrot.lane.b32.xlu0 %v1254, 112
      %v1476 = vpop.permute.xlu0 %1475
      %1479 = vrot.lane.b32.xlu0 %v1425, 120
      %v1480 = vpop.permute.xlu0 %1479
      %v1482 = vsel %vm278, %v965, %v1436
      %v1483 = vsel %vm1031, %v1482, %v1439
      %v1484 = vsel %vm1033, %v1483, %v1442
      %v1485 = vsel %vm1035, %v1484, %v1445
      %v1486 = vsel %vm1037, %v1485, %v1448
      %v1487 = vsel %vm1039, %v1486, %v1452
      %v1488 = vsel %vm1041, %v1487, %v1455
      %v1489 = vsel %vm1043, %v1488, %v1458
      %v1490 = vsel %vm1045, %v1489, %v1461
      %v1491 = vsel %vm1047, %v1490, %v1464
      %v1492 = vsel %vm1049, %v1491, %v1467
      %v1493 = vsel %vm1051, %v1492, %v1470
      %v1494 = vsel %vm1053, %v1493, %v1473
      %v1495 = vsel %vm1055, %v1494, %v1476
      %v1496 = vsel %vm1057, %v1495, %v1480
      %1498 = vrot.lane.b32.xlu0 %v1427, 8
      %v1499 = vpop.permute.xlu0 %1498
      %1502 = vrot.lane.b32.xlu0 %v1428, 16
      %v1503 = vpop.permute.xlu0 %1502
      %1506 = vrot.lane.b32.xlu0 %v1429, 24
      %v1507 = vpop.permute.xlu0 %1506
      %1510 = vrot.lane.b32.xlu0 %v1430, 32
      %v1511 = vpop.permute.xlu0 %1510
      %1514 = vrot.lane.b32.xlu0 %v1431, 40
      %v1515 = vpop.permute.xlu0 %1514
      %1518 = vrot.lane.b32.xlu0 %v1432, 48
      %v1519 = vpop.permute.xlu0 %1518
      %1522 = vrot.lane.b32.xlu0 %v1433, 56
      %v1523 = vpop.permute.xlu0 %1522
      %1526 = vrot.lane.b32.xlu0 %v1434, 64
      %v1527 = vpop.permute.xlu0 %1526
      %v1529 = vsel %vm278, %v1426, %v1499
      %v1530 = vsel %vm1031, %v1529, %v1503
      %v1531 = vsel %vm1033, %v1530, %v1507
      %v1532 = vsel %vm1035, %v1531, %v1511
      %v1533 = vsel %vm1037, %v1532, %v1515
      %v1534 = vsel %vm1039, %v1533, %v1519
      %v1535 = vsel %vm1041, %v1534, %v1523
      %v1536 = vsel %vm1043, %v1535, %v1527
      %v1537 = vpack.c.bf16 %v1496, %v1496
      %v1538 = vpack.c.bf16 %v1536, %v1536
      %v1540 = vsel %vm1045, %v1538, 0
      %1542 = vmatprep.subr.bf16.mxu0 0
      %1543 = vmatpush1.bf16.msra.mxu0 %v1164
      %1544 = vmatprep.subr.bf16.mxu0 0
      %1545 = vmatpush1.bf16.msra.mxu0 %v1163
      %1546 = vmatprep.subr.bf16.mxu0 0
      %1547 = vmatpush1.bf16.msra.mxu0 %v1162
      %1548 = vmatprep.subr.bf16.mxu0 0
      %1549 = vmatpush1.bf16.msra.mxu0 %v1161
      %1550 = vmatprep.subr.bf16.mxu0 0
      %1551 = vmatpush1.bf16.msra.mxu0 %v1160
      %1552 = vmatprep.subr.bf16.mxu0 0
      %1553 = vmatpush1.bf16.msra.mxu0 %v1159
      %1554 = vmatprep.subr.bf16.mxu0 0
      %1555 = vmatpush1.bf16.msra.mxu0 %v1158
      %1556 = vmatprep.subr.bf16.mxu0 0
      %1557 = vmatpush1.bf16.msra.mxu0 %v1157
      %1558 = vmatprep.subr.bf16.mxu0 0
      %1559 = vmatpush2.bf16.msra.mxu0 0
      %1560 = vmatprep.subr.bf16.mxu0 0
      %1561 = vmatpush2.bf16.msra.mxu0 0
      %1562 = vmatprep.subr.bf16.mxu0 0
      %1563 = vmatpush2.bf16.msra.mxu0 0
      %1564 = vmatprep.subr.bf16.mxu0 0
      %1565 = vmatpush2.bf16.msra.mxu0 %v1186
      %1566 = vmatprep.subr.bf16.mxu0 0
      %1567 = vmatpush2.bf16.msra.mxu0 %v1168
      %1568 = vmatprep.subr.bf16.mxu0 0
      %1569 = vmatpush2.bf16.msra.mxu0 %v1167
      %1570 = vmatprep.subr.bf16.mxu0 0
      %1571 = vmatpush2.bf16.msra.mxu0 %v1166
      %1572 = vmatprep.subr.bf16.mxu0 0
      %1573 = vmatpush2.bf16.msra.mxu0 %v1165
      %1574 = vmatprep.mubr.bf16.mxu0 %v1540
      %1575 = vmatmul.mubr.bf16.gmra.mxu0 %v1537
      %v1576 = vpop.f32.mrf.mxu0
      %v1577 = vadd.f32 %v1105, %v1576
      %v1578 = vpop.f32.mrf.mxu0
      %v1579 = vpop.f32.mrf.mxu0
      %v1580 = vpop.f32.mrf.mxu0
      %1581 = vdwg.mxu0
      %vm1582 = vcmp.ge.f32.partialorder %v1577, 0.0
      %v1583 = vmul.f32 %v1577, 0.3
      %v1584 = vsel %vm1582, %v1577, %v1583
      %vm1586 = vcmask 1041408
      %v1587 = vrot.slane %v936, 6
      %v1588 = vrot.slane %v937, 6
      %v1589 = vsel %vm1586, %v1587, %v1588
      %v1591 = vmul.f32 %v1584, %v1589
      %v1592 = vsel %vm1232, %v1591, 0.0
      %1593 = vadd.xlane.f32.xlu0 %v1592
      %v1594 = vpop.xlane.xlu0 %1593
      %v1595 = vrot.slane %v1594, 4
      %v1596 = vadd.f32 %v1594, %v1595
      %v1597 = vrot.slane %v1596, 2
      %v1598 = vadd.f32 %v1596, %v1597
      %v1599 = vrot.slane %v1598, 1
      %v1600 = vadd.f32 %v1598, %v1599
      %s1601 = vtos %v1600
      %v1602 = vstv %s1601
      %v1603 = vadd.f32 %v1424, %v1602
      %v1604 = vld [vmem:[%s768] sm:$0x7f]
      %v1605 = vld [vmem:[%s897] sm:$0x7f]
      %v1606 = vld [vmem:[%s768 + $0x1] sm:$0x7f]
      %v1607 = vld [vmem:[%s897 + $0x1] sm:$0x7f]
      %v1608 = vld [vmem:[%s768 + $0x2] sm:$0x7f]
      %v1609 = vld [vmem:[%s508] sm:$0x7f]
      %v1610 = vld [vmem:[%s642] sm:$0x7f]
      %v1611 = vld [vmem:[%s508 + $0x1] sm:$0x7f]
      %v1612 = vld [vmem:[%s642 + $0x1] sm:$0x7f]
      %v1613 = vld [vmem:[%s508 + $0x2] sm:$0x7f]
      %1614 = vrot.lane.b32.xlu0 %v1251, 8
      %v1615 = vpop.permute.xlu0 %1614
      %1617 = vrot.lane.b32.xlu0 %v1252, 16
      %v1618 = vpop.permute.xlu0 %1617
      %1620 = vrot.lane.b32.xlu0 %v1253, 24
      %v1621 = vpop.permute.xlu0 %1620
      %1623 = vrot.lane.b32.xlu0 %v1254, 32
      %v1624 = vpop.permute.xlu0 %1623
      %1626 = vrot.lane.b32.xlu0 %v1425, 40
      %v1627 = vpop.permute.xlu0 %1626
      %1630 = vrot.lane.b32.xlu0 %v1426, 48
      %v1631 = vpop.permute.xlu0 %1630
      %1633 = vrot.lane.b32.xlu0 %v1427, 56
      %v1634 = vpop.permute.xlu0 %1633
      %1636 = vrot.lane.b32.xlu0 %v1428, 64
      %v1637 = vpop.permute.xlu0 %1636
      %1639 = vrot.lane.b32.xlu0 %v1429, 72
      %v1640 = vpop.permute.xlu0 %1639
      %1642 = vrot.lane.b32.xlu0 %v1430, 80
      %v1643 = vpop.permute.xlu0 %1642
      %1645 = vrot.lane.b32.xlu0 %v1431, 88
      %v1646 = vpop.permute.xlu0 %1645
      %1648 = vrot.lane.b32.xlu0 %v1432, 96
      %v1649 = vpop.permute.xlu0 %1648
      %1651 = vrot.lane.b32.xlu0 %v1433, 104
      %v1652 = vpop.permute.xlu0 %1651
      %1654 = vrot.lane.b32.xlu0 %v1434, 112
      %v1655 = vpop.permute.xlu0 %1654
      %1658 = vrot.lane.b32.xlu0 %v1604, 120
      %v1659 = vpop.permute.xlu0 %1658
      %v1661 = vsel %vm278, %v1250, %v1615
      %v1662 = vsel %vm1031, %v1661, %v1618
      %v1663 = vsel %vm1033, %v1662, %v1621
      %v1664 = vsel %vm1035, %v1663, %v1624
      %v1665 = vsel %vm1037, %v1664, %v1627
      %v1666 = vsel %vm1039, %v1665, %v1631
      %v1667 = vsel %vm1041, %v1666, %v1634
      %v1668 = vsel %vm1043, %v1667, %v1637
      %v1669 = vsel %vm1045, %v1668, %v1640
      %v1670 = vsel %vm1047, %v1669, %v1643
      %v1671 = vsel %vm1049, %v1670, %v1646
      %v1672 = vsel %vm1051, %v1671, %v1649
      %v1673 = vsel %vm1053, %v1672, %v1652
      %v1674 = vsel %vm1055, %v1673, %v1655
      %v1675 = vsel %vm1057, %v1674, %v1659
      %1677 = vrot.lane.b32.xlu0 %v1606, 8
      %v1678 = vpop.permute.xlu0 %1677
      %1681 = vrot.lane.b32.xlu0 %v1607, 16
      %v1682 = vpop.permute.xlu0 %1681
      %1685 = vrot.lane.b32.xlu0 %v1608, 24
      %v1686 = vpop.permute.xlu0 %1685
      %1689 = vrot.lane.b32.xlu0 %v1609, 32
      %v1690 = vpop.permute.xlu0 %1689
      %1693 = vrot.lane.b32.xlu0 %v1610, 40
      %v1694 = vpop.permute.xlu0 %1693
      %1697 = vrot.lane.b32.xlu0 %v1611, 48
      %v1698 = vpop.permute.xlu0 %1697
      %1701 = vrot.lane.b32.xlu0 %v1612, 56
      %v1702 = vpop.permute.xlu0 %1701
      %1705 = vrot.lane.b32.xlu0 %v1613, 64
      %v1706 = vpop.permute.xlu0 %1705
      %v1708 = vsel %vm278, %v1605, %v1678
      %v1709 = vsel %vm1031, %v1708, %v1682
      %v1710 = vsel %vm1033, %v1709, %v1686
      %v1711 = vsel %vm1035, %v1710, %v1690
      %v1712 = vsel %vm1037, %v1711, %v1694
      %v1713 = vsel %vm1039, %v1712, %v1698
      %v1714 = vsel %vm1041, %v1713, %v1702
      %v1715 = vsel %vm1043, %v1714, %v1706
      %v1716 = vpack.c.bf16 %v1675, %v1675
      %v1717 = vpack.c.bf16 %v1715, %v1715
      %v1719 = vsel %vm1045, %v1717, 0
      %1721 = vmatprep.subr.bf16.mxu0 0
      %1722 = vmatpush1.bf16.msra.mxu0 %v1164
      %1723 = vmatprep.subr.bf16.mxu0 0
      %1724 = vmatpush1.bf16.msra.mxu0 %v1163
      %1725 = vmatprep.subr.bf16.mxu0 0
      %1726 = vmatpush1.bf16.msra.mxu0 %v1162
      %1727 = vmatprep.subr.bf16.mxu0 0
      %1728 = vmatpush1.bf16.msra.mxu0 %v1161
      %1729 = vmatprep.subr.bf16.mxu0 0
      %1730 = vmatpush1.bf16.msra.mxu0 %v1160
      %1731 = vmatprep.subr.bf16.mxu0 0
      %1732 = vmatpush1.bf16.msra.mxu0 %v1159
      %1733 = vmatprep.subr.bf16.mxu0 0
      %1734 = vmatpush1.bf16.msra.mxu0 %v1158
      %1735 = vmatprep.subr.bf16.mxu0 0
      %1736 = vmatpush1.bf16.msra.mxu0 %v1157
      %1737 = vmatprep.subr.bf16.mxu0 0
      %1738 = vmatpush2.bf16.msra.mxu0 0
      %1739 = vmatprep.subr.bf16.mxu0 0
      %1740 = vmatpush2.bf16.msra.mxu0 0
      %1741 = vmatprep.subr.bf16.mxu0 0
      %1742 = vmatpush2.bf16.msra.mxu0 0
      %1743 = vmatprep.subr.bf16.mxu0 0
      %1744 = vmatpush2.bf16.msra.mxu0 %v1186
      %1745 = vmatprep.subr.bf16.mxu0 0
      %1746 = vmatpush2.bf16.msra.mxu0 %v1168
      %1747 = vmatprep.subr.bf16.mxu0 0
      %1748 = vmatpush2.bf16.msra.mxu0 %v1167
      %1749 = vmatprep.subr.bf16.mxu0 0
      %1750 = vmatpush2.bf16.msra.mxu0 %v1166
      %1751 = vmatprep.subr.bf16.mxu0 0
      %1752 = vmatpush2.bf16.msra.mxu0 %v1165
      %1753 = vmatprep.mubr.bf16.mxu0 %v1719
      %1754 = vmatmul.mubr.bf16.gmra.mxu0 %v1716
      %v1755 = vpop.f32.mrf.mxu0
      %v1756 = vadd.f32 %v1105, %v1755
      %v1757 = vpop.f32.mrf.mxu0
      %v1758 = vpop.f32.mrf.mxu0
      %v1759 = vpop.f32.mrf.mxu0
      %1760 = vdwg.mxu0
      %vm1761 = vcmp.ge.f32.partialorder %v1756, 0.0
      %v1762 = vmul.f32 %v1756, 0.3
      %v1763 = vsel %vm1761, %v1756, %v1762
      %vm1765 = vcmask 1042432
      %v1766 = vrot.slane %v937, 5
      %v1767 = vrot.slane %v938, 5
      %v1768 = vsel %vm1765, %v1766, %v1767
      %v1770 = vmul.f32 %v1763, %v1768
      %v1771 = vsel %vm1232, %v1770, 0.0
      %1772 = vadd.xlane.f32.xlu0 %v1771
      %v1773 = vpop.xlane.xlu0 %1772
      %v1774 = vrot.slane %v1773, 4
      %v1775 = vadd.f32 %v1773, %v1774
      %v1776 = vrot.slane %v1775, 2
      %v1777 = vadd.f32 %v1775, %v1776
      %v1778 = vrot.slane %v1777, 1
      %v1779 = vadd.f32 %v1777, %v1778
      %s1780 = vtos %v1779
      %v1781 = vstv %s1780
      %v1782 = vadd.f32 %v1603, %v1781
      %v1783 = vld [vmem:[%s771] sm:$0x7f]
      %v1784 = vld [vmem:[%s900] sm:$0x7f]
      %v1785 = vld [vmem:[%s771 + $0x1] sm:$0x7f]
      %v1786 = vld [vmem:[%s900 + $0x1] sm:$0x7f]
      %v1787 = vld [vmem:[%s771 + $0x2] sm:$0x7f]
      %v1788 = vld [vmem:[%s513] sm:$0x7f]
      %v1789 = vld [vmem:[%s645] sm:$0x7f]
      %v1790 = vld [vmem:[%s513 + $0x1] sm:$0x7f]
      %v1791 = vld [vmem:[%s645 + $0x1] sm:$0x7f]
      %v1792 = vld [vmem:[%s513 + $0x2] sm:$0x7f]
      %1793 = vrot.lane.b32.xlu0 %v1431, 8
      %v1794 = vpop.permute.xlu0 %1793
      %1796 = vrot.lane.b32.xlu0 %v1432, 16
      %v1797 = vpop.permute.xlu0 %1796
      %1799 = vrot.lane.b32.xlu0 %v1433, 24
      %v1800 = vpop.permute.xlu0 %1799
      %1802 = vrot.lane.b32.xlu0 %v1434, 32
      %v1803 = vpop.permute.xlu0 %1802
      %1805 = vrot.lane.b32.xlu0 %v1604, 40
      %v1806 = vpop.permute.xlu0 %1805
      %1809 = vrot.lane.b32.xlu0 %v1605, 48
      %v1810 = vpop.permute.xlu0 %1809
      %1812 = vrot.lane.b32.xlu0 %v1606, 56
      %v1813 = vpop.permute.xlu0 %1812
      %1815 = vrot.lane.b32.xlu0 %v1607, 64
      %v1816 = vpop.permute.xlu0 %1815
      %1818 = vrot.lane.b32.xlu0 %v1608, 72
      %v1819 = vpop.permute.xlu0 %1818
      %1821 = vrot.lane.b32.xlu0 %v1609, 80
      %v1822 = vpop.permute.xlu0 %1821
      %1824 = vrot.lane.b32.xlu0 %v1610, 88
      %v1825 = vpop.permute.xlu0 %1824
      %1827 = vrot.lane.b32.xlu0 %v1611, 96
      %v1828 = vpop.permute.xlu0 %1827
      %1830 = vrot.lane.b32.xlu0 %v1612, 104
      %v1831 = vpop.permute.xlu0 %1830
      %1833 = vrot.lane.b32.xlu0 %v1613, 112
      %v1834 = vpop.permute.xlu0 %1833
      %1837 = vrot.lane.b32.xlu0 %v1783, 120
      %v1838 = vpop.permute.xlu0 %1837
      %v1840 = vsel %vm278, %v1430, %v1794
      %v1841 = vsel %vm1031, %v1840, %v1797
      %v1842 = vsel %vm1033, %v1841, %v1800
      %v1843 = vsel %vm1035, %v1842, %v1803
      %v1844 = vsel %vm1037, %v1843, %v1806
      %v1845 = vsel %vm1039, %v1844, %v1810
      %v1846 = vsel %vm1041, %v1845, %v1813
      %v1847 = vsel %vm1043, %v1846, %v1816
      %v1848 = vsel %vm1045, %v1847, %v1819
      %v1849 = vsel %vm1047, %v1848, %v1822
      %v1850 = vsel %vm1049, %v1849, %v1825
      %v1851 = vsel %vm1051, %v1850, %v1828
      %v1852 = vsel %vm1053, %v1851, %v1831
      %v1853 = vsel %vm1055, %v1852, %v1834
      %v1854 = vsel %vm1057, %v1853, %v1838
      %1856 = vrot.lane.b32.xlu0 %v1785, 8
      %v1857 = vpop.permute.xlu0 %1856
      %1860 = vrot.lane.b32.xlu0 %v1786, 16
      %v1861 = vpop.permute.xlu0 %1860
      %1864 = vrot.lane.b32.xlu0 %v1787, 24
      %v1865 = vpop.permute.xlu0 %1864
      %1868 = vrot.lane.b32.xlu0 %v1788, 32
      %v1869 = vpop.permute.xlu0 %1868
      %1872 = vrot.lane.b32.xlu0 %v1789, 40
      %v1873 = vpop.permute.xlu0 %1872
      %1876 = vrot.lane.b32.xlu0 %v1790, 48
      %v1877 = vpop.permute.xlu0 %1876
      %1880 = vrot.lane.b32.xlu0 %v1791, 56
      %v1881 = vpop.permute.xlu0 %1880
      %1884 = vrot.lane.b32.xlu0 %v1792, 64
      %v1885 = vpop.permute.xlu0 %1884
      %v1887 = vsel %vm278, %v1784, %v1857
      %v1888 = vsel %vm1031, %v1887, %v1861
      %v1889 = vsel %vm1033, %v1888, %v1865
      %v1890 = vsel %vm1035, %v1889, %v1869
      %v1891 = vsel %vm1037, %v1890, %v1873
      %v1892 = vsel %vm1039, %v1891, %v1877
      %v1893 = vsel %vm1041, %v1892, %v1881
      %v1894 = vsel %vm1043, %v1893, %v1885
      %v1895 = vpack.c.bf16 %v1854, %v1854
      %v1896 = vpack.c.bf16 %v1894, %v1894
      %v1898 = vsel %vm1045, %v1896, 0
      %1900 = vmatprep.subr.bf16.mxu0 0
      %1901 = vmatpush1.bf16.msra.mxu0 %v1164
      %1902 = vmatprep.subr.bf16.mxu0 0
      %1903 = vmatpush1.bf16.msra.mxu0 %v1163
      %1904 = vmatprep.subr.bf16.mxu0 0
      %1905 = vmatpush1.bf16.msra.mxu0 %v1162
      %1906 = vmatprep.subr.bf16.mxu0 0
      %1907 = vmatpush1.bf16.msra.mxu0 %v1161
      %1908 = vmatprep.subr.bf16.mxu0 0
      %1909 = vmatpush1.bf16.msra.mxu0 %v1160
      %1910 = vmatprep.subr.bf16.mxu0 0
      %1911 = vmatpush1.bf16.msra.mxu0 %v1159
      %1912 = vmatprep.subr.bf16.mxu0 0
      %1913 = vmatpush1.bf16.msra.mxu0 %v1158
      %1914 = vmatprep.subr.bf16.mxu0 0
      %1915 = vmatpush1.bf16.msra.mxu0 %v1157
      %1916 = vmatprep.subr.bf16.mxu0 0
      %1917 = vmatpush2.bf16.msra.mxu0 0
      %1918 = vmatprep.subr.bf16.mxu0 0
      %1919 = vmatpush2.bf16.msra.mxu0 0
      %1920 = vmatprep.subr.bf16.mxu0 0
      %1921 = vmatpush2.bf16.msra.mxu0 0
      %1922 = vmatprep.subr.bf16.mxu0 0
      %1923 = vmatpush2.bf16.msra.mxu0 %v1186
      %1924 = vmatprep.subr.bf16.mxu0 0
      %1925 = vmatpush2.bf16.msra.mxu0 %v1168
      %1926 = vmatprep.subr.bf16.mxu0 0
      %1927 = vmatpush2.bf16.msra.mxu0 %v1167
      %1928 = vmatprep.subr.bf16.mxu0 0
      %1929 = vmatpush2.bf16.msra.mxu0 %v1166
      %1930 = vmatprep.subr.bf16.mxu0 0
      %1931 = vmatpush2.bf16.msra.mxu0 %v1165
      %1932 = vmatprep.mubr.bf16.mxu0 %v1898
      %1933 = vmatmul.mubr.bf16.gmra.mxu0 %v1895
      %v1934 = vpop.f32.mrf.mxu0
      %v1935 = vadd.f32 %v1105, %v1934
      %v1936 = vpop.f32.mrf.mxu0
      %v1937 = vpop.f32.mrf.mxu0
      %v1938 = vpop.f32.mrf.mxu0
      %1939 = vdwg.mxu0
      %vm1940 = vcmp.ge.f32.partialorder %v1935, 0.0
      %v1941 = vmul.f32 %v1935, 0.3
      %v1942 = vsel %vm1940, %v1935, %v1941
      %v1944 = vrot.slane %v938, 4
      %v1945 = vrot.slane %v939, 4
      %v1946 = vsel %vm398, %v1944, %v1945
      %v1948 = vmul.f32 %v1942, %v1946
      %v1949 = vsel %vm1232, %v1948, 0.0
      %1950 = vadd.xlane.f32.xlu0 %v1949
      %v1951 = vpop.xlane.xlu0 %1950
      %v1952 = vrot.slane %v1951, 4
      %v1953 = vadd.f32 %v1951, %v1952
      %v1954 = vrot.slane %v1953, 2
      %v1955 = vadd.f32 %v1953, %v1954
      %v1956 = vrot.slane %v1955, 1
      %v1957 = vadd.f32 %v1955, %v1956
      %s1958 = vtos %v1957
      %v1959 = vstv %s1958
      %v1960 = vadd.f32 %v1782, %v1959
      %v1961 = vld [vmem:[%s774] sm:$0x7f]
      %v1962 = vld [vmem:[%s903] sm:$0x7f]
      %v1963 = vld [vmem:[%s774 + $0x1] sm:$0x7f]
      %v1964 = vld [vmem:[%s903 + $0x1] sm:$0x7f]
      %v1965 = vld [vmem:[%s774 + $0x2] sm:$0x7f]
      %v1966 = vld [vmem:[%s518] sm:$0x7f]
      %v1967 = vld [vmem:[%s648] sm:$0x7f]
      %v1968 = vld [vmem:[%s518 + $0x1] sm:$0x7f]
      %v1969 = vld [vmem:[%s648 + $0x1] sm:$0x7f]
      %v1970 = vld [vmem:[%s518 + $0x2] sm:$0x7f]
      %1971 = vrot.lane.b32.xlu0 %v1610, 8
      %v1972 = vpop.permute.xlu0 %1971
      %1974 = vrot.lane.b32.xlu0 %v1611, 16
      %v1975 = vpop.permute.xlu0 %1974
      %1977 = vrot.lane.b32.xlu0 %v1612, 24
      %v1978 = vpop.permute.xlu0 %1977
      %1980 = vrot.lane.b32.xlu0 %v1613, 32
      %v1981 = vpop.permute.xlu0 %1980
      %1983 = vrot.lane.b32.xlu0 %v1783, 40
      %v1984 = vpop.permute.xlu0 %1983
      %1987 = vrot.lane.b32.xlu0 %v1784, 48
      %v1988 = vpop.permute.xlu0 %1987
      %1990 = vrot.lane.b32.xlu0 %v1785, 56
      %v1991 = vpop.permute.xlu0 %1990
      %1993 = vrot.lane.b32.xlu0 %v1786, 64
      %v1994 = vpop.permute.xlu0 %1993
      %1996 = vrot.lane.b32.xlu0 %v1787, 72
      %v1997 = vpop.permute.xlu0 %1996
      %1999 = vrot.lane.b32.xlu0 %v1788, 80
      %v2000 = vpop.permute.xlu0 %1999
      %2002 = vrot.lane.b32.xlu0 %v1789, 88
      %v2003 = vpop.permute.xlu0 %2002
      %2005 = vrot.lane.b32.xlu0 %v1790, 96
      %v2006 = vpop.permute.xlu0 %2005
      %2008 = vrot.lane.b32.xlu0 %v1791, 104
      %v2009 = vpop.permute.xlu0 %2008
      %2011 = vrot.lane.b32.xlu0 %v1792, 112
      %v2012 = vpop.permute.xlu0 %2011
      %2015 = vrot.lane.b32.xlu0 %v1961, 120
      %v2016 = vpop.permute.xlu0 %2015
      %v2018 = vsel %vm278, %v1609, %v1972
      %v2019 = vsel %vm1031, %v2018, %v1975
      %v2020 = vsel %vm1033, %v2019, %v1978
      %v2021 = vsel %vm1035, %v2020, %v1981
      %v2022 = vsel %vm1037, %v2021, %v1984
      %v2023 = vsel %vm1039, %v2022, %v1988
      %v2024 = vsel %vm1041, %v2023, %v1991
      %v2025 = vsel %vm1043, %v2024, %v1994
      %v2026 = vsel %vm1045, %v2025, %v1997
      %v2027 = vsel %vm1047, %v2026, %v2000
      %v2028 = vsel %vm1049, %v2027, %v2003
      %v2029 = vsel %vm1051, %v2028, %v2006
      %v2030 = vsel %vm1053, %v2029, %v2009
      %v2031 = vsel %vm1055, %v2030, %v2012
      %v2032 = vsel %vm1057, %v2031, %v2016
      %2034 = vrot.lane.b32.xlu0 %v1963, 8
      %v2035 = vpop.permute.xlu0 %2034
      %2038 = vrot.lane.b32.xlu0 %v1964, 16
      %v2039 = vpop.permute.xlu0 %2038
      %2042 = vrot.lane.b32.xlu0 %v1965, 24
      %v2043 = vpop.permute.xlu0 %2042
      %2046 = vrot.lane.b32.xlu0 %v1966, 32
      %v2047 = vpop.permute.xlu0 %2046
      %2050 = vrot.lane.b32.xlu0 %v1967, 40
      %v2051 = vpop.permute.xlu0 %2050
      %2054 = vrot.lane.b32.xlu0 %v1968, 48
      %v2055 = vpop.permute.xlu0 %2054
      %2058 = vrot.lane.b32.xlu0 %v1969, 56
      %v2059 = vpop.permute.xlu0 %2058
      %2062 = vrot.lane.b32.xlu0 %v1970, 64
      %v2063 = vpop.permute.xlu0 %2062
      %v2065 = vsel %vm278, %v1962, %v2035
      %v2066 = vsel %vm1031, %v2065, %v2039
      %v2067 = vsel %vm1033, %v2066, %v2043
      %v2068 = vsel %vm1035, %v2067, %v2047
      %v2069 = vsel %vm1037, %v2068, %v2051
      %v2070 = vsel %vm1039, %v2069, %v2055
      %v2071 = vsel %vm1041, %v2070, %v2059
      %v2072 = vsel %vm1043, %v2071, %v2063
      %v2073 = vpack.c.bf16 %v2032, %v2032
      %v2074 = vpack.c.bf16 %v2072, %v2072
      %v2076 = vsel %vm1045, %v2074, 0
      %2078 = vmatprep.subr.bf16.mxu0 0
      %2079 = vmatpush1.bf16.msra.mxu0 %v1164
      %2080 = vmatprep.subr.bf16.mxu0 0
      %2081 = vmatpush1.bf16.msra.mxu0 %v1163
      %2082 = vmatprep.subr.bf16.mxu0 0
      %2083 = vmatpush1.bf16.msra.mxu0 %v1162
      %2084 = vmatprep.subr.bf16.mxu0 0
      %2085 = vmatpush1.bf16.msra.mxu0 %v1161
      %2086 = vmatprep.subr.bf16.mxu0 0
      %2087 = vmatpush1.bf16.msra.mxu0 %v1160
      %2088 = vmatprep.subr.bf16.mxu0 0
      %2089 = vmatpush1.bf16.msra.mxu0 %v1159
      %2090 = vmatprep.subr.bf16.mxu0 0
      %2091 = vmatpush1.bf16.msra.mxu0 %v1158
      %2092 = vmatprep.subr.bf16.mxu0 0
      %2093 = vmatpush1.bf16.msra.mxu0 %v1157
      %2094 = vmatprep.subr.bf16.mxu0 0
      %2095 = vmatpush2.bf16.msra.mxu0 0
      %2096 = vmatprep.subr.bf16.mxu0 0
      %2097 = vmatpush2.bf16.msra.mxu0 0
      %2098 = vmatprep.subr.bf16.mxu0 0
      %2099 = vmatpush2.bf16.msra.mxu0 0
      %2100 = vmatprep.subr.bf16.mxu0 0
      %2101 = vmatpush2.bf16.msra.mxu0 %v1186
      %2102 = vmatprep.subr.bf16.mxu0 0
      %2103 = vmatpush2.bf16.msra.mxu0 %v1168
      %2104 = vmatprep.subr.bf16.mxu0 0
      %2105 = vmatpush2.bf16.msra.mxu0 %v1167
      %2106 = vmatprep.subr.bf16.mxu0 0
      %2107 = vmatpush2.bf16.msra.mxu0 %v1166
      %2108 = vmatprep.subr.bf16.mxu0 0
      %2109 = vmatpush2.bf16.msra.mxu0 %v1165
      %2110 = vmatprep.mubr.bf16.mxu0 %v2076
      %2111 = vmatmul.mubr.bf16.gmra.mxu0 %v2073
      %v2112 = vpop.f32.mrf.mxu0
      %v2113 = vadd.f32 %v1105, %v2112
      %v2114 = vpop.f32.mrf.mxu0
      %v2115 = vpop.f32.mrf.mxu0
      %v2116 = vpop.f32.mrf.mxu0
      %2117 = vdwg.mxu0
      %vm2118 = vcmp.ge.f32.partialorder %v2113, 0.0
      %v2119 = vmul.f32 %v2113, 0.3
      %v2120 = vsel %vm2118, %v2113, %v2119
      %v2122 = vrot.slane %v939, 3
      %v2123 = vrot.slane %v940, 3
      %v2124 = vsel %vm399, %v2122, %v2123
      %v2126 = vmul.f32 %v2120, %v2124
      %v2127 = vsel %vm1232, %v2126, 0.0
      %2128 = vadd.xlane.f32.xlu0 %v2127
      %v2129 = vpop.xlane.xlu0 %2128
      %v2130 = vrot.slane %v2129, 4
      %v2131 = vadd.f32 %v2129, %v2130
      %v2132 = vrot.slane %v2131, 2
      %v2133 = vadd.f32 %v2131, %v2132
      %v2134 = vrot.slane %v2133, 1
      %v2135 = vadd.f32 %v2133, %v2134
      %s2136 = vtos %v2135
      %v2137 = vstv %s2136
      %v2138 = vadd.f32 %v1960, %v2137
      %v2139 = vld [vmem:[%s777] sm:$0x7f]
      %v2140 = vld [vmem:[%s906] sm:$0x7f]
      %v2141 = vld [vmem:[%s777 + $0x1] sm:$0x7f]
      %v2142 = vld [vmem:[%s906 + $0x1] sm:$0x7f]
      %v2143 = vld [vmem:[%s777 + $0x2] sm:$0x7f]
      %s2144 = scalar_lea.vmem [#allocation2], 128
      %v2145 = vld [vmem:[%s2144] sm:$0x7f]
      %s2146 = scalar_lea.vmem [#allocation2], 272
      %v2147 = vld [vmem:[%s2146] sm:$0x7f]
      %v2148 = vld [vmem:[%s2144 + $0x1] sm:$0x7f]
      %v2149 = vld [vmem:[%s2146 + $0x1] sm:$0x7f]
      %v2150 = vld [vmem:[%s2144 + $0x2] sm:$0x7f]
      %2151 = vrot.lane.b32.xlu0 %v1789, 8
      %v2152 = vpop.permute.xlu0 %2151
      %2154 = vrot.lane.b32.xlu0 %v1790, 16
      %v2155 = vpop.permute.xlu0 %2154
      %2157 = vrot.lane.b32.xlu0 %v1791, 24
      %v2158 = vpop.permute.xlu0 %2157
      %2160 = vrot.lane.b32.xlu0 %v1792, 32
      %v2161 = vpop.permute.xlu0 %2160
      %2163 = vrot.lane.b32.xlu0 %v1961, 40
      %v2164 = vpop.permute.xlu0 %2163
      %2167 = vrot.lane.b32.xlu0 %v1962, 48
      %v2168 = vpop.permute.xlu0 %2167
      %2170 = vrot.lane.b32.xlu0 %v1963, 56
      %v2171 = vpop.permute.xlu0 %2170
      %2173 = vrot.lane.b32.xlu0 %v1964, 64
      %v2174 = vpop.permute.xlu0 %2173
      %2176 = vrot.lane.b32.xlu0 %v1965, 72
      %v2177 = vpop.permute.xlu0 %2176
      %2179 = vrot.lane.b32.xlu0 %v1966, 80
      %v2180 = vpop.permute.xlu0 %2179
      %2182 = vrot.lane.b32.xlu0 %v1967, 88
      %v2183 = vpop.permute.xlu0 %2182
      %2185 = vrot.lane.b32.xlu0 %v1968, 96
      %v2186 = vpop.permute.xlu0 %2185
      %2188 = vrot.lane.b32.xlu0 %v1969, 104
      %v2189 = vpop.permute.xlu0 %2188
      %2191 = vrot.lane.b32.xlu0 %v1970, 112
      %v2192 = vpop.permute.xlu0 %2191
      %2195 = vrot.lane.b32.xlu0 %v2139, 120
      %v2196 = vpop.permute.xlu0 %2195
      %v2198 = vsel %vm278, %v1788, %v2152
      %v2199 = vsel %vm1031, %v2198, %v2155
      %v2200 = vsel %vm1033, %v2199, %v2158
      %v2201 = vsel %vm1035, %v2200, %v2161
      %v2202 = vsel %vm1037, %v2201, %v2164
      %v2203 = vsel %vm1039, %v2202, %v2168
      %v2204 = vsel %vm1041, %v2203, %v2171
      %v2205 = vsel %vm1043, %v2204, %v2174
      %v2206 = vsel %vm1045, %v2205, %v2177
      %v2207 = vsel %vm1047, %v2206, %v2180
      %v2208 = vsel %vm1049, %v2207, %v2183
      %v2209 = vsel %vm1051, %v2208, %v2186
      %v2210 = vsel %vm1053, %v2209, %v2189
      %v2211 = vsel %vm1055, %v2210, %v2192
      %v2212 = vsel %vm1057, %v2211, %v2196
      %2214 = vrot.lane.b32.xlu0 %v2141, 8
      %v2215 = vpop.permute.xlu0 %2214
      %2218 = vrot.lane.b32.xlu0 %v2142, 16
      %v2219 = vpop.permute.xlu0 %2218
      %2222 = vrot.lane.b32.xlu0 %v2143, 24
      %v2223 = vpop.permute.xlu0 %2222
      %2226 = vrot.lane.b32.xlu0 %v2145, 32
      %v2227 = vpop.permute.xlu0 %2226
      %2230 = vrot.lane.b32.xlu0 %v2147, 40
      %v2231 = vpop.permute.xlu0 %2230
      %2234 = vrot.lane.b32.xlu0 %v2148, 48
      %v2235 = vpop.permute.xlu0 %2234
      %2238 = vrot.lane.b32.xlu0 %v2149, 56
      %v2239 = vpop.permute.xlu0 %2238
      %2242 = vrot.lane.b32.xlu0 %v2150, 64
      %v2243 = vpop.permute.xlu0 %2242
      %v2245 = vsel %vm278, %v2140, %v2215
      %v2246 = vsel %vm1031, %v2245, %v2219
      %v2247 = vsel %vm1033, %v2246, %v2223
      %v2248 = vsel %vm1035, %v2247, %v2227
      %v2249 = vsel %vm1037, %v2248, %v2231
      %v2250 = vsel %vm1039, %v2249, %v2235
      %v2251 = vsel %vm1041, %v2250, %v2239
      %v2252 = vsel %vm1043, %v2251, %v2243
      %v2253 = vpack.c.bf16 %v2212, %v2212
      %v2254 = vpack.c.bf16 %v2252, %v2252
      %v2256 = vsel %vm1045, %v2254, 0
      %2258 = vmatprep.subr.bf16.mxu0 0
      %2259 = vmatpush1.bf16.msra.mxu0 %v1164
      %2260 = vmatprep.subr.bf16.mxu0 0
      %2261 = vmatpush1.bf16.msra.mxu0 %v1163
      %2262 = vmatprep.subr.bf16.mxu0 0
      %2263 = vmatpush1.bf16.msra.mxu0 %v1162
      %2264 = vmatprep.subr.bf16.mxu0 0
      %2265 = vmatpush1.bf16.msra.mxu0 %v1161
      %2266 = vmatprep.subr.bf16.mxu0 0
      %2267 = vmatpush1.bf16.msra.mxu0 %v1160
      %2268 = vmatprep.subr.bf16.mxu0 0
      %2269 = vmatpush1.bf16.msra.mxu0 %v1159
      %2270 = vmatprep.subr.bf16.mxu0 0
      %2271 = vmatpush1.bf16.msra.mxu0 %v1158
      %2272 = vmatprep.subr.bf16.mxu0 0
      %2273 = vmatpush1.bf16.msra.mxu0 %v1157
      %2274 = vmatprep.subr.bf16.mxu0 0
      %2275 = vmatpush2.bf16.msra.mxu0 0
      %2276 = vmatprep.subr.bf16.mxu0 0
      %2277 = vmatpush2.bf16.msra.mxu0 0
      %2278 = vmatprep.subr.bf16.mxu0 0
      %2279 = vmatpush2.bf16.msra.mxu0 0
      %2280 = vmatprep.subr.bf16.mxu0 0
      %2281 = vmatpush2.bf16.msra.mxu0 %v1186
      %2282 = vmatprep.subr.bf16.mxu0 0
      %2283 = vmatpush2.bf16.msra.mxu0 %v1168
      %2284 = vmatprep.subr.bf16.mxu0 0
      %2285 = vmatpush2.bf16.msra.mxu0 %v1167
      %2286 = vmatprep.subr.bf16.mxu0 0
      %2287 = vmatpush2.bf16.msra.mxu0 %v1166
      %2288 = vmatprep.subr.bf16.mxu0 0
      %2289 = vmatpush2.bf16.msra.mxu0 %v1165
      %2290 = vmatprep.mubr.bf16.mxu0 %v2256
      %2291 = vmatmul.mubr.bf16.gmra.mxu0 %v2253
      %v2292 = vpop.f32.mrf.mxu0
      %v2293 = vadd.f32 %v1105, %v2292
      %v2294 = vpop.f32.mrf.mxu0
      %v2295 = vpop.f32.mrf.mxu0
      %v2296 = vpop.f32.mrf.mxu0
      %2297 = vdwg.mxu0
      %vm2298 = vcmp.ge.f32.partialorder %v2293, 0.0
      %v2299 = vmul.f32 %v2293, 0.3
      %v2300 = vsel %vm2298, %v2293, %v2299
      %vm2302 = vcmask 1045504
      %v2303 = vrot.slane %v940, 2
      %v2304 = vrot.slane %v941, 2
      %v2305 = vsel %vm2302, %v2303, %v2304
      %v2307 = vmul.f32 %v2300, %v2305
      %v2308 = vsel %vm1232, %v2307, 0.0
      %2309 = vadd.xlane.f32.xlu0 %v2308
      %v2310 = vpop.xlane.xlu0 %2309
      %v2311 = vrot.slane %v2310, 4
      %v2312 = vadd.f32 %v2310, %v2311
      %v2313 = vrot.slane %v2312, 2
      %v2314 = vadd.f32 %v2312, %v2313
      %v2315 = vrot.slane %v2314, 1
      %v2316 = vadd.f32 %v2314, %v2315
      %s2317 = vtos %v2316
      %v2318 = vstv %s2317
      %v2319 = vadd.f32 %v2138, %v2318
      %v2320 = vld [vmem:[#allocation3] sm:$0x1]
      %v2321 = vadd.f32 %v2319, %v2320
      %v2322 = vsub.f32 0.0, %v2321
      %v2323 = vmul.f32 %v2322, 1.442695
      %v2324 = vpow.pop %v2323
      %v2325 = vadd.f32 %v2324, 1.0
      %v2326 = vrcp.pop %v2325
      %2328 = vset.pattern.permute.xlu0 0
      %2329 = vperm.xlu0 %2328, %v2326
      %v2330 = vpop.permute.xlu0 %2329
      %v2332 = vlaneseq
      %v2333 = vshrl.u32 %v2332, 7
      %v2334 = vsub.s32 0, %v2333
      %v2335 = vrot.slane %v2330, %v2334
      %2336 = vst [vmem:[%s276] sm:$0x1] %v2335
      %p2337 = scmp.lt.s32.totalorder %s20, 1
      %s2338 = scalar_select %p2337, %s20, 1
      %s2339 = scalar_lea.vmem %s7, %s2338
      // Predicated region
      $region49: #{discriminator_sgan_forward.1} parent=47 // pred_check
        %p2340 = pneg %p190
      $region50: #{discriminator_sgan_forward.1} parent=47 // pred_check_branch
        %2342 = sbr.rel (%p2340) target = $region52
      $region51: #{discriminator_sgan_forward.1} parent=47 // pred_region
        _
      $region52: #{discriminator_sgan_forward.1} parent=47 // pred_fallthru
        _
    $region48: #{discriminator_sgan_forward.1} parent=5 // pred_fallthru
      _
    %p2343 = scmp.le.s32.totalorder 2, %s15
    // Predicated region
    $region53: #{discriminator_sgan_forward.1} parent=5 // pred_check
      %p2344 = pneg %p2343
    $region54: #{discriminator_sgan_forward.1} parent=5 // pred_check_branch
      %2346 = sbr.rel (%p2344) target = $region56
    $region55: #{discriminator_sgan_forward.1} parent=5 // pred_region
      %s2347 = ssub.s32 %s15, 2
      // Predicated region
      $region57: #{discriminator_sgan_forward.1} parent=55 // pred_check
        %p2348 = pneg %p196
      $region58: #{discriminator_sgan_forward.1} parent=55 // pred_check_branch
        %2350 = sbr.rel (%p2348) target = $region60
      $region59: #{discriminator_sgan_forward.1} parent=55 // pred_region
        %p2351 = scmp.lt.s32.totalorder %s21, 1
        %s2352 = scalar_select %p2351, %s21, 1
        %s2353 = scalar_lea.vmem %s7, %s2352
      $region60: #{discriminator_sgan_forward.1} parent=55 // pred_fallthru
        _
    $region56: #{discriminator_sgan_forward.1} parent=5 // pred_fallthru
      _
  $region6: #{discriminator_sgan_forward.1} parent=0 // loop_footer
    %s19 = sadd.s32 1, %s15
  $region7: #{discriminator_sgan_forward.1} parent=0 // loop_footer_branch
    %14 = sbr.rel target = $region3
  $region8: #{discriminator_sgan_forward.1} parent=0 // loop_exit
    _

</llo_original>
